<compile_context>
chip_gen: v7x
topology: tpu7x:2x2x1
jax: 0.10.0
libtpu: 0.0.40
codegen_flags: <defaults>
</compile_context>

<pallas_src>
import jax
import jax.numpy as jnp
from jax.experimental import pallas as pl
from jax.experimental.pallas import tpu as pltpu


# (kernel_size, stride_h, pad_h, pad_w) for the three convs; stride_w == 1.
_CONVS = ((3, 2, 2, 1), (5, 2, 1, 2), (7, 1, 0, 0))


def _layer_geometry(H, W):
    """Static per-layer geometry derived from the input spatial size."""
    cfgs = []
    h, w = H, W
    for (k, sh, ph, pw) in _CONVS:
        Hp, Wp = h + 2 * ph, w + 2 * pw
        Hout = (Hp - k) // sh + 1
        Wout = Wp - k + 1
        cfgs.append(dict(K=k, sh=sh, ph=ph, pw=pw, Hin=h, Win=w,
                         Hp=Hp, Wp=Wp, Hout=Hout, Wout=Wout))
        h, w = Hout, Wout
    return cfgs


def _make_fused_kernel(cfgs, G, Cin, Cout):
    c1, c2, c3 = cfgs

    def kernel(x_ref, w1_ref, w2_ref, w3_ref, b_ref, o_ref, pad2_ref, v2_ref):
        # ---- hoisted once per grid step: bias broadcasts (f32) -----------
        b1 = jnp.broadcast_to(b_ref[:, 0:1], (Cout, c1["Wout"]))
        b2 = jnp.broadcast_to(b_ref[:, 1:2], (Cout, c2["Wout"]))
        b3 = jnp.broadcast_to(b_ref[:, 2:3], (Cout, c3["Wout"]))

        Hp2, Wp2 = c2["Hp"], c2["Wp"]
        ph2, pw2 = c2["ph"], c2["pw"]
        H1, W1 = c1["Hout"], c1["Wout"]
        zdt = pad2_ref.dtype

        # Border-only zero fill of the layer-2 padded scratch (its interior
        # is fully overwritten for every image below, keeping the invariant).
        if ph2 > 0:
            pad2_ref[0:ph2] = jnp.zeros((ph2, Cin, Wp2), zdt)
        if Hp2 - (ph2 + H1) > 0:
            pad2_ref[ph2 + H1:Hp2] = jnp.zeros((Hp2 - ph2 - H1, Cin, Wp2), zdt)
        if pw2 > 0:
            pad2_ref[:, :, 0:pw2] = jnp.zeros((Hp2, Cin, pw2), zdt)
        if Wp2 - (pw2 + W1) > 0:
            pad2_ref[:, :, pw2 + W1:Wp2] = jnp.zeros(
                (Hp2, Cin, Wp2 - pw2 - W1), zdt)

        def shifted_sum(p, bias_b, K, Wout):
            # out = bias + sum_kw P[kw*Cout:(kw+1)*Cout, kw:kw+Wout]
            acc = bias_b
            for kw in range(K):
                acc = acc + p[kw * Cout:(kw + 1) * Cout, kw:kw + Wout]
            return acc

        for g in range(G):                              # images in this step
            # -------- layer 1: sigmoid(conv 3x3, stride (2,1)) ------------
            for oh in range(c1["Hout"]):
                r0 = c1["sh"] * oh
                slab = x_ref[g, r0:r0 + c1["K"]].reshape(c1["K"] * Cin, c1["Wp"])
                p = jnp.dot(w1_ref[...], slab,
                            preferred_element_type=jnp.float32)
                row = jax.nn.sigmoid(shifted_sum(p, b1, c1["K"], c1["Wout"]))
                # v1 goes straight into the padded layer-2 scratch interior.
                pad2_ref[ph2 + oh, :, pw2:pw2 + W1] = row.astype(zdt)

            # -------- layer 2: sigmoid(conv 5x5, stride (2,1)) ------------
            for oh in range(c2["Hout"]):
                r0 = c2["sh"] * oh
                slab = pad2_ref[r0:r0 + c2["K"]].reshape(c2["K"] * Cin, c2["Wp"])
                p = jnp.dot(w2_ref[...], slab,
                            preferred_element_type=jnp.float32)
                row = jax.nn.sigmoid(shifted_sum(p, b2, c2["K"], c2["Wout"]))
                v2_ref[oh] = row.astype(v2_ref.dtype)

            # -------- layer 3: conv 7x7, stride 1, no activation ----------
            for oh in range(c3["Hout"]):
                slab = v2_ref[oh:oh + c3["K"]].reshape(c3["K"] * Cin, c3["Wp"])
                p = jnp.dot(w3_ref[...], slab,
                            preferred_element_type=jnp.float32)
                row = shifted_sum(p, b3, c3["K"], c3["Wout"])
                o_ref[g, :, oh * c3["Wout"]:(oh + 1) * c3["Wout"]] = \
                    row.astype(o_ref.dtype)

    return kernel


@jax.jit
def _fused_forward(x_nchw, w1s, w2s, w3s, bias_cols):
    N, Cin, H, W = x_nchw.shape
    Cout = bias_cols.shape[0]
    cfgs = _layer_geometry(H, W)
    c1, c2, c3 = cfgs

    # Layer-1 spatial padding folded into the wrapper's layout change
    # (pad + transpose + bf16 cast fuse into a single XLA copy).
    xp = jnp.pad(x_nchw, ((0, 0), (0, 0),
                          (c1["ph"], c1["ph"]), (c1["pw"], c1["pw"])))
    xp = jnp.transpose(xp, (0, 2, 1, 3)).astype(jnp.bfloat16)  # (N,Hp1,C,Wp1)

    # 2 "parallel" grid steps: keeps both v7x TensorCores busy; on the single
    # TC of v5e/v6e the fixed per-step overhead is paid only twice.
    num_steps = 2 if N >= 2 else 1
    G = -(-N // num_steps)                       # images per grid step
    N_pad = num_steps * G
    if N_pad != N:
        xp = jnp.pad(xp, ((0, N_pad - N), (0, 0), (0, 0), (0, 0)))

    flops = 2 * N_pad * sum((c["K"] * Cout) * (c["K"] * Cin) * c["Wp"] * c["Hout"]
                            for c in cfgs)
    transc = N_pad * Cout * (c1["Hout"] * c1["Wout"] + c2["Hout"] * c2["Wout"])
    bytes_acc = (xp.size * 2 + w1s.size * 2 + w2s.size * 2 + w3s.size * 2 +
                 bias_cols.size * 4 +
                 N_pad * Cout * c3["Hout"] * c3["Wout"] * 4)

    out = pl.pallas_call(
        _make_fused_kernel(cfgs, G, Cin, Cout),
        out_shape=jax.ShapeDtypeStruct(
            (N_pad, Cout, c3["Hout"] * c3["Wout"]), x_nchw.dtype),
        grid_spec=pltpu.PrefetchScalarGridSpec(
            num_scalar_prefetch=0,
            grid=(num_steps,),
            in_specs=[
                pl.BlockSpec((G, c1["Hp"], Cin, c1["Wp"]),
                             lambda s: (s, 0, 0, 0)),
                pl.BlockSpec(w1s.shape, lambda s: (0, 0)),
                pl.BlockSpec(w2s.shape, lambda s: (0, 0)),
                pl.BlockSpec(w3s.shape, lambda s: (0, 0)),
                pl.BlockSpec(bias_cols.shape, lambda s: (0, 0)),
            ],
            out_specs=pl.BlockSpec((G, Cout, c3["Hout"] * c3["Wout"]),
                                   lambda s: (s, 0, 0)),
            scratch_shapes=[
                pltpu.VMEM((c2["Hp"], Cin, c2["Wp"]), jnp.bfloat16),  # padded v1
                pltpu.VMEM((c3["Hp"], Cin, c3["Wp"]), jnp.bfloat16),  # v2
            ],
        ),
        compiler_params=pltpu.CompilerParams(
            dimension_semantics=("parallel",)),
        cost_estimate=pl.CostEstimate(flops=flops, transcendentals=transc,
                                      bytes_accessed=bytes_acc),
    )(xp, w1s, w2s, w3s, bias_cols)

    # Lane-merged kernel output (N, Cout, H3*W3) -> NCHW via a free reshape.
    return out[:N].reshape(N, Cout, c3["Hout"], c3["Wout"])


class PallasModel:
    """Deterministically initialised analogue of the PyTorch Model."""

    def __init__(self, key):
        ks = jax.random.split(key, 6)

        def conv_params(kw_, kb_, cout, cin, ksz):
            fan_in = cin * ksz * ksz
            bound = 1.0 / jnp.sqrt(fan_in)
            w = jax.random.uniform(kw_, (cout, cin, ksz, ksz), jnp.float32,
                                   -bound, bound)
            b = jax.random.uniform(kb_, (cout,), jnp.float32, -bound, bound)
            return w, b

        self.w1, self.b1 = conv_params(ks[0], ks[1], 16, 16, 3)
        self.w2, self.b2 = conv_params(ks[2], ks[3], 16, 16, 5)
        self.w3, self.b3 = conv_params(ks[4], ks[5], 16, 16, 7)

        # One-time layout work: OIHW -> kw-stacked LHS (KW*Cout, KH*Cin),
        # L[kw*Cout+co, kh*Cin+ci] = w[co,ci,kh,kw]; pre-cast to bf16
        # (accumulation stays f32 in the kernel).
        def stack(w):
            cout, cin, kh, kw = w.shape
            return (jnp.transpose(w, (3, 0, 2, 1))
                    .reshape(kw * cout, kh * cin).astype(jnp.bfloat16))

        self.w1s, self.w2s, self.w3s = stack(self.w1), stack(self.w2), stack(self.w3)
        # All three biases as one (Cout, 3) f32 block (no degenerate (16,1)
        # VMEM inputs).
        self.bias_cols = jnp.stack([self.b1, self.b2, self.b3], axis=1)

    def __call__(self, x_nchw):
        return _fused_forward(x_nchw, self.w1s, self.w2s, self.w3s,
                              self.bias_cols)


def ref_forward(model, x_nchw):
    """Pure-JAX reference (XLA conv, f32) for correctness checking."""

    def conv(x, w, b, stride, pad):
        y = jax.lax.conv_general_dilated(
            x, w, window_strides=stride,
            padding=[(pad[0], pad[0]), (pad[1], pad[1])],
            dimension_numbers=("NCHW", "OIHW", "NCHW"))
        return y + b.reshape(1, -1, 1, 1)

    v1 = jax.nn.sigmoid(conv(x_nchw, model.w1, model.b1, (2, 1), (2, 1)))
    v2 = jax.nn.sigmoid(conv(v1, model.w2, model.b2, (2, 1), (1, 2)))
    return conv(v2, model.w3, model.b3, (1, 1), (0, 0))


if __name__ == "__main__":
    key = jax.random.PRNGKey(0)
    kp, kx = jax.random.split(key)

    model = PallasModel(kp)
    # Small NCHW input consistent with the module (16 in-channels required).
    x3 = jax.random.normal(kx, (2, 16, 32, 20), jnp.float32)

    out = jax.block_until_ready(model(x3))
    ref = ref_forward(model, x3)

    assert out.shape == ref.shape == (2, 16, 2, 14), (out.shape, ref.shape)
    err = float(jnp.max(jnp.abs(out - ref)))
    # bf16 matmul operands with f32 accumulation vs. an all-f32 reference:
    # expected max error ~2-3e-3 on outputs of magnitude O(1); 1e-2 bound
    # still catches any geometry / weight-layout mistake.
    assert err < 1e-2, err

    print("KERNEL_OK")
</pallas_src>

<mosaic_0001>
module attributes {stable_mosaic.version = 11 : i64} {
  func.func @kernel(%arg0: i32, %arg1: memref<1x36x16x22xbf16, #tpu.memory_space<vmem>>, %arg2: memref<48x48xbf16, #tpu.memory_space<vmem>>, %arg3: memref<80x80xbf16, #tpu.memory_space<vmem>>, %arg4: memref<112x112xbf16, #tpu.memory_space<vmem>>, %arg5: memref<16x3xf32, #tpu.memory_space<vmem>>, %arg6: memref<1x16x28xf32, #tpu.memory_space<vmem>>, %arg7: memref<19x16x24xbf16, #tpu.memory_space<vmem>>, %arg8: memref<8x16x20xbf16, #tpu.memory_space<vmem>>) attributes {dimension_semantics = [#tpu.dimension_semantics<parallel>], iteration_bounds = array<i64: 2>, scalar_prefetch = 0 : i64, scratch_operands = 2 : i64, tpu.core_type = #tpu.core_type<tc>, window_params = [{transform_indices = @transform_0, window_bounds = array<i64: 1, 36, 16, 22>}, {pipeline_mode = #tpu.pipeline_mode<synchronous>, transform_indices = @transform_1, window_bounds = array<i64: 48, 48>}, {pipeline_mode = #tpu.pipeline_mode<synchronous>, transform_indices = @transform_2, window_bounds = array<i64: 80, 80>}, {pipeline_mode = #tpu.pipeline_mode<synchronous>, transform_indices = @transform_3, window_bounds = array<i64: 112, 112>}, {pipeline_mode = #tpu.pipeline_mode<synchronous>, transform_indices = @transform_4, window_bounds = array<i64: 16, 3>}, {transform_indices = @transform_5, window_bounds = array<i64: 1, 16, 28>}]} {
    %c0 = arith.constant 0 : index
    %c0_0 = arith.constant 0 : index
    %0 = vector.load %arg5[%c0, %c0_0] : memref<16x3xf32, #tpu.memory_space<vmem>>, vector<16x1xf32>
    %1 = vector.shape_cast %0 : vector<16x1xf32> to vector<16x1xf32>
    %2 = vector.broadcast %1 : vector<16x1xf32> to vector<16x20xf32>
    %c0_1 = arith.constant 0 : index
    %c1 = arith.constant 1 : index
    %3 = vector.load %arg5[%c0_1, %c1] : memref<16x3xf32, #tpu.memory_space<vmem>>, vector<16x1xf32>
    %4 = vector.shape_cast %3 : vector<16x1xf32> to vector<16x1xf32>
    %5 = vector.broadcast %4 : vector<16x1xf32> to vector<16x20xf32>
    %c0_2 = arith.constant 0 : index
    %c2 = arith.constant 2 : index
    %6 = vector.load %arg5[%c0_2, %c2] : memref<16x3xf32, #tpu.memory_space<vmem>>, vector<16x1xf32>
    %7 = vector.shape_cast %6 : vector<16x1xf32> to vector<16x1xf32>
    %8 = vector.broadcast %7 : vector<16x1xf32> to vector<16x14xf32>
    %cst = arith.constant 0.000000e+00 : bf16
    %9 = vector.broadcast %cst : bf16 to vector<1x16x24xbf16>
    %c0_3 = arith.constant 0 : index
    %c0_4 = arith.constant 0 : index
    %c0_5 = arith.constant 0 : index
    %10 = vector.load %arg7[%c0_3, %c0_4, %c0_5] : memref<19x16x24xbf16, #tpu.memory_space<vmem>>, vector<1x16x24xbf16>
    tpu.vector_store %arg7[%c0_3, %c0_4, %c0_5], %9 {strides = array<i32>} : memref<19x16x24xbf16, #tpu.memory_space<vmem>>, vector<1x16x24xbf16>,
    %cst_6 = arith.constant 0.000000e+00 : bf16
    %11 = vector.broadcast %cst_6 : bf16 to vector<1x16x24xbf16>
    %c18 = arith.constant 18 : index
    %c0_7 = arith.constant 0 : index
    %c0_8 = arith.constant 0 : index
    %12 = vector.load %arg7[%c18, %c0_7, %c0_8] : memref<19x16x24xbf16, #tpu.memory_space<vmem>>, vector<1x16x24xbf16>
    tpu.vector_store %arg7[%c18, %c0_7, %c0_8], %11 {strides = array<i32>} : memref<19x16x24xbf16, #tpu.memory_space<vmem>>, vector<1x16x24xbf16>,
    %cst_9 = arith.constant 0.000000e+00 : bf16
    %13 = vector.broadcast %cst_9 : bf16 to vector<19x16x2xbf16>
    %c0_10 = arith.constant 0 : index
    %c0_11 = arith.constant 0 : index
    %c0_12 = arith.constant 0 : index
    %14 = vector.load %arg7[%c0_10, %c0_11, %c0_12] : memref<19x16x24xbf16, #tpu.memory_space<vmem>>, vector<19x16x2xbf16>
    tpu.vector_store %arg7[%c0_10, %c0_11, %c0_12], %13 {strides = array<i32>} : memref<19x16x24xbf16, #tpu.memory_space<vmem>>, vector<19x16x2xbf16>,
    %cst_13 = arith.constant 0.000000e+00 : bf16
    %15 = vector.broadcast %cst_13 : bf16 to vector<19x16x2xbf16>
    %c0_14 = arith.constant 0 : index
    %c0_15 = arith.constant 0 : index
    %c22 = arith.constant 22 : index
    %16 = vector.load %arg7[%c0_14, %c0_15, %c22] : memref<19x16x24xbf16, #tpu.memory_space<vmem>>, vector<19x16x2xbf16>
    tpu.vector_store %arg7[%c0_14, %c0_15, %c22], %15 {strides = array<i32>} : memref<19x16x24xbf16, #tpu.memory_space<vmem>>, vector<19x16x2xbf16>,
    %c0_16 = arith.constant 0 : index
    %c0_17 = arith.constant 0 : index
    %c0_18 = arith.constant 0 : index
    %c0_19 = arith.constant 0 : index
    %17 = vector.load %arg1[%c0_16, %c0_17, %c0_18, %c0_19] : memref<1x36x16x22xbf16, #tpu.memory_space<vmem>>, vector<1x3x16x22xbf16>
    %18 = vector.shape_cast %17 : vector<1x3x16x22xbf16> to vector<3x16x22xbf16>
    %19 = vector.shape_cast %18 : vector<3x16x22xbf16> to vector<48x22xbf16>
    %c0_20 = arith.constant 0 : index
    %c0_21 = arith.constant 0 : index
    %20 = vector.load %arg2[%c0_20, %c0_21] : memref<48x48xbf16, #tpu.memory_space<vmem>>, vector<48x48xbf16>
    %cst_22 = arith.constant dense<0.000000e+00> : vector<48x22xf32>
    %21 = tpu.matmul %20, %19, %cst_22 {dimension_numbers = #tpu.dot_dimension_numbers<[1], [0], [0], [1], [0, 0, 1, 1], [], []>} : vector<48x48xbf16>, vector<48x22xbf16>, vector<48x22xf32> -> vector<48x22xf32>
    %22 = vector.extract_strided_slice %21 {offsets = [0, 0], sizes = [16, 20], strides = [1, 1]} : vector<48x22xf32> to vector<16x20xf32>
    %23 = arith.addf %2, %22 : vector<16x20xf32>
    %24 = vector.extract_strided_slice %21 {offsets = [16, 1], sizes = [16, 20], strides = [1, 1]} : vector<48x22xf32> to vector<16x20xf32>
    %25 = arith.addf %23, %24 : vector<16x20xf32>
    %26 = vector.extract_strided_slice %21 {offsets = [32, 2], sizes = [16, 20], strides = [1, 1]} : vector<48x22xf32> to vector<16x20xf32>
    %27 = arith.addf %25, %26 : vector<16x20xf32>
    %28 = arith.negf %27 : vector<16x20xf32>
    %29 = math.exp %28 : vector<16x20xf32>
    %cst_23 = arith.constant 1.000000e+00 : f32
    %30 = vector.broadcast %cst_23 : f32 to vector<16x20xf32>
    %31 = arith.addf %30, %29 : vector<16x20xf32>
    %32 = arith.divf %30, %31 : vector<16x20xf32>
    %33 = arith.truncf %32 : vector<16x20xf32> to vector<16x20xbf16>
    %c1_24 = arith.constant 1 : index
    %c0_25 = arith.constant 0 : index
    %c2_26 = arith.constant 2 : index
    %34 = vector.load %arg7[%c1_24, %c0_25, %c2_26] : memref<19x16x24xbf16, #tpu.memory_space<vmem>>, vector<1x16x20xbf16>
    %35 = vector.shape_cast %34 : vector<1x16x20xbf16> to vector<16x20xbf16>
    %36 = vector.shape_cast %33 : vector<16x20xbf16> to vector<1x16x20xbf16>
    tpu.vector_store %arg7[%c1_24, %c0_25, %c2_26], %36 {strides = array<i32>} : memref<19x16x24xbf16, #tpu.memory_space<vmem>>, vector<1x16x20xbf16>,
    %c0_27 = arith.constant 0 : index
    %c2_28 = arith.constant 2 : index
    %c0_29 = arith.constant 0 : index
    %c0_30 = arith.constant 0 : index
    %37 = vector.load %arg1[%c0_27, %c2_28, %c0_29, %c0_30] : memref<1x36x16x22xbf16, #tpu.memory_space<vmem>>, vector<1x3x16x22xbf16>
    %38 = vector.shape_cast %37 : vector<1x3x16x22xbf16> to vector<3x16x22xbf16>
    %39 = vector.shape_cast %38 : vector<3x16x22xbf16> to vector<48x22xbf16>
    %c0_31 = arith.constant 0 : index
    %c0_32 = arith.constant 0 : index
    %40 = vector.load %arg2[%c0_31, %c0_32] : memref<48x48xbf16, #tpu.memory_space<vmem>>, vector<48x48xbf16>
    %cst_33 = arith.constant dense<0.000000e+00> : vector<48x22xf32>
    %41 = tpu.matmul %40, %39, %cst_33 {dimension_numbers = #tpu.dot_dimension_numbers<[1], [0], [0], [1], [0, 0, 1, 1], [], []>} : vector<48x48xbf16>, vector<48x22xbf16>, vector<48x22xf32> -> vector<48x22xf32>
    %42 = vector.extract_strided_slice %41 {offsets = [0, 0], sizes = [16, 20], strides = [1, 1]} : vector<48x22xf32> to vector<16x20xf32>
    %43 = arith.addf %2, %42 : vector<16x20xf32>
    %44 = vector.extract_strided_slice %41 {offsets = [16, 1], sizes = [16, 20], strides = [1, 1]} : vector<48x22xf32> to vector<16x20xf32>
    %45 = arith.addf %43, %44 : vector<16x20xf32>
    %46 = vector.extract_strided_slice %41 {offsets = [32, 2], sizes = [16, 20], strides = [1, 1]} : vector<48x22xf32> to vector<16x20xf32>
    %47 = arith.addf %45, %46 : vector<16x20xf32>
    %48 = arith.negf %47 : vector<16x20xf32>
    %49 = math.exp %48 : vector<16x20xf32>
    %cst_34 = arith.constant 1.000000e+00 : f32
    %50 = vector.broadcast %cst_34 : f32 to vector<16x20xf32>
    %51 = arith.addf %50, %49 : vector<16x20xf32>
    %52 = arith.divf %50, %51 : vector<16x20xf32>
    %53 = arith.truncf %52 : vector<16x20xf32> to vector<16x20xbf16>
    %c2_35 = arith.constant 2 : index
    %c0_36 = arith.constant 0 : index
    %c2_37 = arith.constant 2 : index
    %54 = vector.load %arg7[%c2_35, %c0_36, %c2_37] : memref<19x16x24xbf16, #tpu.memory_space<vmem>>, vector<1x16x20xbf16>
    %55 = vector.shape_cast %54 : vector<1x16x20xbf16> to vector<16x20xbf16>
    %56 = vector.shape_cast %53 : vector<16x20xbf16> to vector<1x16x20xbf16>
    tpu.vector_store %arg7[%c2_35, %c0_36, %c2_37], %56 {strides = array<i32>} : memref<19x16x24xbf16, #tpu.memory_space<vmem>>, vector<1x16x20xbf16>,
    %c0_38 = arith.constant 0 : index
    %c4 = arith.constant 4 : index
    %c0_39 = arith.constant 0 : index
    %c0_40 = arith.constant 0 : index
    %57 = vector.load %arg1[%c0_38, %c4, %c0_39, %c0_40] : memref<1x36x16x22xbf16, #tpu.memory_space<vmem>>, vector<1x3x16x22xbf16>
    %58 = vector.shape_cast %57 : vector<1x3x16x22xbf16> to vector<3x16x22xbf16>
    %59 = vector.shape_cast %58 : vector<3x16x22xbf16> to vector<48x22xbf16>
    %c0_41 = arith.constant 0 : index
    %c0_42 = arith.constant 0 : index
    %60 = vector.load %arg2[%c0_41, %c0_42] : memref<48x48xbf16, #tpu.memory_space<vmem>>, vector<48x48xbf16>
    %cst_43 = arith.constant dense<0.000000e+00> : vector<48x22xf32>
    %61 = tpu.matmul %60, %59, %cst_43 {dimension_numbers = #tpu.dot_dimension_numbers<[1], [0], [0], [1], [0, 0, 1, 1], [], []>} : vector<48x48xbf16>, vector<48x22xbf16>, vector<48x22xf32> -> vector<48x22xf32>
    %62 = vector.extract_strided_slice %61 {offsets = [0, 0], sizes = [16, 20], strides = [1, 1]} : vector<48x22xf32> to vector<16x20xf32>
    %63 = arith.addf %2, %62 : vector<16x20xf32>
    %64 = vector.extract_strided_slice %61 {offsets = [16, 1], sizes = [16, 20], strides = [1, 1]} : vector<48x22xf32> to vector<16x20xf32>
    %65 = arith.addf %63, %64 : vector<16x20xf32>
    %66 = vector.extract_strided_slice %61 {offsets = [32, 2], sizes = [16, 20], strides = [1, 1]} : vector<48x22xf32> to vector<16x20xf32>
    %67 = arith.addf %65, %66 : vector<16x20xf32>
    %68 = arith.negf %67 : vector<16x20xf32>
    %69 = math.exp %68 : vector<16x20xf32>
    %cst_44 = arith.constant 1.000000e+00 : f32
    %70 = vector.broadcast %cst_44 : f32 to vector<16x20xf32>
    %71 = arith.addf %70, %69 : vector<16x20xf32>
    %72 = arith.divf %70, %71 : vector<16x20xf32>
    %73 = arith.truncf %72 : vector<16x20xf32> to vector<16x20xbf16>
    %c3 = arith.constant 3 : index
    %c0_45 = arith.constant 0 : index
    %c2_46 = arith.constant 2 : index
    %74 = vector.load %arg7[%c3, %c0_45, %c2_46] : memref<19x16x24xbf16, #tpu.memory_space<vmem>>, vector<1x16x20xbf16>
    %75 = vector.shape_cast %74 : vector<1x16x20xbf16> to vector<16x20xbf16>
    %76 = vector.shape_cast %73 : vector<16x20xbf16> to vector<1x16x20xbf16>
    tpu.vector_store %arg7[%c3, %c0_45, %c2_46], %76 {strides = array<i32>} : memref<19x16x24xbf16, #tpu.memory_space<vmem>>, vector<1x16x20xbf16>,
    %c0_47 = arith.constant 0 : index
    %c6 = arith.constant 6 : index
    %c0_48 = arith.constant 0 : index
    %c0_49 = arith.constant 0 : index
    %77 = vector.load %arg1[%c0_47, %c6, %c0_48, %c0_49] : memref<1x36x16x22xbf16, #tpu.memory_space<vmem>>, vector<1x3x16x22xbf16>
    %78 = vector.shape_cast %77 : vector<1x3x16x22xbf16> to vector<3x16x22xbf16>
    %79 = vector.shape_cast %78 : vector<3x16x22xbf16> to vector<48x22xbf16>
    %c0_50 = arith.constant 0 : index
    %c0_51 = arith.constant 0 : index
    %80 = vector.load %arg2[%c0_50, %c0_51] : memref<48x48xbf16, #tpu.memory_space<vmem>>, vector<48x48xbf16>
    %cst_52 = arith.constant dense<0.000000e+00> : vector<48x22xf32>
    %81 = tpu.matmul %80, %79, %cst_52 {dimension_numbers = #tpu.dot_dimension_numbers<[1], [0], [0], [1], [0, 0, 1, 1], [], []>} : vector<48x48xbf16>, vector<48x22xbf16>, vector<48x22xf32> -> vector<48x22xf32>
    %82 = vector.extract_strided_slice %81 {offsets = [0, 0], sizes = [16, 20], strides = [1, 1]} : vector<48x22xf32> to vector<16x20xf32>
    %83 = arith.addf %2, %82 : vector<16x20xf32>
    %84 = vector.extract_strided_slice %81 {offsets = [16, 1], sizes = [16, 20], strides = [1, 1]} : vector<48x22xf32> to vector<16x20xf32>
    %85 = arith.addf %83, %84 : vector<16x20xf32>
    %86 = vector.extract_strided_slice %81 {offsets = [32, 2], sizes = [16, 20], strides = [1, 1]} : vector<48x22xf32> to vector<16x20xf32>
    %87 = arith.addf %85, %86 : vector<16x20xf32>
    %88 = arith.negf %87 : vector<16x20xf32>
    %89 = math.exp %88 : vector<16x20xf32>
    %cst_53 = arith.constant 1.000000e+00 : f32
    %90 = vector.broadcast %cst_53 : f32 to vector<16x20xf32>
    %91 = arith.addf %90, %89 : vector<16x20xf32>
    %92 = arith.divf %90, %91 : vector<16x20xf32>
    %93 = arith.truncf %92 : vector<16x20xf32> to vector<16x20xbf16>
    %c4_54 = arith.constant 4 : index
    %c0_55 = arith.constant 0 : index
    %c2_56 = arith.constant 2 : index
    %94 = vector.load %arg7[%c4_54, %c0_55, %c2_56] : memref<19x16x24xbf16, #tpu.memory_space<vmem>>, vector<1x16x20xbf16>
    %95 = vector.shape_cast %94 : vector<1x16x20xbf16> to vector<16x20xbf16>
    %96 = vector.shape_cast %93 : vector<16x20xbf16> to vector<1x16x20xbf16>
    tpu.vector_store %arg7[%c4_54, %c0_55, %c2_56], %96 {strides = array<i32>} : memref<19x16x24xbf16, #tpu.memory_space<vmem>>, vector<1x16x20xbf16>,
    %c0_57 = arith.constant 0 : index
    %c8 = arith.constant 8 : index
    %c0_58 = arith.constant 0 : index
    %c0_59 = arith.constant 0 : index
    %97 = vector.load %arg1[%c0_57, %c8, %c0_58, %c0_59] : memref<1x36x16x22xbf16, #tpu.memory_space<vmem>>, vector<1x3x16x22xbf16>
    %98 = vector.shape_cast %97 : vector<1x3x16x22xbf16> to vector<3x16x22xbf16>
    %99 = vector.shape_cast %98 : vector<3x16x22xbf16> to vector<48x22xbf16>
    %c0_60 = arith.constant 0 : index
    %c0_61 = arith.constant 0 : index
    %100 = vector.load %arg2[%c0_60, %c0_61] : memref<48x48xbf16, #tpu.memory_space<vmem>>, vector<48x48xbf16>
    %cst_62 = arith.constant dense<0.000000e+00> : vector<48x22xf32>
    %101 = tpu.matmul %100, %99, %cst_62 {dimension_numbers = #tpu.dot_dimension_numbers<[1], [0], [0], [1], [0, 0, 1, 1], [], []>} : vector<48x48xbf16>, vector<48x22xbf16>, vector<48x22xf32> -> vector<48x22xf32>
    %102 = vector.extract_strided_slice %101 {offsets = [0, 0], sizes = [16, 20], strides = [1, 1]} : vector<48x22xf32> to vector<16x20xf32>
    %103 = arith.addf %2, %102 : vector<16x20xf32>
    %104 = vector.extract_strided_slice %101 {offsets = [16, 1], sizes = [16, 20], strides = [1, 1]} : vector<48x22xf32> to vector<16x20xf32>
    %105 = arith.addf %103, %104 : vector<16x20xf32>
    %106 = vector.extract_strided_slice %101 {offsets = [32, 2], sizes = [16, 20], strides = [1, 1]} : vector<48x22xf32> to vector<16x20xf32>
    %107 = arith.addf %105, %106 : vector<16x20xf32>
    %108 = arith.negf %107 : vector<16x20xf32>
    %109 = math.exp %108 : vector<16x20xf32>
    %cst_63 = arith.constant 1.000000e+00 : f32
    %110 = vector.broadcast %cst_63 : f32 to vector<16x20xf32>
    %111 = arith.addf %110, %109 : vector<16x20xf32>
    %112 = arith.divf %110, %111 : vector<16x20xf32>
    %113 = arith.truncf %112 : vector<16x20xf32> to vector<16x20xbf16>
    %c5 = arith.constant 5 : index
    %c0_64 = arith.constant 0 : index
    %c2_65 = arith.constant 2 : index
    %114 = vector.load %arg7[%c5, %c0_64, %c2_65] : memref<19x16x24xbf16, #tpu.memory_space<vmem>>, vector<1x16x20xbf16>
    %115 = vector.shape_cast %114 : vector<1x16x20xbf16> to vector<16x20xbf16>
    %116 = vector.shape_cast %113 : vector<16x20xbf16> to vector<1x16x20xbf16>
    tpu.vector_store %arg7[%c5, %c0_64, %c2_65], %116 {strides = array<i32>} : memref<19x16x24xbf16, #tpu.memory_space<vmem>>, vector<1x16x20xbf16>,
    %c0_66 = arith.constant 0 : index
    %c10 = arith.constant 10 : index
    %c0_67 = arith.constant 0 : index
    %c0_68 = arith.constant 0 : index
    %117 = vector.load %arg1[%c0_66, %c10, %c0_67, %c0_68] : memref<1x36x16x22xbf16, #tpu.memory_space<vmem>>, vector<1x3x16x22xbf16>
    %118 = vector.shape_cast %117 : vector<1x3x16x22xbf16> to vector<3x16x22xbf16>
    %119 = vector.shape_cast %118 : vector<3x16x22xbf16> to vector<48x22xbf16>
    %c0_69 = arith.constant 0 : index
    %c0_70 = arith.constant 0 : index
    %120 = vector.load %arg2[%c0_69, %c0_70] : memref<48x48xbf16, #tpu.memory_space<vmem>>, vector<48x48xbf16>
    %cst_71 = arith.constant dense<0.000000e+00> : vector<48x22xf32>
    %121 = tpu.matmul %120, %119, %cst_71 {dimension_numbers = #tpu.dot_dimension_numbers<[1], [0], [0], [1], [0, 0, 1, 1], [], []>} : vector<48x48xbf16>, vector<48x22xbf16>, vector<48x22xf32> -> vector<48x22xf32>
    %122 = vector.extract_strided_slice %121 {offsets = [0, 0], sizes = [16, 20], strides = [1, 1]} : vector<48x22xf32> to vector<16x20xf32>
    %123 = arith.addf %2, %122 : vector<16x20xf32>
    %124 = vector.extract_strided_slice %121 {offsets = [16, 1], sizes = [16, 20], strides = [1, 1]} : vector<48x22xf32> to vector<16x20xf32>
    %125 = arith.addf %123, %124 : vector<16x20xf32>
    %126 = vector.extract_strided_slice %121 {offsets = [32, 2], sizes = [16, 20], strides = [1, 1]} : vector<48x22xf32> to vector<16x20xf32>
    %127 = arith.addf %125, %126 : vector<16x20xf32>
    %128 = arith.negf %127 : vector<16x20xf32>
    %129 = math.exp %128 : vector<16x20xf32>
    %cst_72 = arith.constant 1.000000e+00 : f32
    %130 = vector.broadcast %cst_72 : f32 to vector<16x20xf32>
    %131 = arith.addf %130, %129 : vector<16x20xf32>
    %132 = arith.divf %130, %131 : vector<16x20xf32>
    %133 = arith.truncf %132 : vector<16x20xf32> to vector<16x20xbf16>
    %c6_73 = arith.constant 6 : index
    %c0_74 = arith.constant 0 : index
    %c2_75 = arith.constant 2 : index
    %134 = vector.load %arg7[%c6_73, %c0_74, %c2_75] : memref<19x16x24xbf16, #tpu.memory_space<vmem>>, vector<1x16x20xbf16>
    %135 = vector.shape_cast %134 : vector<1x16x20xbf16> to vector<16x20xbf16>
    %136 = vector.shape_cast %133 : vector<16x20xbf16> to vector<1x16x20xbf16>
    tpu.vector_store %arg7[%c6_73, %c0_74, %c2_75], %136 {strides = array<i32>} : memref<19x16x24xbf16, #tpu.memory_space<vmem>>, vector<1x16x20xbf16>,
    %c0_76 = arith.constant 0 : index
    %c12 = arith.constant 12 : index
    %c0_77 = arith.constant 0 : index
    %c0_78 = arith.constant 0 : index
    %137 = vector.load %arg1[%c0_76, %c12, %c0_77, %c0_78] : memref<1x36x16x22xbf16, #tpu.memory_space<vmem>>, vector<1x3x16x22xbf16>
    %138 = vector.shape_cast %137 : vector<1x3x16x22xbf16> to vector<3x16x22xbf16>
    %139 = vector.shape_cast %138 : vector<3x16x22xbf16> to vector<48x22xbf16>
    %c0_79 = arith.constant 0 : index
    %c0_80 = arith.constant 0 : index
    %140 = vector.load %arg2[%c0_79, %c0_80] : memref<48x48xbf16, #tpu.memory_space<vmem>>, vector<48x48xbf16>
    %cst_81 = arith.constant dense<0.000000e+00> : vector<48x22xf32>
    %141 = tpu.matmul %140, %139, %cst_81 {dimension_numbers = #tpu.dot_dimension_numbers<[1], [0], [0], [1], [0, 0, 1, 1], [], []>} : vector<48x48xbf16>, vector<48x22xbf16>, vector<48x22xf32> -> vector<48x22xf32>
    %142 = vector.extract_strided_slice %141 {offsets = [0, 0], sizes = [16, 20], strides = [1, 1]} : vector<48x22xf32> to vector<16x20xf32>
    %143 = arith.addf %2, %142 : vector<16x20xf32>
    %144 = vector.extract_strided_slice %141 {offsets = [16, 1], sizes = [16, 20], strides = [1, 1]} : vector<48x22xf32> to vector<16x20xf32>
    %145 = arith.addf %143, %144 : vector<16x20xf32>
    %146 = vector.extract_strided_slice %141 {offsets = [32, 2], sizes = [16, 20], strides = [1, 1]} : vector<48x22xf32> to vector<16x20xf32>
    %147 = arith.addf %145, %146 : vector<16x20xf32>
    %148 = arith.negf %147 : vector<16x20xf32>
    %149 = math.exp %148 : vector<16x20xf32>
    %cst_82 = arith.constant 1.000000e+00 : f32
    %150 = vector.broadcast %cst_82 : f32 to vector<16x20xf32>
    %151 = arith.addf %150, %149 : vector<16x20xf32>
    %152 = arith.divf %150, %151 : vector<16x20xf32>
    %153 = arith.truncf %152 : vector<16x20xf32> to vector<16x20xbf16>
    %c7 = arith.constant 7 : index
    %c0_83 = arith.constant 0 : index
    %c2_84 = arith.constant 2 : index
    %154 = vector.load %arg7[%c7, %c0_83, %c2_84] : memref<19x16x24xbf16, #tpu.memory_space<vmem>>, vector<1x16x20xbf16>
    %155 = vector.shape_cast %154 : vector<1x16x20xbf16> to vector<16x20xbf16>
    %156 = vector.shape_cast %153 : vector<16x20xbf16> to vector<1x16x20xbf16>
    tpu.vector_store %arg7[%c7, %c0_83, %c2_84], %156 {strides = array<i32>} : memref<19x16x24xbf16, #tpu.memory_space<vmem>>, vector<1x16x20xbf16>,
    %c0_85 = arith.constant 0 : index
    %c14 = arith.constant 14 : index
    %c0_86 = arith.constant 0 : index
    %c0_87 = arith.constant 0 : index
    %157 = vector.load %arg1[%c0_85, %c14, %c0_86, %c0_87] : memref<1x36x16x22xbf16, #tpu.memory_space<vmem>>, vector<1x3x16x22xbf16>
    %158 = vector.shape_cast %157 : vector<1x3x16x22xbf16> to vector<3x16x22xbf16>
    %159 = vector.shape_cast %158 : vector<3x16x22xbf16> to vector<48x22xbf16>
    %c0_88 = arith.constant 0 : index
    %c0_89 = arith.constant 0 : index
    %160 = vector.load %arg2[%c0_88, %c0_89] : memref<48x48xbf16, #tpu.memory_space<vmem>>, vector<48x48xbf16>
    %cst_90 = arith.constant dense<0.000000e+00> : vector<48x22xf32>
    %161 = tpu.matmul %160, %159, %cst_90 {dimension_numbers = #tpu.dot_dimension_numbers<[1], [0], [0], [1], [0, 0, 1, 1], [], []>} : vector<48x48xbf16>, vector<48x22xbf16>, vector<48x22xf32> -> vector<48x22xf32>
    %162 = vector.extract_strided_slice %161 {offsets = [0, 0], sizes = [16, 20], strides = [1, 1]} : vector<48x22xf32> to vector<16x20xf32>
    %163 = arith.addf %2, %162 : vector<16x20xf32>
    %164 = vector.extract_strided_slice %161 {offsets = [16, 1], sizes = [16, 20], strides = [1, 1]} : vector<48x22xf32> to vector<16x20xf32>
    %165 = arith.addf %163, %164 : vector<16x20xf32>
    %166 = vector.extract_strided_slice %161 {offsets = [32, 2], sizes = [16, 20], strides = [1, 1]} : vector<48x22xf32> to vector<16x20xf32>
    %167 = arith.addf %165, %166 : vector<16x20xf32>
    %168 = arith.negf %167 : vector<16x20xf32>
    %169 = math.exp %168 : vector<16x20xf32>
    %cst_91 = arith.constant 1.000000e+00 : f32
    %170 = vector.broadcast %cst_91 : f32 to vector<16x20xf32>
    %171 = arith.addf %170, %169 : vector<16x20xf32>
    %172 = arith.divf %170, %171 : vector<16x20xf32>
    %173 = arith.truncf %172 : vector<16x20xf32> to vector<16x20xbf16>
    %c8_92 = arith.constant 8 : index
    %c0_93 = arith.constant 0 : index
    %c2_94 = arith.constant 2 : index
    %174 = vector.load %arg7[%c8_92, %c0_93, %c2_94] : memref<19x16x24xbf16, #tpu.memory_space<vmem>>, vector<1x16x20xbf16>
    %175 = vector.shape_cast %174 : vector<1x16x20xbf16> to vector<16x20xbf16>
    %176 = vector.shape_cast %173 : vector<16x20xbf16> to vector<1x16x20xbf16>
    tpu.vector_store %arg7[%c8_92, %c0_93, %c2_94], %176 {strides = array<i32>} : memref<19x16x24xbf16, #tpu.memory_space<vmem>>, vector<1x16x20xbf16>,
    %c0_95 = arith.constant 0 : index
    %c16 = arith.constant 16 : index
    %c0_96 = arith.constant 0 : index
    %c0_97 = arith.constant 0 : index
    %177 = vector.load %arg1[%c0_95, %c16, %c0_96, %c0_97] : memref<1x36x16x22xbf16, #tpu.memory_space<vmem>>, vector<1x3x16x22xbf16>
    %178 = vector.shape_cast %177 : vector<1x3x16x22xbf16> to vector<3x16x22xbf16>
    %179 = vector.shape_cast %178 : vector<3x16x22xbf16> to vector<48x22xbf16>
    %c0_98 = arith.constant 0 : index
    %c0_99 = arith.constant 0 : index
    %180 = vector.load %arg2[%c0_98, %c0_99] : memref<48x48xbf16, #tpu.memory_space<vmem>>, vector<48x48xbf16>
    %cst_100 = arith.constant dense<0.000000e+00> : vector<48x22xf32>
    %181 = tpu.matmul %180, %179, %cst_100 {dimension_numbers = #tpu.dot_dimension_numbers<[1], [0], [0], [1], [0, 0, 1, 1], [], []>} : vector<48x48xbf16>, vector<48x22xbf16>, vector<48x22xf32> -> vector<48x22xf32>
    %182 = vector.extract_strided_slice %181 {offsets = [0, 0], sizes = [16, 20], strides = [1, 1]} : vector<48x22xf32> to vector<16x20xf32>
    %183 = arith.addf %2, %182 : vector<16x20xf32>
    %184 = vector.extract_strided_slice %181 {offsets = [16, 1], sizes = [16, 20], strides = [1, 1]} : vector<48x22xf32> to vector<16x20xf32>
    %185 = arith.addf %183, %184 : vector<16x20xf32>
    %186 = vector.extract_strided_slice %181 {offsets = [32, 2], sizes = [16, 20], strides = [1, 1]} : vector<48x22xf32> to vector<16x20xf32>
    %187 = arith.addf %185, %186 : vector<16x20xf32>
    %188 = arith.negf %187 : vector<16x20xf32>
    %189 = math.exp %188 : vector<16x20xf32>
    %cst_101 = arith.constant 1.000000e+00 : f32
    %190 = vector.broadcast %cst_101 : f32 to vector<16x20xf32>
    %191 = arith.addf %190, %189 : vector<16x20xf32>
    %192 = arith.divf %190, %191 : vector<16x20xf32>
    %193 = arith.truncf %192 : vector<16x20xf32> to vector<16x20xbf16>
    %c9 = arith.constant 9 : index
    %c0_102 = arith.constant 0 : index
    %c2_103 = arith.constant 2 : index
    %194 = vector.load %arg7[%c9, %c0_102, %c2_103] : memref<19x16x24xbf16, #tpu.memory_space<vmem>>, vector<1x16x20xbf16>
    %195 = vector.shape_cast %194 : vector<1x16x20xbf16> to vector<16x20xbf16>
    %196 = vector.shape_cast %193 : vector<16x20xbf16> to vector<1x16x20xbf16>
    tpu.vector_store %arg7[%c9, %c0_102, %c2_103], %196 {strides = array<i32>} : memref<19x16x24xbf16, #tpu.memory_space<vmem>>, vector<1x16x20xbf16>,
    %c0_104 = arith.constant 0 : index
    %c18_105 = arith.constant 18 : index
    %c0_106 = arith.constant 0 : index
    %c0_107 = arith.constant 0 : index
    %197 = vector.load %arg1[%c0_104, %c18_105, %c0_106, %c0_107] : memref<1x36x16x22xbf16, #tpu.memory_space<vmem>>, vector<1x3x16x22xbf16>
    %198 = vector.shape_cast %197 : vector<1x3x16x22xbf16> to vector<3x16x22xbf16>
    %199 = vector.shape_cast %198 : vector<3x16x22xbf16> to vector<48x22xbf16>
    %c0_108 = arith.constant 0 : index
    %c0_109 = arith.constant 0 : index
    %200 = vector.load %arg2[%c0_108, %c0_109] : memref<48x48xbf16, #tpu.memory_space<vmem>>, vector<48x48xbf16>
    %cst_110 = arith.constant dense<0.000000e+00> : vector<48x22xf32>
    %201 = tpu.matmul %200, %199, %cst_110 {dimension_numbers = #tpu.dot_dimension_numbers<[1], [0], [0], [1], [0, 0, 1, 1], [], []>} : vector<48x48xbf16>, vector<48x22xbf16>, vector<48x22xf32> -> vector<48x22xf32>
    %202 = vector.extract_strided_slice %201 {offsets = [0, 0], sizes = [16, 20], strides = [1, 1]} : vector<48x22xf32> to vector<16x20xf32>
    %203 = arith.addf %2, %202 : vector<16x20xf32>
    %204 = vector.extract_strided_slice %201 {offsets = [16, 1], sizes = [16, 20], strides = [1, 1]} : vector<48x22xf32> to vector<16x20xf32>
    %205 = arith.addf %203, %204 : vector<16x20xf32>
    %206 = vector.extract_strided_slice %201 {offsets = [32, 2], sizes = [16, 20], strides = [1, 1]} : vector<48x22xf32> to vector<16x20xf32>
    %207 = arith.addf %205, %206 : vector<16x20xf32>
    %208 = arith.negf %207 : vector<16x20xf32>
    %209 = math.exp %208 : vector<16x20xf32>
    %cst_111 = arith.constant 1.000000e+00 : f32
    %210 = vector.broadcast %cst_111 : f32 to vector<16x20xf32>
    %211 = arith.addf %210, %209 : vector<16x20xf32>
    %212 = arith.divf %210, %211 : vector<16x20xf32>
    %213 = arith.truncf %212 : vector<16x20xf32> to vector<16x20xbf16>
    %c10_112 = arith.constant 10 : index
    %c0_113 = arith.constant 0 : index
    %c2_114 = arith.constant 2 : index
    %214 = vector.load %arg7[%c10_112, %c0_113, %c2_114] : memref<19x16x24xbf16, #tpu.memory_space<vmem>>, vector<1x16x20xbf16>
    %215 = vector.shape_cast %214 : vector<1x16x20xbf16> to vector<16x20xbf16>
    %216 = vector.shape_cast %213 : vector<16x20xbf16> to vector<1x16x20xbf16>
    tpu.vector_store %arg7[%c10_112, %c0_113, %c2_114], %216 {strides = array<i32>} : memref<19x16x24xbf16, #tpu.memory_space<vmem>>, vector<1x16x20xbf16>,
    %c0_115 = arith.constant 0 : index
    %c20 = arith.constant 20 : index
    %c0_116 = arith.constant 0 : index
    %c0_117 = arith.constant 0 : index
    %217 = vector.load %arg1[%c0_115, %c20, %c0_116, %c0_117] : memref<1x36x16x22xbf16, #tpu.memory_space<vmem>>, vector<1x3x16x22xbf16>
    %218 = vector.shape_cast %217 : vector<1x3x16x22xbf16> to vector<3x16x22xbf16>
    %219 = vector.shape_cast %218 : vector<3x16x22xbf16> to vector<48x22xbf16>
    %c0_118 = arith.constant 0 : index
    %c0_119 = arith.constant 0 : index
    %220 = vector.load %arg2[%c0_118, %c0_119] : memref<48x48xbf16, #tpu.memory_space<vmem>>, vector<48x48xbf16>
    %cst_120 = arith.constant dense<0.000000e+00> : vector<48x22xf32>
    %221 = tpu.matmul %220, %219, %cst_120 {dimension_numbers = #tpu.dot_dimension_numbers<[1], [0], [0], [1], [0, 0, 1, 1], [], []>} : vector<48x48xbf16>, vector<48x22xbf16>, vector<48x22xf32> -> vector<48x22xf32>
    %222 = vector.extract_strided_slice %221 {offsets = [0, 0], sizes = [16, 20], strides = [1, 1]} : vector<48x22xf32> to vector<16x20xf32>
    %223 = arith.addf %2, %222 : vector<16x20xf32>
    %224 = vector.extract_strided_slice %221 {offsets = [16, 1], sizes = [16, 20], strides = [1, 1]} : vector<48x22xf32> to vector<16x20xf32>
    %225 = arith.addf %223, %224 : vector<16x20xf32>
    %226 = vector.extract_strided_slice %221 {offsets = [32, 2], sizes = [16, 20], strides = [1, 1]} : vector<48x22xf32> to vector<16x20xf32>
    %227 = arith.addf %225, %226 : vector<16x20xf32>
    %228 = arith.negf %227 : vector<16x20xf32>
    %229 = math.exp %228 : vector<16x20xf32>
    %cst_121 = arith.constant 1.000000e+00 : f32
    %230 = vector.broadcast %cst_121 : f32 to vector<16x20xf32>
    %231 = arith.addf %230, %229 : vector<16x20xf32>
    %232 = arith.divf %230, %231 : vector<16x20xf32>
    %233 = arith.truncf %232 : vector<16x20xf32> to vector<16x20xbf16>
    %c11 = arith.constant 11 : index
    %c0_122 = arith.constant 0 : index
    %c2_123 = arith.constant 2 : index
    %234 = vector.load %arg7[%c11, %c0_122, %c2_123] : memref<19x16x24xbf16, #tpu.memory_space<vmem>>, vector<1x16x20xbf16>
    %235 = vector.shape_cast %234 : vector<1x16x20xbf16> to vector<16x20xbf16>
    %236 = vector.shape_cast %233 : vector<16x20xbf16> to vector<1x16x20xbf16>
    tpu.vector_store %arg7[%c11, %c0_122, %c2_123], %236 {strides = array<i32>} : memref<19x16x24xbf16, #tpu.memory_space<vmem>>, vector<1x16x20xbf16>,
    %c0_124 = arith.constant 0 : index
    %c22_125 = arith.constant 22 : index
    %c0_126 = arith.constant 0 : index
    %c0_127 = arith.constant 0 : index
    %237 = vector.load %arg1[%c0_124, %c22_125, %c0_126, %c0_127] : memref<1x36x16x22xbf16, #tpu.memory_space<vmem>>, vector<1x3x16x22xbf16>
    %238 = vector.shape_cast %237 : vector<1x3x16x22xbf16> to vector<3x16x22xbf16>
    %239 = vector.shape_cast %238 : vector<3x16x22xbf16> to vector<48x22xbf16>
    %c0_128 = arith.constant 0 : index
    %c0_129 = arith.constant 0 : index
    %240 = vector.load %arg2[%c0_128, %c0_129] : memref<48x48xbf16, #tpu.memory_space<vmem>>, vector<48x48xbf16>
    %cst_130 = arith.constant dense<0.000000e+00> : vector<48x22xf32>
    %241 = tpu.matmul %240, %239, %cst_130 {dimension_numbers = #tpu.dot_dimension_numbers<[1], [0], [0], [1], [0, 0, 1, 1], [], []>} : vector<48x48xbf16>, vector<48x22xbf16>, vector<48x22xf32> -> vector<48x22xf32>
    %242 = vector.extract_strided_slice %241 {offsets = [0, 0], sizes = [16, 20], strides = [1, 1]} : vector<48x22xf32> to vector<16x20xf32>
    %243 = arith.addf %2, %242 : vector<16x20xf32>
    %244 = vector.extract_strided_slice %241 {offsets = [16, 1], sizes = [16, 20], strides = [1, 1]} : vector<48x22xf32> to vector<16x20xf32>
    %245 = arith.addf %243, %244 : vector<16x20xf32>
    %246 = vector.extract_strided_slice %241 {offsets = [32, 2], sizes = [16, 20], strides = [1, 1]} : vector<48x22xf32> to vector<16x20xf32>
    %247 = arith.addf %245, %246 : vector<16x20xf32>
    %248 = arith.negf %247 : vector<16x20xf32>
    %249 = math.exp %248 : vector<16x20xf32>
    %cst_131 = arith.constant 1.000000e+00 : f32
    %250 = vector.broadcast %cst_131 : f32 to vector<16x20xf32>
    %251 = arith.addf %250, %249 : vector<16x20xf32>
    %252 = arith.divf %250, %251 : vector<16x20xf32>
    %253 = arith.truncf %252 : vector<16x20xf32> to vector<16x20xbf16>
    %c12_132 = arith.constant 12 : index
    %c0_133 = arith.constant 0 : index
    %c2_134 = arith.constant 2 : index
    %254 = vector.load %arg7[%c12_132, %c0_133, %c2_134] : memref<19x16x24xbf16, #tpu.memory_space<vmem>>, vector<1x16x20xbf16>
    %255 = vector.shape_cast %254 : vector<1x16x20xbf16> to vector<16x20xbf16>
    %256 = vector.shape_cast %253 : vector<16x20xbf16> to vector<1x16x20xbf16>
    tpu.vector_store %arg7[%c12_132, %c0_133, %c2_134], %256 {strides = array<i32>} : memref<19x16x24xbf16, #tpu.memory_space<vmem>>, vector<1x16x20xbf16>,
    %c0_135 = arith.constant 0 : index
    %c24 = arith.constant 24 : index
    %c0_136 = arith.constant 0 : index
    %c0_137 = arith.constant 0 : index
    %257 = vector.load %arg1[%c0_135, %c24, %c0_136, %c0_137] : memref<1x36x16x22xbf16, #tpu.memory_space<vmem>>, vector<1x3x16x22xbf16>
    %258 = vector.shape_cast %257 : vector<1x3x16x22xbf16> to vector<3x16x22xbf16>
    %259 = vector.shape_cast %258 : vector<3x16x22xbf16> to vector<48x22xbf16>
    %c0_138 = arith.constant 0 : index
    %c0_139 = arith.constant 0 : index
    %260 = vector.load %arg2[%c0_138, %c0_139] : memref<48x48xbf16, #tpu.memory_space<vmem>>, vector<48x48xbf16>
    %cst_140 = arith.constant dense<0.000000e+00> : vector<48x22xf32>
    %261 = tpu.matmul %260, %259, %cst_140 {dimension_numbers = #tpu.dot_dimension_numbers<[1], [0], [0], [1], [0, 0, 1, 1], [], []>} : vector<48x48xbf16>, vector<48x22xbf16>, vector<48x22xf32> -> vector<48x22xf32>
    %262 = vector.extract_strided_slice %261 {offsets = [0, 0], sizes = [16, 20], strides = [1, 1]} : vector<48x22xf32> to vector<16x20xf32>
    %263 = arith.addf %2, %262 : vector<16x20xf32>
    %264 = vector.extract_strided_slice %261 {offsets = [16, 1], sizes = [16, 20], strides = [1, 1]} : vector<48x22xf32> to vector<16x20xf32>
    %265 = arith.addf %263, %264 : vector<16x20xf32>
    %266 = vector.extract_strided_slice %261 {offsets = [32, 2], sizes = [16, 20], strides = [1, 1]} : vector<48x22xf32> to vector<16x20xf32>
    %267 = arith.addf %265, %266 : vector<16x20xf32>
    %268 = arith.negf %267 : vector<16x20xf32>
    %269 = math.exp %268 : vector<16x20xf32>
    %cst_141 = arith.constant 1.000000e+00 : f32
    %270 = vector.broadcast %cst_141 : f32 to vector<16x20xf32>
    %271 = arith.addf %270, %269 : vector<16x20xf32>
    %272 = arith.divf %270, %271 : vector<16x20xf32>
    %273 = arith.truncf %272 : vector<16x20xf32> to vector<16x20xbf16>
    %c13 = arith.constant 13 : index
    %c0_142 = arith.constant 0 : index
    %c2_143 = arith.constant 2 : index
    %274 = vector.load %arg7[%c13, %c0_142, %c2_143] : memref<19x16x24xbf16, #tpu.memory_space<vmem>>, vector<1x16x20xbf16>
    %275 = vector.shape_cast %274 : vector<1x16x20xbf16> to vector<16x20xbf16>
    %276 = vector.shape_cast %273 : vector<16x20xbf16> to vector<1x16x20xbf16>
    tpu.vector_store %arg7[%c13, %c0_142, %c2_143], %276 {strides = array<i32>} : memref<19x16x24xbf16, #tpu.memory_space<vmem>>, vector<1x16x20xbf16>,
    %c0_144 = arith.constant 0 : index
    %c26 = arith.constant 26 : index
    %c0_145 = arith.constant 0 : index
    %c0_146 = arith.constant 0 : index
    %277 = vector.load %arg1[%c0_144, %c26, %c0_145, %c0_146] : memref<1x36x16x22xbf16, #tpu.memory_space<vmem>>, vector<1x3x16x22xbf16>
    %278 = vector.shape_cast %277 : vector<1x3x16x22xbf16> to vector<3x16x22xbf16>
    %279 = vector.shape_cast %278 : vector<3x16x22xbf16> to vector<48x22xbf16>
    %c0_147 = arith.constant 0 : index
    %c0_148 = arith.constant 0 : index
    %280 = vector.load %arg2[%c0_147, %c0_148] : memref<48x48xbf16, #tpu.memory_space<vmem>>, vector<48x48xbf16>
    %cst_149 = arith.constant dense<0.000000e+00> : vector<48x22xf32>
    %281 = tpu.matmul %280, %279, %cst_149 {dimension_numbers = #tpu.dot_dimension_numbers<[1], [0], [0], [1], [0, 0, 1, 1], [], []>} : vector<48x48xbf16>, vector<48x22xbf16>, vector<48x22xf32> -> vector<48x22xf32>
    %282 = vector.extract_strided_slice %281 {offsets = [0, 0], sizes = [16, 20], strides = [1, 1]} : vector<48x22xf32> to vector<16x20xf32>
    %283 = arith.addf %2, %282 : vector<16x20xf32>
    %284 = vector.extract_strided_slice %281 {offsets = [16, 1], sizes = [16, 20], strides = [1, 1]} : vector<48x22xf32> to vector<16x20xf32>
    %285 = arith.addf %283, %284 : vector<16x20xf32>
    %286 = vector.extract_strided_slice %281 {offsets = [32, 2], sizes = [16, 20], strides = [1, 1]} : vector<48x22xf32> to vector<16x20xf32>
    %287 = arith.addf %285, %286 : vector<16x20xf32>
    %288 = arith.negf %287 : vector<16x20xf32>
    %289 = math.exp %288 : vector<16x20xf32>
    %cst_150 = arith.constant 1.000000e+00 : f32
    %290 = vector.broadcast %cst_150 : f32 to vector<16x20xf32>
    %291 = arith.addf %290, %289 : vector<16x20xf32>
    %292 = arith.divf %290, %291 : vector<16x20xf32>
    %293 = arith.truncf %292 : vector<16x20xf32> to vector<16x20xbf16>
    %c14_151 = arith.constant 14 : index
    %c0_152 = arith.constant 0 : index
    %c2_153 = arith.constant 2 : index
    %294 = vector.load %arg7[%c14_151, %c0_152, %c2_153] : memref<19x16x24xbf16, #tpu.memory_space<vmem>>, vector<1x16x20xbf16>
    %295 = vector.shape_cast %294 : vector<1x16x20xbf16> to vector<16x20xbf16>
    %296 = vector.shape_cast %293 : vector<16x20xbf16> to vector<1x16x20xbf16>
    tpu.vector_store %arg7[%c14_151, %c0_152, %c2_153], %296 {strides = array<i32>} : memref<19x16x24xbf16, #tpu.memory_space<vmem>>, vector<1x16x20xbf16>,
    %c0_154 = arith.constant 0 : index
    %c28 = arith.constant 28 : index
    %c0_155 = arith.constant 0 : index
    %c0_156 = arith.constant 0 : index
    %297 = vector.load %arg1[%c0_154, %c28, %c0_155, %c0_156] : memref<1x36x16x22xbf16, #tpu.memory_space<vmem>>, vector<1x3x16x22xbf16>
    %298 = vector.shape_cast %297 : vector<1x3x16x22xbf16> to vector<3x16x22xbf16>
    %299 = vector.shape_cast %298 : vector<3x16x22xbf16> to vector<48x22xbf16>
    %c0_157 = arith.constant 0 : index
    %c0_158 = arith.constant 0 : index
    %300 = vector.load %arg2[%c0_157, %c0_158] : memref<48x48xbf16, #tpu.memory_space<vmem>>, vector<48x48xbf16>
    %cst_159 = arith.constant dense<0.000000e+00> : vector<48x22xf32>
    %301 = tpu.matmul %300, %299, %cst_159 {dimension_numbers = #tpu.dot_dimension_numbers<[1], [0], [0], [1], [0, 0, 1, 1], [], []>} : vector<48x48xbf16>, vector<48x22xbf16>, vector<48x22xf32> -> vector<48x22xf32>
    %302 = vector.extract_strided_slice %301 {offsets = [0, 0], sizes = [16, 20], strides = [1, 1]} : vector<48x22xf32> to vector<16x20xf32>
    %303 = arith.addf %2, %302 : vector<16x20xf32>
    %304 = vector.extract_strided_slice %301 {offsets = [16, 1], sizes = [16, 20], strides = [1, 1]} : vector<48x22xf32> to vector<16x20xf32>
    %305 = arith.addf %303, %304 : vector<16x20xf32>
    %306 = vector.extract_strided_slice %301 {offsets = [32, 2], sizes = [16, 20], strides = [1, 1]} : vector<48x22xf32> to vector<16x20xf32>
    %307 = arith.addf %305, %306 : vector<16x20xf32>
    %308 = arith.negf %307 : vector<16x20xf32>
    %309 = math.exp %308 : vector<16x20xf32>
    %cst_160 = arith.constant 1.000000e+00 : f32
    %310 = vector.broadcast %cst_160 : f32 to vector<16x20xf32>
    %311 = arith.addf %310, %309 : vector<16x20xf32>
    %312 = arith.divf %310, %311 : vector<16x20xf32>
    %313 = arith.truncf %312 : vector<16x20xf32> to vector<16x20xbf16>
    %c15 = arith.constant 15 : index
    %c0_161 = arith.constant 0 : index
    %c2_162 = arith.constant 2 : index
    %314 = vector.load %arg7[%c15, %c0_161, %c2_162] : memref<19x16x24xbf16, #tpu.memory_space<vmem>>, vector<1x16x20xbf16>
    %315 = vector.shape_cast %314 : vector<1x16x20xbf16> to vector<16x20xbf16>
    %316 = vector.shape_cast %313 : vector<16x20xbf16> to vector<1x16x20xbf16>
    tpu.vector_store %arg7[%c15, %c0_161, %c2_162], %316 {strides = array<i32>} : memref<19x16x24xbf16, #tpu.memory_space<vmem>>, vector<1x16x20xbf16>,
    %c0_163 = arith.constant 0 : index
    %c30 = arith.constant 30 : index
    %c0_164 = arith.constant 0 : index
    %c0_165 = arith.constant 0 : index
    %317 = vector.load %arg1[%c0_163, %c30, %c0_164, %c0_165] : memref<1x36x16x22xbf16, #tpu.memory_space<vmem>>, vector<1x3x16x22xbf16>
    %318 = vector.shape_cast %317 : vector<1x3x16x22xbf16> to vector<3x16x22xbf16>
    %319 = vector.shape_cast %318 : vector<3x16x22xbf16> to vector<48x22xbf16>
    %c0_166 = arith.constant 0 : index
    %c0_167 = arith.constant 0 : index
    %320 = vector.load %arg2[%c0_166, %c0_167] : memref<48x48xbf16, #tpu.memory_space<vmem>>, vector<48x48xbf16>
    %cst_168 = arith.constant dense<0.000000e+00> : vector<48x22xf32>
    %321 = tpu.matmul %320, %319, %cst_168 {dimension_numbers = #tpu.dot_dimension_numbers<[1], [0], [0], [1], [0, 0, 1, 1], [], []>} : vector<48x48xbf16>, vector<48x22xbf16>, vector<48x22xf32> -> vector<48x22xf32>
    %322 = vector.extract_strided_slice %321 {offsets = [0, 0], sizes = [16, 20], strides = [1, 1]} : vector<48x22xf32> to vector<16x20xf32>
    %323 = arith.addf %2, %322 : vector<16x20xf32>
    %324 = vector.extract_strided_slice %321 {offsets = [16, 1], sizes = [16, 20], strides = [1, 1]} : vector<48x22xf32> to vector<16x20xf32>
    %325 = arith.addf %323, %324 : vector<16x20xf32>
    %326 = vector.extract_strided_slice %321 {offsets = [32, 2], sizes = [16, 20], strides = [1, 1]} : vector<48x22xf32> to vector<16x20xf32>
    %327 = arith.addf %325, %326 : vector<16x20xf32>
    %328 = arith.negf %327 : vector<16x20xf32>
    %329 = math.exp %328 : vector<16x20xf32>
    %cst_169 = arith.constant 1.000000e+00 : f32
    %330 = vector.broadcast %cst_169 : f32 to vector<16x20xf32>
    %331 = arith.addf %330, %329 : vector<16x20xf32>
    %332 = arith.divf %330, %331 : vector<16x20xf32>
    %333 = arith.truncf %332 : vector<16x20xf32> to vector<16x20xbf16>
    %c16_170 = arith.constant 16 : index
    %c0_171 = arith.constant 0 : index
    %c2_172 = arith.constant 2 : index
    %334 = vector.load %arg7[%c16_170, %c0_171, %c2_172] : memref<19x16x24xbf16, #tpu.memory_space<vmem>>, vector<1x16x20xbf16>
    %335 = vector.shape_cast %334 : vector<1x16x20xbf16> to vector<16x20xbf16>
    %336 = vector.shape_cast %333 : vector<16x20xbf16> to vector<1x16x20xbf16>
    tpu.vector_store %arg7[%c16_170, %c0_171, %c2_172], %336 {strides = array<i32>} : memref<19x16x24xbf16, #tpu.memory_space<vmem>>, vector<1x16x20xbf16>,
    %c0_173 = arith.constant 0 : index
    %c32 = arith.constant 32 : index
    %c0_174 = arith.constant 0 : index
    %c0_175 = arith.constant 0 : index
    %337 = vector.load %arg1[%c0_173, %c32, %c0_174, %c0_175] : memref<1x36x16x22xbf16, #tpu.memory_space<vmem>>, vector<1x3x16x22xbf16>
    %338 = vector.shape_cast %337 : vector<1x3x16x22xbf16> to vector<3x16x22xbf16>
    %339 = vector.shape_cast %338 : vector<3x16x22xbf16> to vector<48x22xbf16>
    %c0_176 = arith.constant 0 : index
    %c0_177 = arith.constant 0 : index
    %340 = vector.load %arg2[%c0_176, %c0_177] : memref<48x48xbf16, #tpu.memory_space<vmem>>, vector<48x48xbf16>
    %cst_178 = arith.constant dense<0.000000e+00> : vector<48x22xf32>
    %341 = tpu.matmul %340, %339, %cst_178 {dimension_numbers = #tpu.dot_dimension_numbers<[1], [0], [0], [1], [0, 0, 1, 1], [], []>} : vector<48x48xbf16>, vector<48x22xbf16>, vector<48x22xf32> -> vector<48x22xf32>
    %342 = vector.extract_strided_slice %341 {offsets = [0, 0], sizes = [16, 20], strides = [1, 1]} : vector<48x22xf32> to vector<16x20xf32>
    %343 = arith.addf %2, %342 : vector<16x20xf32>
    %344 = vector.extract_strided_slice %341 {offsets = [16, 1], sizes = [16, 20], strides = [1, 1]} : vector<48x22xf32> to vector<16x20xf32>
    %345 = arith.addf %343, %344 : vector<16x20xf32>
    %346 = vector.extract_strided_slice %341 {offsets = [32, 2], sizes = [16, 20], strides = [1, 1]} : vector<48x22xf32> to vector<16x20xf32>
    %347 = arith.addf %345, %346 : vector<16x20xf32>
    %348 = arith.negf %347 : vector<16x20xf32>
    %349 = math.exp %348 : vector<16x20xf32>
    %cst_179 = arith.constant 1.000000e+00 : f32
    %350 = vector.broadcast %cst_179 : f32 to vector<16x20xf32>
    %351 = arith.addf %350, %349 : vector<16x20xf32>
    %352 = arith.divf %350, %351 : vector<16x20xf32>
    %353 = arith.truncf %352 : vector<16x20xf32> to vector<16x20xbf16>
    %c17 = arith.constant 17 : index
    %c0_180 = arith.constant 0 : index
    %c2_181 = arith.constant 2 : index
    %354 = vector.load %arg7[%c17, %c0_180, %c2_181] : memref<19x16x24xbf16, #tpu.memory_space<vmem>>, vector<1x16x20xbf16>
    %355 = vector.shape_cast %354 : vector<1x16x20xbf16> to vector<16x20xbf16>
    %356 = vector.shape_cast %353 : vector<16x20xbf16> to vector<1x16x20xbf16>
    tpu.vector_store %arg7[%c17, %c0_180, %c2_181], %356 {strides = array<i32>} : memref<19x16x24xbf16, #tpu.memory_space<vmem>>, vector<1x16x20xbf16>,
    %c0_182 = arith.constant 0 : index
    %c0_183 = arith.constant 0 : index
    %c0_184 = arith.constant 0 : index
    %357 = vector.load %arg7[%c0_182, %c0_183, %c0_184] : memref<19x16x24xbf16, #tpu.memory_space<vmem>>, vector<5x16x24xbf16>
    %358 = vector.shape_cast %357 : vector<5x16x24xbf16> to vector<80x24xbf16>
    %c0_185 = arith.constant 0 : index
    %c0_186 = arith.constant 0 : index
    %359 = vector.load %arg3[%c0_185, %c0_186] : memref<80x80xbf16, #tpu.memory_space<vmem>>, vector<80x80xbf16>
    %cst_187 = arith.constant dense<0.000000e+00> : vector<80x24xf32>
    %360 = tpu.matmul %359, %358, %cst_187 {dimension_numbers = #tpu.dot_dimension_numbers<[1], [0], [0], [1], [0, 0, 1, 1], [], []>} : vector<80x80xbf16>, vector<80x24xbf16>, vector<80x24xf32> -> vector<80x24xf32>
    %361 = vector.extract_strided_slice %360 {offsets = [0, 0], sizes = [16, 20], strides = [1, 1]} : vector<80x24xf32> to vector<16x20xf32>
    %362 = arith.addf %5, %361 : vector<16x20xf32>
    %363 = vector.extract_strided_slice %360 {offsets = [16, 1], sizes = [16, 20], strides = [1, 1]} : vector<80x24xf32> to vector<16x20xf32>
    %364 = arith.addf %362, %363 : vector<16x20xf32>
    %365 = vector.extract_strided_slice %360 {offsets = [32, 2], sizes = [16, 20], strides = [1, 1]} : vector<80x24xf32> to vector<16x20xf32>
    %366 = arith.addf %364, %365 : vector<16x20xf32>
    %367 = vector.extract_strided_slice %360 {offsets = [48, 3], sizes = [16, 20], strides = [1, 1]} : vector<80x24xf32> to vector<16x20xf32>
    %368 = arith.addf %366, %367 : vector<16x20xf32>
    %369 = vector.extract_strided_slice %360 {offsets = [64, 4], sizes = [16, 20], strides = [1, 1]} : vector<80x24xf32> to vector<16x20xf32>
    %370 = arith.addf %368, %369 : vector<16x20xf32>
    %371 = arith.negf %370 : vector<16x20xf32>
    %372 = math.exp %371 : vector<16x20xf32>
    %cst_188 = arith.constant 1.000000e+00 : f32
    %373 = vector.broadcast %cst_188 : f32 to vector<16x20xf32>
    %374 = arith.addf %373, %372 : vector<16x20xf32>
    %375 = arith.divf %373, %374 : vector<16x20xf32>
    %376 = arith.truncf %375 : vector<16x20xf32> to vector<16x20xbf16>
    %c0_189 = arith.constant 0 : index
    %c0_190 = arith.constant 0 : index
    %c0_191 = arith.constant 0 : index
    %377 = vector.load %arg8[%c0_189, %c0_190, %c0_191] : memref<8x16x20xbf16, #tpu.memory_space<vmem>>, vector<1x16x20xbf16>
    %378 = vector.shape_cast %377 : vector<1x16x20xbf16> to vector<16x20xbf16>
    %379 = vector.shape_cast %376 : vector<16x20xbf16> to vector<1x16x20xbf16>
    tpu.vector_store %arg8[%c0_189, %c0_190, %c0_191], %379 {strides = array<i32>} : memref<8x16x20xbf16, #tpu.memory_space<vmem>>, vector<1x16x20xbf16>,
    %c2_192 = arith.constant 2 : index
    %c0_193 = arith.constant 0 : index
    %c0_194 = arith.constant 0 : index
    %380 = vector.load %arg7[%c2_192, %c0_193, %c0_194] : memref<19x16x24xbf16, #tpu.memory_space<vmem>>, vector<5x16x24xbf16>
    %381 = vector.shape_cast %380 : vector<5x16x24xbf16> to vector<80x24xbf16>
    %c0_195 = arith.constant 0 : index
    %c0_196 = arith.constant 0 : index
    %382 = vector.load %arg3[%c0_195, %c0_196] : memref<80x80xbf16, #tpu.memory_space<vmem>>, vector<80x80xbf16>
    %cst_197 = arith.constant dense<0.000000e+00> : vector<80x24xf32>
    %383 = tpu.matmul %382, %381, %cst_197 {dimension_numbers = #tpu.dot_dimension_numbers<[1], [0], [0], [1], [0, 0, 1, 1], [], []>} : vector<80x80xbf16>, vector<80x24xbf16>, vector<80x24xf32> -> vector<80x24xf32>
    %384 = vector.extract_strided_slice %383 {offsets = [0, 0], sizes = [16, 20], strides = [1, 1]} : vector<80x24xf32> to vector<16x20xf32>
    %385 = arith.addf %5, %384 : vector<16x20xf32>
    %386 = vector.extract_strided_slice %383 {offsets = [16, 1], sizes = [16, 20], strides = [1, 1]} : vector<80x24xf32> to vector<16x20xf32>
    %387 = arith.addf %385, %386 : vector<16x20xf32>
    %388 = vector.extract_strided_slice %383 {offsets = [32, 2], sizes = [16, 20], strides = [1, 1]} : vector<80x24xf32> to vector<16x20xf32>
    %389 = arith.addf %387, %388 : vector<16x20xf32>
    %390 = vector.extract_strided_slice %383 {offsets = [48, 3], sizes = [16, 20], strides = [1, 1]} : vector<80x24xf32> to vector<16x20xf32>
    %391 = arith.addf %389, %390 : vector<16x20xf32>
    %392 = vector.extract_strided_slice %383 {offsets = [64, 4], sizes = [16, 20], strides = [1, 1]} : vector<80x24xf32> to vector<16x20xf32>
    %393 = arith.addf %391, %392 : vector<16x20xf32>
    %394 = arith.negf %393 : vector<16x20xf32>
    %395 = math.exp %394 : vector<16x20xf32>
    %cst_198 = arith.constant 1.000000e+00 : f32
    %396 = vector.broadcast %cst_198 : f32 to vector<16x20xf32>
    %397 = arith.addf %396, %395 : vector<16x20xf32>
    %398 = arith.divf %396, %397 : vector<16x20xf32>
    %399 = arith.truncf %398 : vector<16x20xf32> to vector<16x20xbf16>
    %c1_199 = arith.constant 1 : index
    %c0_200 = arith.constant 0 : index
    %c0_201 = arith.constant 0 : index
    %400 = vector.load %arg8[%c1_199, %c0_200, %c0_201] : memref<8x16x20xbf16, #tpu.memory_space<vmem>>, vector<1x16x20xbf16>
    %401 = vector.shape_cast %400 : vector<1x16x20xbf16> to vector<16x20xbf16>
    %402 = vector.shape_cast %399 : vector<16x20xbf16> to vector<1x16x20xbf16>
    tpu.vector_store %arg8[%c1_199, %c0_200, %c0_201], %402 {strides = array<i32>} : memref<8x16x20xbf16, #tpu.memory_space<vmem>>, vector<1x16x20xbf16>,
    %c4_202 = arith.constant 4 : index
    %c0_203 = arith.constant 0 : index
    %c0_204 = arith.constant 0 : index
    %403 = vector.load %arg7[%c4_202, %c0_203, %c0_204] : memref<19x16x24xbf16, #tpu.memory_space<vmem>>, vector<5x16x24xbf16>
    %404 = vector.shape_cast %403 : vector<5x16x24xbf16> to vector<80x24xbf16>
    %c0_205 = arith.constant 0 : index
    %c0_206 = arith.constant 0 : index
    %405 = vector.load %arg3[%c0_205, %c0_206] : memref<80x80xbf16, #tpu.memory_space<vmem>>, vector<80x80xbf16>
    %cst_207 = arith.constant dense<0.000000e+00> : vector<80x24xf32>
    %406 = tpu.matmul %405, %404, %cst_207 {dimension_numbers = #tpu.dot_dimension_numbers<[1], [0], [0], [1], [0, 0, 1, 1], [], []>} : vector<80x80xbf16>, vector<80x24xbf16>, vector<80x24xf32> -> vector<80x24xf32>
    %407 = vector.extract_strided_slice %406 {offsets = [0, 0], sizes = [16, 20], strides = [1, 1]} : vector<80x24xf32> to vector<16x20xf32>
    %408 = arith.addf %5, %407 : vector<16x20xf32>
    %409 = vector.extract_strided_slice %406 {offsets = [16, 1], sizes = [16, 20], strides = [1, 1]} : vector<80x24xf32> to vector<16x20xf32>
    %410 = arith.addf %408, %409 : vector<16x20xf32>
    %411 = vector.extract_strided_slice %406 {offsets = [32, 2], sizes = [16, 20], strides = [1, 1]} : vector<80x24xf32> to vector<16x20xf32>
    %412 = arith.addf %410, %411 : vector<16x20xf32>
    %413 = vector.extract_strided_slice %406 {offsets = [48, 3], sizes = [16, 20], strides = [1, 1]} : vector<80x24xf32> to vector<16x20xf32>
    %414 = arith.addf %412, %413 : vector<16x20xf32>
    %415 = vector.extract_strided_slice %406 {offsets = [64, 4], sizes = [16, 20], strides = [1, 1]} : vector<80x24xf32> to vector<16x20xf32>
    %416 = arith.addf %414, %415 : vector<16x20xf32>
    %417 = arith.negf %416 : vector<16x20xf32>
    %418 = math.exp %417 : vector<16x20xf32>
    %cst_208 = arith.constant 1.000000e+00 : f32
    %419 = vector.broadcast %cst_208 : f32 to vector<16x20xf32>
    %420 = arith.addf %419, %418 : vector<16x20xf32>
    %421 = arith.divf %419, %420 : vector<16x20xf32>
    %422 = arith.truncf %421 : vector<16x20xf32> to vector<16x20xbf16>
    %c2_209 = arith.constant 2 : index
    %c0_210 = arith.constant 0 : index
    %c0_211 = arith.constant 0 : index
    %423 = vector.load %arg8[%c2_209, %c0_210, %c0_211] : memref<8x16x20xbf16, #tpu.memory_space<vmem>>, vector<1x16x20xbf16>
    %424 = vector.shape_cast %423 : vector<1x16x20xbf16> to vector<16x20xbf16>
    %425 = vector.shape_cast %422 : vector<16x20xbf16> to vector<1x16x20xbf16>
    tpu.vector_store %arg8[%c2_209, %c0_210, %c0_211], %425 {strides = array<i32>} : memref<8x16x20xbf16, #tpu.memory_space<vmem>>, vector<1x16x20xbf16>,
    %c6_212 = arith.constant 6 : index
    %c0_213 = arith.constant 0 : index
    %c0_214 = arith.constant 0 : index
    %426 = vector.load %arg7[%c6_212, %c0_213, %c0_214] : memref<19x16x24xbf16, #tpu.memory_space<vmem>>, vector<5x16x24xbf16>
    %427 = vector.shape_cast %426 : vector<5x16x24xbf16> to vector<80x24xbf16>
    %c0_215 = arith.constant 0 : index
    %c0_216 = arith.constant 0 : index
    %428 = vector.load %arg3[%c0_215, %c0_216] : memref<80x80xbf16, #tpu.memory_space<vmem>>, vector<80x80xbf16>
    %cst_217 = arith.constant dense<0.000000e+00> : vector<80x24xf32>
    %429 = tpu.matmul %428, %427, %cst_217 {dimension_numbers = #tpu.dot_dimension_numbers<[1], [0], [0], [1], [0, 0, 1, 1], [], []>} : vector<80x80xbf16>, vector<80x24xbf16>, vector<80x24xf32> -> vector<80x24xf32>
    %430 = vector.extract_strided_slice %429 {offsets = [0, 0], sizes = [16, 20], strides = [1, 1]} : vector<80x24xf32> to vector<16x20xf32>
    %431 = arith.addf %5, %430 : vector<16x20xf32>
    %432 = vector.extract_strided_slice %429 {offsets = [16, 1], sizes = [16, 20], strides = [1, 1]} : vector<80x24xf32> to vector<16x20xf32>
    %433 = arith.addf %431, %432 : vector<16x20xf32>
    %434 = vector.extract_strided_slice %429 {offsets = [32, 2], sizes = [16, 20], strides = [1, 1]} : vector<80x24xf32> to vector<16x20xf32>
    %435 = arith.addf %433, %434 : vector<16x20xf32>
    %436 = vector.extract_strided_slice %429 {offsets = [48, 3], sizes = [16, 20], strides = [1, 1]} : vector<80x24xf32> to vector<16x20xf32>
    %437 = arith.addf %435, %436 : vector<16x20xf32>
    %438 = vector.extract_strided_slice %429 {offsets = [64, 4], sizes = [16, 20], strides = [1, 1]} : vector<80x24xf32> to vector<16x20xf32>
    %439 = arith.addf %437, %438 : vector<16x20xf32>
    %440 = arith.negf %439 : vector<16x20xf32>
    %441 = math.exp %440 : vector<16x20xf32>
    %cst_218 = arith.constant 1.000000e+00 : f32
    %442 = vector.broadcast %cst_218 : f32 to vector<16x20xf32>
    %443 = arith.addf %442, %441 : vector<16x20xf32>
    %444 = arith.divf %442, %443 : vector<16x20xf32>
    %445 = arith.truncf %444 : vector<16x20xf32> to vector<16x20xbf16>
    %c3_219 = arith.constant 3 : index
    %c0_220 = arith.constant 0 : index
    %c0_221 = arith.constant 0 : index
    %446 = vector.load %arg8[%c3_219, %c0_220, %c0_221] : memref<8x16x20xbf16, #tpu.memory_space<vmem>>, vector<1x16x20xbf16>
    %447 = vector.shape_cast %446 : vector<1x16x20xbf16> to vector<16x20xbf16>
    %448 = vector.shape_cast %445 : vector<16x20xbf16> to vector<1x16x20xbf16>
    tpu.vector_store %arg8[%c3_219, %c0_220, %c0_221], %448 {strides = array<i32>} : memref<8x16x20xbf16, #tpu.memory_space<vmem>>, vector<1x16x20xbf16>,
    %c8_222 = arith.constant 8 : index
    %c0_223 = arith.constant 0 : index
    %c0_224 = arith.constant 0 : index
    %449 = vector.load %arg7[%c8_222, %c0_223, %c0_224] : memref<19x16x24xbf16, #tpu.memory_space<vmem>>, vector<5x16x24xbf16>
    %450 = vector.shape_cast %449 : vector<5x16x24xbf16> to vector<80x24xbf16>
    %c0_225 = arith.constant 0 : index
    %c0_226 = arith.constant 0 : index
    %451 = vector.load %arg3[%c0_225, %c0_226] : memref<80x80xbf16, #tpu.memory_space<vmem>>, vector<80x80xbf16>
    %cst_227 = arith.constant dense<0.000000e+00> : vector<80x24xf32>
    %452 = tpu.matmul %451, %450, %cst_227 {dimension_numbers = #tpu.dot_dimension_numbers<[1], [0], [0], [1], [0, 0, 1, 1], [], []>} : vector<80x80xbf16>, vector<80x24xbf16>, vector<80x24xf32> -> vector<80x24xf32>
    %453 = vector.extract_strided_slice %452 {offsets = [0, 0], sizes = [16, 20], strides = [1, 1]} : vector<80x24xf32> to vector<16x20xf32>
    %454 = arith.addf %5, %453 : vector<16x20xf32>
    %455 = vector.extract_strided_slice %452 {offsets = [16, 1], sizes = [16, 20], strides = [1, 1]} : vector<80x24xf32> to vector<16x20xf32>
    %456 = arith.addf %454, %455 : vector<16x20xf32>
    %457 = vector.extract_strided_slice %452 {offsets = [32, 2], sizes = [16, 20], strides = [1, 1]} : vector<80x24xf32> to vector<16x20xf32>
    %458 = arith.addf %456, %457 : vector<16x20xf32>
    %459 = vector.extract_strided_slice %452 {offsets = [48, 3], sizes = [16, 20], strides = [1, 1]} : vector<80x24xf32> to vector<16x20xf32>
    %460 = arith.addf %458, %459 : vector<16x20xf32>
    %461 = vector.extract_strided_slice %452 {offsets = [64, 4], sizes = [16, 20], strides = [1, 1]} : vector<80x24xf32> to vector<16x20xf32>
    %462 = arith.addf %460, %461 : vector<16x20xf32>
    %463 = arith.negf %462 : vector<16x20xf32>
    %464 = math.exp %463 : vector<16x20xf32>
    %cst_228 = arith.constant 1.000000e+00 : f32
    %465 = vector.broadcast %cst_228 : f32 to vector<16x20xf32>
    %466 = arith.addf %465, %464 : vector<16x20xf32>
    %467 = arith.divf %465, %466 : vector<16x20xf32>
    %468 = arith.truncf %467 : vector<16x20xf32> to vector<16x20xbf16>
    %c4_229 = arith.constant 4 : index
    %c0_230 = arith.constant 0 : index
    %c0_231 = arith.constant 0 : index
    %469 = vector.load %arg8[%c4_229, %c0_230, %c0_231] : memref<8x16x20xbf16, #tpu.memory_space<vmem>>, vector<1x16x20xbf16>
    %470 = vector.shape_cast %469 : vector<1x16x20xbf16> to vector<16x20xbf16>
    %471 = vector.shape_cast %468 : vector<16x20xbf16> to vector<1x16x20xbf16>
    tpu.vector_store %arg8[%c4_229, %c0_230, %c0_231], %471 {strides = array<i32>} : memref<8x16x20xbf16, #tpu.memory_space<vmem>>, vector<1x16x20xbf16>,
    %c10_232 = arith.constant 10 : index
    %c0_233 = arith.constant 0 : index
    %c0_234 = arith.constant 0 : index
    %472 = vector.load %arg7[%c10_232, %c0_233, %c0_234] : memref<19x16x24xbf16, #tpu.memory_space<vmem>>, vector<5x16x24xbf16>
    %473 = vector.shape_cast %472 : vector<5x16x24xbf16> to vector<80x24xbf16>
    %c0_235 = arith.constant 0 : index
    %c0_236 = arith.constant 0 : index
    %474 = vector.load %arg3[%c0_235, %c0_236] : memref<80x80xbf16, #tpu.memory_space<vmem>>, vector<80x80xbf16>
    %cst_237 = arith.constant dense<0.000000e+00> : vector<80x24xf32>
    %475 = tpu.matmul %474, %473, %cst_237 {dimension_numbers = #tpu.dot_dimension_numbers<[1], [0], [0], [1], [0, 0, 1, 1], [], []>} : vector<80x80xbf16>, vector<80x24xbf16>, vector<80x24xf32> -> vector<80x24xf32>
    %476 = vector.extract_strided_slice %475 {offsets = [0, 0], sizes = [16, 20], strides = [1, 1]} : vector<80x24xf32> to vector<16x20xf32>
    %477 = arith.addf %5, %476 : vector<16x20xf32>
    %478 = vector.extract_strided_slice %475 {offsets = [16, 1], sizes = [16, 20], strides = [1, 1]} : vector<80x24xf32> to vector<16x20xf32>
    %479 = arith.addf %477, %478 : vector<16x20xf32>
    %480 = vector.extract_strided_slice %475 {offsets = [32, 2], sizes = [16, 20], strides = [1, 1]} : vector<80x24xf32> to vector<16x20xf32>
    %481 = arith.addf %479, %480 : vector<16x20xf32>
    %482 = vector.extract_strided_slice %475 {offsets = [48, 3], sizes = [16, 20], strides = [1, 1]} : vector<80x24xf32> to vector<16x20xf32>
    %483 = arith.addf %481, %482 : vector<16x20xf32>
    %484 = vector.extract_strided_slice %475 {offsets = [64, 4], sizes = [16, 20], strides = [1, 1]} : vector<80x24xf32> to vector<16x20xf32>
    %485 = arith.addf %483, %484 : vector<16x20xf32>
    %486 = arith.negf %485 : vector<16x20xf32>
    %487 = math.exp %486 : vector<16x20xf32>
    %cst_238 = arith.constant 1.000000e+00 : f32
    %488 = vector.broadcast %cst_238 : f32 to vector<16x20xf32>
    %489 = arith.addf %488, %487 : vector<16x20xf32>
    %490 = arith.divf %488, %489 : vector<16x20xf32>
    %491 = arith.truncf %490 : vector<16x20xf32> to vector<16x20xbf16>
    %c5_239 = arith.constant 5 : index
    %c0_240 = arith.constant 0 : index
    %c0_241 = arith.constant 0 : index
    %492 = vector.load %arg8[%c5_239, %c0_240, %c0_241] : memref<8x16x20xbf16, #tpu.memory_space<vmem>>, vector<1x16x20xbf16>
    %493 = vector.shape_cast %492 : vector<1x16x20xbf16> to vector<16x20xbf16>
    %494 = vector.shape_cast %491 : vector<16x20xbf16> to vector<1x16x20xbf16>
    tpu.vector_store %arg8[%c5_239, %c0_240, %c0_241], %494 {strides = array<i32>} : memref<8x16x20xbf16, #tpu.memory_space<vmem>>, vector<1x16x20xbf16>,
    %c12_242 = arith.constant 12 : index
    %c0_243 = arith.constant 0 : index
    %c0_244 = arith.constant 0 : index
    %495 = vector.load %arg7[%c12_242, %c0_243, %c0_244] : memref<19x16x24xbf16, #tpu.memory_space<vmem>>, vector<5x16x24xbf16>
    %496 = vector.shape_cast %495 : vector<5x16x24xbf16> to vector<80x24xbf16>
    %c0_245 = arith.constant 0 : index
    %c0_246 = arith.constant 0 : index
    %497 = vector.load %arg3[%c0_245, %c0_246] : memref<80x80xbf16, #tpu.memory_space<vmem>>, vector<80x80xbf16>
    %cst_247 = arith.constant dense<0.000000e+00> : vector<80x24xf32>
    %498 = tpu.matmul %497, %496, %cst_247 {dimension_numbers = #tpu.dot_dimension_numbers<[1], [0], [0], [1], [0, 0, 1, 1], [], []>} : vector<80x80xbf16>, vector<80x24xbf16>, vector<80x24xf32> -> vector<80x24xf32>
    %499 = vector.extract_strided_slice %498 {offsets = [0, 0], sizes = [16, 20], strides = [1, 1]} : vector<80x24xf32> to vector<16x20xf32>
    %500 = arith.addf %5, %499 : vector<16x20xf32>
    %501 = vector.extract_strided_slice %498 {offsets = [16, 1], sizes = [16, 20], strides = [1, 1]} : vector<80x24xf32> to vector<16x20xf32>
    %502 = arith.addf %500, %501 : vector<16x20xf32>
    %503 = vector.extract_strided_slice %498 {offsets = [32, 2], sizes = [16, 20], strides = [1, 1]} : vector<80x24xf32> to vector<16x20xf32>
    %504 = arith.addf %502, %503 : vector<16x20xf32>
    %505 = vector.extract_strided_slice %498 {offsets = [48, 3], sizes = [16, 20], strides = [1, 1]} : vector<80x24xf32> to vector<16x20xf32>
    %506 = arith.addf %504, %505 : vector<16x20xf32>
    %507 = vector.extract_strided_slice %498 {offsets = [64, 4], sizes = [16, 20], strides = [1, 1]} : vector<80x24xf32> to vector<16x20xf32>
    %508 = arith.addf %506, %507 : vector<16x20xf32>
    %509 = arith.negf %508 : vector<16x20xf32>
    %510 = math.exp %509 : vector<16x20xf32>
    %cst_248 = arith.constant 1.000000e+00 : f32
    %511 = vector.broadcast %cst_248 : f32 to vector<16x20xf32>
    %512 = arith.addf %511, %510 : vector<16x20xf32>
    %513 = arith.divf %511, %512 : vector<16x20xf32>
    %514 = arith.truncf %513 : vector<16x20xf32> to vector<16x20xbf16>
    %c6_249 = arith.constant 6 : index
    %c0_250 = arith.constant 0 : index
    %c0_251 = arith.constant 0 : index
    %515 = vector.load %arg8[%c6_249, %c0_250, %c0_251] : memref<8x16x20xbf16, #tpu.memory_space<vmem>>, vector<1x16x20xbf16>
    %516 = vector.shape_cast %515 : vector<1x16x20xbf16> to vector<16x20xbf16>
    %517 = vector.shape_cast %514 : vector<16x20xbf16> to vector<1x16x20xbf16>
    tpu.vector_store %arg8[%c6_249, %c0_250, %c0_251], %517 {strides = array<i32>} : memref<8x16x20xbf16, #tpu.memory_space<vmem>>, vector<1x16x20xbf16>,
    %c14_252 = arith.constant 14 : index
    %c0_253 = arith.constant 0 : index
    %c0_254 = arith.constant 0 : index
    %518 = vector.load %arg7[%c14_252, %c0_253, %c0_254] : memref<19x16x24xbf16, #tpu.memory_space<vmem>>, vector<5x16x24xbf16>
    %519 = vector.shape_cast %518 : vector<5x16x24xbf16> to vector<80x24xbf16>
    %c0_255 = arith.constant 0 : index
    %c0_256 = arith.constant 0 : index
    %520 = vector.load %arg3[%c0_255, %c0_256] : memref<80x80xbf16, #tpu.memory_space<vmem>>, vector<80x80xbf16>
    %cst_257 = arith.constant dense<0.000000e+00> : vector<80x24xf32>
    %521 = tpu.matmul %520, %519, %cst_257 {dimension_numbers = #tpu.dot_dimension_numbers<[1], [0], [0], [1], [0, 0, 1, 1], [], []>} : vector<80x80xbf16>, vector<80x24xbf16>, vector<80x24xf32> -> vector<80x24xf32>
    %522 = vector.extract_strided_slice %521 {offsets = [0, 0], sizes = [16, 20], strides = [1, 1]} : vector<80x24xf32> to vector<16x20xf32>
    %523 = arith.addf %5, %522 : vector<16x20xf32>
    %524 = vector.extract_strided_slice %521 {offsets = [16, 1], sizes = [16, 20], strides = [1, 1]} : vector<80x24xf32> to vector<16x20xf32>
    %525 = arith.addf %523, %524 : vector<16x20xf32>
    %526 = vector.extract_strided_slice %521 {offsets = [32, 2], sizes = [16, 20], strides = [1, 1]} : vector<80x24xf32> to vector<16x20xf32>
    %527 = arith.addf %525, %526 : vector<16x20xf32>
    %528 = vector.extract_strided_slice %521 {offsets = [48, 3], sizes = [16, 20], strides = [1, 1]} : vector<80x24xf32> to vector<16x20xf32>
    %529 = arith.addf %527, %528 : vector<16x20xf32>
    %530 = vector.extract_strided_slice %521 {offsets = [64, 4], sizes = [16, 20], strides = [1, 1]} : vector<80x24xf32> to vector<16x20xf32>
    %531 = arith.addf %529, %530 : vector<16x20xf32>
    %532 = arith.negf %531 : vector<16x20xf32>
    %533 = math.exp %532 : vector<16x20xf32>
    %cst_258 = arith.constant 1.000000e+00 : f32
    %534 = vector.broadcast %cst_258 : f32 to vector<16x20xf32>
    %535 = arith.addf %534, %533 : vector<16x20xf32>
    %536 = arith.divf %534, %535 : vector<16x20xf32>
    %537 = arith.truncf %536 : vector<16x20xf32> to vector<16x20xbf16>
    %c7_259 = arith.constant 7 : index
    %c0_260 = arith.constant 0 : index
    %c0_261 = arith.constant 0 : index
    %538 = vector.load %arg8[%c7_259, %c0_260, %c0_261] : memref<8x16x20xbf16, #tpu.memory_space<vmem>>, vector<1x16x20xbf16>
    %539 = vector.shape_cast %538 : vector<1x16x20xbf16> to vector<16x20xbf16>
    %540 = vector.shape_cast %537 : vector<16x20xbf16> to vector<1x16x20xbf16>
    tpu.vector_store %arg8[%c7_259, %c0_260, %c0_261], %540 {strides = array<i32>} : memref<8x16x20xbf16, #tpu.memory_space<vmem>>, vector<1x16x20xbf16>,
    %c0_262 = arith.constant 0 : index
    %c0_263 = arith.constant 0 : index
    %c0_264 = arith.constant 0 : index
    %541 = vector.load %arg8[%c0_262, %c0_263, %c0_264] : memref<8x16x20xbf16, #tpu.memory_space<vmem>>, vector<7x16x20xbf16>
    %542 = vector.shape_cast %541 : vector<7x16x20xbf16> to vector<112x20xbf16>
    %c0_265 = arith.constant 0 : index
    %c0_266 = arith.constant 0 : index
    %543 = vector.load %arg4[%c0_265, %c0_266] : memref<112x112xbf16, #tpu.memory_space<vmem>>, vector<112x112xbf16>
    %cst_267 = arith.constant dense<0.000000e+00> : vector<112x20xf32>
    %544 = tpu.matmul %543, %542, %cst_267 {dimension_numbers = #tpu.dot_dimension_numbers<[1], [0], [0], [1], [0, 0, 1, 1], [], []>} : vector<112x112xbf16>, vector<112x20xbf16>, vector<112x20xf32> -> vector<112x20xf32>
    %545 = vector.extract_strided_slice %544 {offsets = [0, 0], sizes = [16, 14], strides = [1, 1]} : vector<112x20xf32> to vector<16x14xf32>
    %546 = arith.addf %8, %545 : vector<16x14xf32>
    %547 = vector.extract_strided_slice %544 {offsets = [16, 1], sizes = [16, 14], strides = [1, 1]} : vector<112x20xf32> to vector<16x14xf32>
    %548 = arith.addf %546, %547 : vector<16x14xf32>
    %549 = vector.extract_strided_slice %544 {offsets = [32, 2], sizes = [16, 14], strides = [1, 1]} : vector<112x20xf32> to vector<16x14xf32>
    %550 = arith.addf %548, %549 : vector<16x14xf32>
    %551 = vector.extract_strided_slice %544 {offsets = [48, 3], sizes = [16, 14], strides = [1, 1]} : vector<112x20xf32> to vector<16x14xf32>
    %552 = arith.addf %550, %551 : vector<16x14xf32>
    %553 = vector.extract_strided_slice %544 {offsets = [64, 4], sizes = [16, 14], strides = [1, 1]} : vector<112x20xf32> to vector<16x14xf32>
    %554 = arith.addf %552, %553 : vector<16x14xf32>
    %555 = vector.extract_strided_slice %544 {offsets = [80, 5], sizes = [16, 14], strides = [1, 1]} : vector<112x20xf32> to vector<16x14xf32>
    %556 = arith.addf %554, %555 : vector<16x14xf32>
    %557 = vector.extract_strided_slice %544 {offsets = [96, 6], sizes = [16, 14], strides = [1, 1]} : vector<112x20xf32> to vector<16x14xf32>
    %558 = arith.addf %556, %557 : vector<16x14xf32>
    %c0_268 = arith.constant 0 : index
    %c0_269 = arith.constant 0 : index
    %c0_270 = arith.constant 0 : index
    %559 = vector.load %arg6[%c0_268, %c0_269, %c0_270] : memref<1x16x28xf32, #tpu.memory_space<vmem>>, vector<1x16x14xf32>
    %560 = vector.shape_cast %559 : vector<1x16x14xf32> to vector<16x14xf32>
    %561 = vector.shape_cast %558 : vector<16x14xf32> to vector<1x16x14xf32>
    tpu.vector_store %arg6[%c0_268, %c0_269, %c0_270], %561 {strides = array<i32>} : memref<1x16x28xf32, #tpu.memory_space<vmem>>, vector<1x16x14xf32>,
    %c1_271 = arith.constant 1 : index
    %c0_272 = arith.constant 0 : index
    %c0_273 = arith.constant 0 : index
    %562 = vector.load %arg8[%c1_271, %c0_272, %c0_273] : memref<8x16x20xbf16, #tpu.memory_space<vmem>>, vector<7x16x20xbf16>
    %563 = vector.shape_cast %562 : vector<7x16x20xbf16> to vector<112x20xbf16>
    %c0_274 = arith.constant 0 : index
    %c0_275 = arith.constant 0 : index
    %564 = vector.load %arg4[%c0_274, %c0_275] : memref<112x112xbf16, #tpu.memory_space<vmem>>, vector<112x112xbf16>
    %cst_276 = arith.constant dense<0.000000e+00> : vector<112x20xf32>
    %565 = tpu.matmul %564, %563, %cst_276 {dimension_numbers = #tpu.dot_dimension_numbers<[1], [0], [0], [1], [0, 0, 1, 1], [], []>} : vector<112x112xbf16>, vector<112x20xbf16>, vector<112x20xf32> -> vector<112x20xf32>
    %566 = vector.extract_strided_slice %565 {offsets = [0, 0], sizes = [16, 14], strides = [1, 1]} : vector<112x20xf32> to vector<16x14xf32>
    %567 = arith.addf %8, %566 : vector<16x14xf32>
    %568 = vector.extract_strided_slice %565 {offsets = [16, 1], sizes = [16, 14], strides = [1, 1]} : vector<112x20xf32> to vector<16x14xf32>
    %569 = arith.addf %567, %568 : vector<16x14xf32>
    %570 = vector.extract_strided_slice %565 {offsets = [32, 2], sizes = [16, 14], strides = [1, 1]} : vector<112x20xf32> to vector<16x14xf32>
    %571 = arith.addf %569, %570 : vector<16x14xf32>
    %572 = vector.extract_strided_slice %565 {offsets = [48, 3], sizes = [16, 14], strides = [1, 1]} : vector<112x20xf32> to vector<16x14xf32>
    %573 = arith.addf %571, %572 : vector<16x14xf32>
    %574 = vector.extract_strided_slice %565 {offsets = [64, 4], sizes = [16, 14], strides = [1, 1]} : vector<112x20xf32> to vector<16x14xf32>
    %575 = arith.addf %573, %574 : vector<16x14xf32>
    %576 = vector.extract_strided_slice %565 {offsets = [80, 5], sizes = [16, 14], strides = [1, 1]} : vector<112x20xf32> to vector<16x14xf32>
    %577 = arith.addf %575, %576 : vector<16x14xf32>
    %578 = vector.extract_strided_slice %565 {offsets = [96, 6], sizes = [16, 14], strides = [1, 1]} : vector<112x20xf32> to vector<16x14xf32>
    %579 = arith.addf %577, %578 : vector<16x14xf32>
    %c0_277 = arith.constant 0 : index
    %c0_278 = arith.constant 0 : index
    %c14_279 = arith.constant 14 : index
    %580 = vector.load %arg6[%c0_277, %c0_278, %c14_279] : memref<1x16x28xf32, #tpu.memory_space<vmem>>, vector<1x16x14xf32>
    %581 = vector.shape_cast %580 : vector<1x16x14xf32> to vector<16x14xf32>
    %582 = vector.shape_cast %579 : vector<16x14xf32> to vector<1x16x14xf32>
    tpu.vector_store %arg6[%c0_277, %c0_278, %c14_279], %582 {strides = array<i32>} : memref<1x16x28xf32, #tpu.memory_space<vmem>>, vector<1x16x14xf32>,
    return
  }
  func.func @transform_0(%arg0: i32) -> (i32, i32, i32, i32) {
    %c0_i32 = arith.constant 0 : i32
    %c0_i32_0 = arith.constant 0 : i32
    %c0_i32_1 = arith.constant 0 : i32
    %c0_i32_2 = arith.constant 0 : i32
    return %arg0, %c0_i32, %c0_i32_0, %c0_i32_1 : i32, i32, i32, i32
  }
  func.func @transform_1(%arg0: i32) -> (i32, i32) {
    %c0_i32 = arith.constant 0 : i32
    %c0_i32_0 = arith.constant 0 : i32
    %c0_i32_1 = arith.constant 0 : i32
    return %c0_i32, %c0_i32_0 : i32, i32
  }
  func.func @transform_2(%arg0: i32) -> (i32, i32) {
    %c0_i32 = arith.constant 0 : i32
    %c0_i32_0 = arith.constant 0 : i32
    %c0_i32_1 = arith.constant 0 : i32
    return %c0_i32, %c0_i32_0 : i32, i32
  }
  func.func @transform_3(%arg0: i32) -> (i32, i32) {
    %c0_i32 = arith.constant 0 : i32
    %c0_i32_0 = arith.constant 0 : i32
    %c0_i32_1 = arith.constant 0 : i32
    return %c0_i32, %c0_i32_0 : i32, i32
  }
  func.func @transform_4(%arg0: i32) -> (i32, i32) {
    %c0_i32 = arith.constant 0 : i32
    %c0_i32_0 = arith.constant 0 : i32
    %c0_i32_1 = arith.constant 0 : i32
    return %c0_i32, %c0_i32_0 : i32, i32
  }
  func.func @transform_5(%arg0: i32) -> (i32, i32, i32) {
    %c0_i32 = arith.constant 0 : i32
    %c0_i32_0 = arith.constant 0 : i32
    %c0_i32_1 = arith.constant 0 : i32
    return %arg0, %c0_i32, %c0_i32_0 : i32, i32, i32
  }
}

</mosaic_0001>

<llo_original>
// kernel: _fused_forward.1
$region0: #{_fused_forward.1}
  #allocation0 [shape = 'u32[]', space=smem, size = 0x4, offset = 0x4, fixed_abs, tag = 'smem constant byte address 0x4 - core index']
  #allocation1 [shape = 'u32[144,128]{1,0:T(1,128)}', space=vmem, size = 0x12000, scoped, tag = 'internal scratch']
  #allocation2 [shape = 'bf16[19,16,24]{2,1,0:T(16,128)(2,1)}', space=vmem, size = 0x13000, scoped, tag = 'scratch operand']
  #allocation3 [shape = 'bf16[8,16,20]{2,1,0:T(16,128)(2,1)}', space=vmem, size = 0x8000, scoped, tag = 'scratch operand']
  %s0 = inlined_call_operand.vmem [shape: bf16[2,36,16,22], index: 0, kind: input, shape index: {}]
  %s1 = inlined_call_operand.vmem [shape: bf16[48,48], index: 1, kind: input, shape index: {}]
  %s2 = inlined_call_operand.vmem [shape: bf16[80,80], index: 2, kind: input, shape index: {}]
  %s3 = inlined_call_operand.vmem [shape: bf16[112,112], index: 3, kind: input, shape index: {}]
  %s4 = inlined_call_operand.vmem [shape: f32[16,3], index: 4, kind: input, shape index: {}]
  %s5 = inlined_call_operand.vmem [shape: f32[2,16,28], index: 5, kind: output, shape index: {}]
  %s6 = sld [smem:[#allocation0]]
  $region53: #{_fused_forward.1} parent=0
    _
  %s8 = ssub.s32 1, %s6
  %s9 = scalar_select 0, %s8, %s6
  loop: start=0, step=1, limit=4
  $region2: #{_fused_forward.1} parent=0 // loop_pre_header
    _
  $region3: #{_fused_forward.1} parent=0 // loop_header
    %s11 = sphi 0, %s15
    %p12 = scmp.ge.s32.totalorder %s11, 4
    %s21 = sphi 0, %s23
    %s24 = sphi 0, %s21
    %s25 = sphi 0, %s24
    %s41 = sphi 0, %s25
    %s45 = sphi 0, %s45
    %s47 = sphi 0, %s45
    %s48 = sphi 0, %s47
    %s62 = sphi 0, %s48
    %s66 = sphi 0, %s66
    %s68 = sphi 0, %s66
    %s69 = sphi 0, %s68
    %s83 = sphi 0, %s69
    %s87 = sphi 0, %s87
    %s89 = sphi 0, %s87
    %s90 = sphi 0, %s89
    %s104 = sphi 0, %s90
    %s108 = sphi 0, %s108
    %s110 = sphi 0, %s108
    %s111 = sphi 0, %s110
    %s125 = sphi 0, %s111
    %s131 = sphi 0, %s133
    %s134 = sphi 0, %s131
    %s135 = sphi 0, %s134
    %s151 = sphi 0, %s135
  $region4: #{_fused_forward.1} parent=0 // loop_header_branch
    %14 = sbr.rel (%p12) target = $region8
  $region5: #{_fused_forward.1} parent=0 // loop_body
    %s16 = ssub.s32 %s11, 1
    %s17 = ssub.s32 %s11, 2
    %s18 = sadd.s32 %s11, 1
    %s19 = ssub.s32 %s11, %s18
    %p20 = scmp.eq.s32.totalorder %s19, 0
    %s22 = sadd.s32 %s21, 1
    %s23 = scalar_select %p20, %s21, %s22
    %p26 = pneg %p20
    %p27 = scmp.eq.s32.totalorder %s11, 1
    %p28 = por %p26, %p27
    %p29 = scmp.ne.s32.totalorder %s21, %s24
    %p30 = scmp.eq.s32.totalorder %s11, 0
    %p31 = por %p29, %p30
    %p32 = scmp.ne.s32.totalorder %s21, %s24
    %p33 = scmp.eq.s32.totalorder %s16, 1
    %p34 = por %p32, %p33
    %p35 = scmp.ne.s32.totalorder %s24, %s25
    %p36 = scmp.eq.s32.totalorder %s16, 0
    %p37 = por %p35, %p36
    %p38 = scmp.ne.s32.totalorder %s24, %s25
    %p39 = scmp.eq.s32.totalorder %s17, 1
    %p40 = por %p38, %p39
    %p42 = scmp.ne.s32.totalorder %s25, %s41
    %p43 = scmp.eq.s32.totalorder %s17, 0
    %p44 = por %p42, %p43
    %s46 = sadd.s32 %s45, 1
    %p49 = scmp.eq.s32.totalorder %s11, 1
    %p50 = scmp.ne.s32.totalorder %s45, %s47
    %p51 = scmp.eq.s32.totalorder %s11, 0
    %p52 = por %p50, %p51
    %p53 = scmp.ne.s32.totalorder %s45, %s47
    %p54 = scmp.eq.s32.totalorder %s16, 1
    %p55 = por %p53, %p54
    %p56 = scmp.ne.s32.totalorder %s47, %s48
    %p57 = scmp.eq.s32.totalorder %s16, 0
    %p58 = por %p56, %p57
    %p59 = scmp.ne.s32.totalorder %s47, %s48
    %p60 = scmp.eq.s32.totalorder %s17, 1
    %p61 = por %p59, %p60
    %p63 = scmp.ne.s32.totalorder %s48, %s62
    %p64 = scmp.eq.s32.totalorder %s17, 0
    %p65 = por %p63, %p64
    %s67 = sadd.s32 %s66, 1
    %p70 = scmp.eq.s32.totalorder %s11, 1
    %p71 = scmp.ne.s32.totalorder %s66, %s68
    %p72 = scmp.eq.s32.totalorder %s11, 0
    %p73 = por %p71, %p72
    %p74 = scmp.ne.s32.totalorder %s66, %s68
    %p75 = scmp.eq.s32.totalorder %s16, 1
    %p76 = por %p74, %p75
    %p77 = scmp.ne.s32.totalorder %s68, %s69
    %p78 = scmp.eq.s32.totalorder %s16, 0
    %p79 = por %p77, %p78
    %p80 = scmp.ne.s32.totalorder %s68, %s69
    %p81 = scmp.eq.s32.totalorder %s17, 1
    %p82 = por %p80, %p81
    %p84 = scmp.ne.s32.totalorder %s69, %s83
    %p85 = scmp.eq.s32.totalorder %s17, 0
    %p86 = por %p84, %p85
    %s88 = sadd.s32 %s87, 1
    %p91 = scmp.eq.s32.totalorder %s11, 1
    %p92 = scmp.ne.s32.totalorder %s87, %s89
    %p93 = scmp.eq.s32.totalorder %s11, 0
    %p94 = por %p92, %p93
    %p95 = scmp.ne.s32.totalorder %s87, %s89
    %p96 = scmp.eq.s32.totalorder %s16, 1
    %p97 = por %p95, %p96
    %p98 = scmp.ne.s32.totalorder %s89, %s90
    %p99 = scmp.eq.s32.totalorder %s16, 0
    %p100 = por %p98, %p99
    %p101 = scmp.ne.s32.totalorder %s89, %s90
    %p102 = scmp.eq.s32.totalorder %s17, 1
    %p103 = por %p101, %p102
    %p105 = scmp.ne.s32.totalorder %s90, %s104
    %p106 = scmp.eq.s32.totalorder %s17, 0
    %p107 = por %p105, %p106
    %s109 = sadd.s32 %s108, 1
    %p112 = scmp.eq.s32.totalorder %s11, 1
    %p113 = scmp.ne.s32.totalorder %s108, %s110
    %p114 = scmp.eq.s32.totalorder %s11, 0
    %p115 = por %p113, %p114
    %p116 = scmp.ne.s32.totalorder %s108, %s110
    %p117 = scmp.eq.s32.totalorder %s16, 1
    %p118 = por %p116, %p117
    %p119 = scmp.ne.s32.totalorder %s110, %s111
    %p120 = scmp.eq.s32.totalorder %s16, 0
    %p121 = por %p119, %p120
    %p122 = scmp.ne.s32.totalorder %s110, %s111
    %p123 = scmp.eq.s32.totalorder %s17, 1
    %p124 = por %p122, %p123
    %p126 = scmp.ne.s32.totalorder %s111, %s125
    %p127 = scmp.eq.s32.totalorder %s17, 0
    %p128 = por %p126, %p127
    %s129 = ssub.s32 %s11, %s18
    %p130 = scmp.eq.s32.totalorder %s129, 0
    %s132 = sadd.s32 %s131, 1
    %s133 = scalar_select %p130, %s131, %s132
    %p136 = pneg %p130
    %p137 = scmp.eq.s32.totalorder %s11, 1
    %p138 = por %p136, %p137
    %p139 = scmp.ne.s32.totalorder %s131, %s134
    %p140 = scmp.eq.s32.totalorder %s11, 0
    %p141 = por %p139, %p140
    %p142 = scmp.ne.s32.totalorder %s131, %s134
    %p143 = scmp.eq.s32.totalorder %s16, 1
    %p144 = por %p142, %p143
    %p145 = scmp.ne.s32.totalorder %s134, %s135
    %p146 = scmp.eq.s32.totalorder %s16, 0
    %p147 = por %p145, %p146
    %p148 = scmp.ne.s32.totalorder %s134, %s135
    %p149 = scmp.eq.s32.totalorder %s17, 1
    %p150 = por %p148, %p149
    %p152 = scmp.ne.s32.totalorder %s135, %s151
    %p153 = scmp.eq.s32.totalorder %s17, 0
    %p154 = por %p152, %p153
    %p155 = scmp.le.s32.totalorder 1, %s11
    %p156 = scmp.lt.s32.totalorder %s11, 3
    %p157 = pnand %p155, %p156
    %p158 = pneg %p157
    // Predicated region
    $region9: #{_fused_forward.1} parent=5 // pred_check
      _
    $region10: #{_fused_forward.1} parent=5 // pred_check_branch
      %160 = sbr.rel (%p157) target = $region12
    $region11: #{_fused_forward.1} parent=5 // pred_region
      %s161 = ssub.s32 %s11, 1
      // Predicated region
      $region13: #{_fused_forward.1} parent=11 // pred_check
        %p162 = pneg %p58
      $region14: #{_fused_forward.1} parent=11 // pred_check_branch
        %164 = sbr.rel (%p162) target = $region16
      $region15: #{_fused_forward.1} parent=11 // pred_region
        _
      $region16: #{_fused_forward.1} parent=11 // pred_fallthru
        _
      // Predicated region
      $region17: #{_fused_forward.1} parent=11 // pred_check
        %p165 = pneg %p79
      $region18: #{_fused_forward.1} parent=11 // pred_check_branch
        %167 = sbr.rel (%p165) target = $region20
      $region19: #{_fused_forward.1} parent=11 // pred_region
        _
      $region20: #{_fused_forward.1} parent=11 // pred_fallthru
        _
      // Predicated region
      $region21: #{_fused_forward.1} parent=11 // pred_check
        %p168 = pneg %p100
      $region22: #{_fused_forward.1} parent=11 // pred_check_branch
        %170 = sbr.rel (%p168) target = $region24
      $region23: #{_fused_forward.1} parent=11 // pred_region
        _
      $region24: #{_fused_forward.1} parent=11 // pred_fallthru
        _
      // Predicated region
      $region25: #{_fused_forward.1} parent=11 // pred_check
        %p171 = pneg %p121
      $region26: #{_fused_forward.1} parent=11 // pred_check_branch
        %173 = sbr.rel (%p171) target = $region28
      $region27: #{_fused_forward.1} parent=11 // pred_region
        _
      $region28: #{_fused_forward.1} parent=11 // pred_fallthru
        _
    $region12: #{_fused_forward.1} parent=5 // pred_fallthru
      _
    %p174 = scmp.lt.s32.totalorder %s11, 2
    // Predicated region
    $region29: #{_fused_forward.1} parent=5 // pred_check
      %p175 = pneg %p174
    $region30: #{_fused_forward.1} parent=5 // pred_check_branch
      %177 = sbr.rel (%p175) target = $region32
    $region31: #{_fused_forward.1} parent=5 // pred_region
      // Predicated region
      $region33: #{_fused_forward.1} parent=31 // pred_check
        %p178 = pneg %p31
      $region34: #{_fused_forward.1} parent=31 // pred_check_branch
        %180 = sbr.rel (%p178) target = $region36
      $region35: #{_fused_forward.1} parent=31 // pred_region
        %p181 = scmp.lt.s32.totalorder %s11, 1
        %s182 = scalar_select %p181, %s11, 1
        %s183 = smul.addr %s182, 72
        %s184 = smul.addr %s183, 4
        %s185 = scalar_lea.vmem %s0, %s184
      $region36: #{_fused_forward.1} parent=31 // pred_fallthru
        _
    $region32: #{_fused_forward.1} parent=5 // pred_fallthru
      _
    %p186 = scmp.le.s32.totalorder 1, %s11
    %p187 = scmp.lt.s32.totalorder %s11, 3
    %p188 = pnand %p186, %p187
    %p189 = pneg %p188
    // Predicated region
    $region37: #{_fused_forward.1} parent=5 // pred_check
      _
    $region38: #{_fused_forward.1} parent=5 // pred_check_branch
      %191 = sbr.rel (%p188) target = $region40
    $region39: #{_fused_forward.1} parent=5 // pred_region
      %s192 = ssub.s32 %s11, 1
      %p193 = scmp.lt.s32.totalorder %s16, 1
      %s194 = scalar_select %p193, %s16, 1
      %s195 = smul.addr %s194, 72
      %s196 = smul.addr %s195, 4
      %s197 = scalar_lea.vmem %s0, %s196
      %p198 = pneg %p37
      %p199 = pneg %p34
      %p200 = pneg %p58
      %p201 = pneg %p55
      %p202 = pneg %p79
      %p203 = pneg %p76
      %p204 = pneg %p100
      %p205 = pneg %p97
      %p206 = pneg %p121
      %p207 = pneg %p118
      %p208 = pneg %p147
      %p209 = pneg %p144
      %p210 = scmp.lt.s32.totalorder %s16, 1
      %s211 = scalar_select %p210, %s16, 1
      %s212 = smul.addr %s211, 2
      %s213 = smul.addr %s212, 8
      %s214 = scalar_lea.vmem %s5, %s213
      %p215 = scmp.lt.s32.totalorder %s16, 1
      %s216 = scalar_select %p215, %s16, 1
      %s217 = smul.addr %s216, 72
      %s218 = smul.addr %s217, 4
      %s219 = scalar_lea.vmem %s0, %s218
      %p220 = scmp.lt.s32.totalorder %s16, 1
      %s221 = scalar_select %p220, %s16, 1
      %s222 = smul.addr %s221, 2
      %s223 = smul.addr %s222, 8
      %s224 = scalar_lea.vmem %s5, %s223
      %v226 = vld [vmem:[%s4] sm:$0xff]
      %v227 = vld [vmem:[%s4 + $0x8] sm:$0xff]
      %229 = vset.pattern.permute.xlu0 0
      %230 = vperm.xlu0 %229, %v226
      %v231 = vpop.permute.xlu0 %230
      %234 = vset.pattern.permute.xlu0 0
      %235 = vperm.xlu0 %234, %v227
      %v236 = vpop.permute.xlu0 %235
      %238 = vset.pattern.permute.xlu0 1
      %239 = vperm.xlu0 %238, %v226
      %v240 = vpop.permute.xlu0 %239
      %242 = vset.pattern.permute.xlu0 1
      %243 = vperm.xlu0 %242, %v227
      %v244 = vpop.permute.xlu0 %243
      %246 = vset.pattern.permute.xlu0 2
      %247 = vperm.xlu0 %246, %v226
      %v248 = vpop.permute.xlu0 %247
      %250 = vset.pattern.permute.xlu0 2
      %251 = vperm.xlu0 %250, %v227
      %v252 = vpop.permute.xlu0 %251
      %vm254 = vcmask 195584
      %255 = vst.msk [vmem:[#allocation2] sm:$0xff] %vm254, 0
      %s256 = scalar_lea.vmem [#allocation2], 144
      %257 = vst.msk [vmem:[%s256] sm:$0xff] %vm254, 0
      %vm258 = vcmask 15360
      %259 = vst.msk [vmem:[#allocation2] sm:$0xff] %vm258, 0
      %260 = vst.msk [vmem:[#allocation2 + $0x8] sm:$0xff] %vm258, 0
      %261 = vst.msk [vmem:[#allocation2 + $0x10] sm:$0xff] %vm258, 0
      %262 = vst.msk [vmem:[#allocation2 + $0x18] sm:$0xff] %vm258, 0
      %263 = vst.msk [vmem:[#allocation2 + $0x20] sm:$0xff] %vm258, 0
      %264 = vst.msk [vmem:[#allocation2 + $0x28] sm:$0xff] %vm258, 0
      %265 = vst.msk [vmem:[#allocation2 + $0x30] sm:$0xff] %vm258, 0
      %266 = vst.msk [vmem:[#allocation2 + $0x38] sm:$0xff] %vm258, 0
      %267 = vst.msk [vmem:[#allocation2 + $0x40] sm:$0xff] %vm258, 0
      %268 = vst.msk [vmem:[#allocation2 + $0x48] sm:$0xff] %vm258, 0
      %269 = vst.msk [vmem:[#allocation2 + $0x50] sm:$0xff] %vm258, 0
      %270 = vst.msk [vmem:[#allocation2 + $0x58] sm:$0xff] %vm258, 0
      %271 = vst.msk [vmem:[#allocation2 + $0x60] sm:$0xff] %vm258, 0
      %272 = vst.msk [vmem:[#allocation2 + $0x68] sm:$0xff] %vm258, 0
      %273 = vst.msk [vmem:[#allocation2 + $0x70] sm:$0xff] %vm258, 0
      %274 = vst.msk [vmem:[#allocation2 + $0x78] sm:$0xff] %vm258, 0
      %275 = vst.msk [vmem:[#allocation2 + $0x80] sm:$0xff] %vm258, 0
      %276 = vst.msk [vmem:[#allocation2 + $0x88] sm:$0xff] %vm258, 0
      %277 = vst.msk [vmem:[#allocation2 + $0x90] sm:$0xff] %vm258, 0
      %vm278 = vcmask 195760
      %279 = vst.msk [vmem:[#allocation2] sm:$0xff] %vm278, 0
      %280 = vst.msk [vmem:[#allocation2 + $0x8] sm:$0xff] %vm278, 0
      %281 = vst.msk [vmem:[#allocation2 + $0x10] sm:$0xff] %vm278, 0
      %282 = vst.msk [vmem:[#allocation2 + $0x18] sm:$0xff] %vm278, 0
      %283 = vst.msk [vmem:[#allocation2 + $0x20] sm:$0xff] %vm278, 0
      %284 = vst.msk [vmem:[#allocation2 + $0x28] sm:$0xff] %vm278, 0
      %285 = vst.msk [vmem:[#allocation2 + $0x30] sm:$0xff] %vm278, 0
      %286 = vst.msk [vmem:[#allocation2 + $0x38] sm:$0xff] %vm278, 0
      %287 = vst.msk [vmem:[#allocation2 + $0x40] sm:$0xff] %vm278, 0
      %288 = vst.msk [vmem:[#allocation2 + $0x48] sm:$0xff] %vm278, 0
      %289 = vst.msk [vmem:[#allocation2 + $0x50] sm:$0xff] %vm278, 0
      %290 = vst.msk [vmem:[#allocation2 + $0x58] sm:$0xff] %vm278, 0
      %291 = vst.msk [vmem:[#allocation2 + $0x60] sm:$0xff] %vm278, 0
      %292 = vst.msk [vmem:[#allocation2 + $0x68] sm:$0xff] %vm278, 0
      %293 = vst.msk [vmem:[#allocation2 + $0x70] sm:$0xff] %vm278, 0
      %294 = vst.msk [vmem:[#allocation2 + $0x78] sm:$0xff] %vm278, 0
      %295 = vst.msk [vmem:[#allocation2 + $0x80] sm:$0xff] %vm278, 0
      %296 = vst.msk [vmem:[#allocation2 + $0x88] sm:$0xff] %vm278, 0
      %297 = vst.msk [vmem:[#allocation2 + $0x90] sm:$0xff] %vm278, 0
      %v298 = vld [vmem:[%s219] sm:$0xf]
      %v299 = vld [vmem:[%s219 + $0x4] sm:$0xf]
      %v300 = vld [vmem:[%s219 + $0x8] sm:$0xf]
      %v301 = vld [vmem:[%s219 + $0xc] sm:$0xf]
      %v302 = vld [vmem:[%s219 + $0x10] sm:$0xf]
      %v303 = vld [vmem:[%s219 + $0x14] sm:$0xf]
      %v304 = vld [vmem:[%s1] sm:$0xf]
      %v305 = vld [vmem:[%s1 + $0x4] sm:$0xf]
      %v306 = vld [vmem:[%s1 + $0x8] sm:$0xf]
      %v307 = vld [vmem:[%s1 + $0xc] sm:$0xf]
      %v308 = vld [vmem:[%s1 + $0x10] sm:$0xf]
      %v309 = vld [vmem:[%s1 + $0x14] sm:$0xf]
      %v316 = vunpack.c.l.b16 %v304
      %v317 = vunpack.c.l.b16 %v305
      %v318 = vunpack.c.l.b16 %v306
      %v319 = vunpack.c.l.b16 %v307
      %v320 = vunpack.c.l.b16 %v308
      %v321 = vunpack.c.l.b16 %v309
      %v322 = vpack.c.b16 %v317, %v316
      %v323 = vpack.c.b16 %v319, %v318
      %v324 = vpack.c.b16 %v321, %v320
      %v331 = vunpack.c.l.b16 %v298
      %v332 = vunpack.c.l.b16 %v299
      %v333 = vunpack.c.l.b16 %v300
      %v334 = vunpack.c.l.b16 %v301
      %v335 = vunpack.c.l.b16 %v302
      %v336 = vunpack.c.l.b16 %v303
      %v337 = vpack.c.b16 %v332, %v331
      %v338 = vpack.c.b16 %v334, %v333
      %v339 = vpack.c.b16 %v336, %v335
      %vm343 = vcmask 392192
      %v345 = vsel %vm343, %v322, 0
      %v348 = vsel %vm343, %v323, 0
      %v351 = vsel %vm343, %v324, 0
      %353 = vmatprep.subr.bf16.mxu0 0
      %354 = vmatpush1.bf16.msra.mxu0 %v337
      %355 = vmatprep.subr.bf16.mxu0 0
      %356 = vmatpush1.bf16.msra.mxu0 %v338
      %357 = vmatprep.subr.bf16.mxu0 0
      %358 = vmatpush1.bf16.msra.mxu0 %v339
      %359 = vmatprep.subr.bf16.mxu0 0
      %360 = vmatpush1.bf16.msra.mxu0 0
      %361 = vmatprep.subr.bf16.mxu0 0
      %362 = vmatpush1.bf16.msra.mxu0 0
      %363 = vmatprep.subr.bf16.mxu0 0
      %364 = vmatpush1.bf16.msra.mxu0 0
      %365 = vmatprep.subr.bf16.mxu0 0
      %366 = vmatpush1.bf16.msra.mxu0 0
      %367 = vmatprep.subr.bf16.mxu0 0
      %368 = vmatpush1.bf16.msra.mxu0 0
      %369 = vmatprep.subr.bf16.mxu0 0
      %370 = vmatpush1.bf16.msra.mxu0 0
      %371 = vmatprep.subr.bf16.mxu0 0
      %372 = vmatpush1.bf16.msra.mxu0 0
      %373 = vmatprep.subr.bf16.mxu0 0
      %374 = vmatpush1.bf16.msra.mxu0 0
      %375 = vmatprep.subr.bf16.mxu0 0
      %376 = vmatpush1.bf16.msra.mxu0 0
      %377 = vmatprep.subr.bf16.mxu0 0
      %378 = vmatpush1.bf16.msra.mxu0 0
      %379 = vmatprep.subr.bf16.mxu0 0
      %380 = vmatpush1.bf16.msra.mxu0 0
      %381 = vmatprep.subr.bf16.mxu0 0
      %382 = vmatpush1.bf16.msra.mxu0 0
      %383 = vmatprep.subr.bf16.mxu0 0
      %384 = vmatpush1.bf16.msra.mxu0 0
      %385 = vmatprep.mubr.bf16.mxu0 0
      %386 = vmatmul.mubr.bf16.gmra.mrb[0].mxu0 %v345
      %v387 = vpop.f32.mrb[0].mxu0
      %v388 = vadd.f32 0.0, %v387
      %v389 = vpop.f32.mrb[0].mxu0
      %v390 = vpop.f32.mrb[0].mxu0
      %v391 = vadd.f32 0.0, %v390
      %v392 = vpop.f32.mrb[0].mxu0
      %393 = vmatprep.mubr.bf16.mxu0 0
      %394 = vmatmul.mubr.bf16.gmra.mrb[0].mxu0 %v348
      %v395 = vpop.f32.mrb[0].mxu0
      %v396 = vadd.f32 0.0, %v395
      %v397 = vpop.f32.mrb[0].mxu0
      %v398 = vpop.f32.mrb[0].mxu0
      %v399 = vadd.f32 0.0, %v398
      %v400 = vpop.f32.mrb[0].mxu0
      %401 = vmatprep.mubr.bf16.mxu0 0
      %402 = vmatmul.mubr.bf16.gmra.mrb[0].mxu0 %v351
      %v403 = vpop.f32.mrb[0].mxu0
      %v404 = vadd.f32 0.0, %v403
      %v405 = vpop.f32.mrb[0].mxu0
      %v406 = vpop.f32.mrb[0].mxu0
      %v407 = vadd.f32 0.0, %v406
      %v408 = vpop.f32.mrb[0].mxu0
      %409 = vdwg.mxu0
      %v410 = vadd.f32 %v231, %v388
      %v411 = vadd.f32 %v236, %v391
      %414 = vrot.lane.b32.xlu0 %v396, 127
      %v415 = vpop.permute.xlu0 %414
      %416 = vrot.lane.b32.xlu0 %v399, 127
      %v417 = vpop.permute.xlu0 %416
      %v420 = vadd.f32 %v410, %v415
      %v421 = vadd.f32 %v411, %v417
      %424 = vrot.lane.b32.xlu0 %v404, 126
      %v425 = vpop.permute.xlu0 %424
      %426 = vrot.lane.b32.xlu0 %v407, 126
      %v427 = vpop.permute.xlu0 %426
      %v430 = vadd.f32 %v420, %v425
      %v431 = vadd.f32 %v421, %v427
      %v432 = vxor.u32 %v430, 2147483648
      %v433 = vxor.u32 %v431, 2147483648
      %v434 = vmul.f32 %v432, 1.442695
      %v435 = vpow.pop %v434
      %v436 = vmul.f32 %v433, 1.442695
      %v437 = vpow.pop %v436
      %v438 = vadd.f32 %v435, 1.0
      %v439 = vadd.f32 %v437, 1.0
      %v440 = vrcp.pop %v438
      %v441 = vmul.f32 1.0, %v440
      %v442 = vrcp.pop %v439
      %v443 = vmul.f32 1.0, %v442
      %v444 = vpack.c.bf16 %v443, %v441
      %446 = vrot.lane.b32.xlu0 %v444, 2
      %v447 = vpop.permute.xlu0 %446
      %s449 = scalar_lea.vmem [#allocation2], 8
      %vm450 = vcmask 179216
      %451 = vst.msk [vmem:[%s449] sm:$0xff] %vm450, %v447
      %s452 = scalar_lea.vmem %s219, 16
      %v453 = vld [vmem:[%s452] sm:$0xf]
      %v454 = vld [vmem:[%s452 + $0x4] sm:$0xf]
      %v455 = vld [vmem:[%s452 + $0x8] sm:$0xf]
      %v456 = vld [vmem:[%s452 + $0xc] sm:$0xf]
      %v457 = vld [vmem:[%s452 + $0x10] sm:$0xf]
      %v458 = vld [vmem:[%s452 + $0x14] sm:$0xf]
      %v459 = vld [vmem:[%s1] sm:$0xf]
      %v460 = vld [vmem:[%s1 + $0x4] sm:$0xf]
      %v461 = vld [vmem:[%s1 + $0x8] sm:$0xf]
      %v462 = vld [vmem:[%s1 + $0xc] sm:$0xf]
      %v463 = vld [vmem:[%s1 + $0x10] sm:$0xf]
      %v464 = vld [vmem:[%s1 + $0x14] sm:$0xf]
      %v471 = vunpack.c.l.b16 %v459
      %v472 = vunpack.c.l.b16 %v460
      %v473 = vunpack.c.l.b16 %v461
      %v474 = vunpack.c.l.b16 %v462
      %v475 = vunpack.c.l.b16 %v463
      %v476 = vunpack.c.l.b16 %v464
      %v477 = vpack.c.b16 %v472, %v471
      %v478 = vpack.c.b16 %v474, %v473
      %v479 = vpack.c.b16 %v476, %v475
      %v486 = vunpack.c.l.b16 %v453
      %v487 = vunpack.c.l.b16 %v454
      %v488 = vunpack.c.l.b16 %v455
      %v489 = vunpack.c.l.b16 %v456
      %v490 = vunpack.c.l.b16 %v457
      %v491 = vunpack.c.l.b16 %v458
      %v492 = vpack.c.b16 %v487, %v486
      %v493 = vpack.c.b16 %v489, %v488
      %v494 = vpack.c.b16 %v491, %v490
      %v499 = vsel %vm343, %v477, 0
      %v502 = vsel %vm343, %v478, 0
      %v505 = vsel %vm343, %v479, 0
      %507 = vmatprep.subr.bf16.mxu0 0
      %508 = vmatpush1.bf16.msra.mxu0 %v492
      %509 = vmatprep.subr.bf16.mxu0 0
      %510 = vmatpush1.bf16.msra.mxu0 %v493
      %511 = vmatprep.subr.bf16.mxu0 0
      %512 = vmatpush1.bf16.msra.mxu0 %v494
      %513 = vmatprep.subr.bf16.mxu0 0
      %514 = vmatpush1.bf16.msra.mxu0 0
      %515 = vmatprep.subr.bf16.mxu0 0
      %516 = vmatpush1.bf16.msra.mxu0 0
      %517 = vmatprep.subr.bf16.mxu0 0
      %518 = vmatpush1.bf16.msra.mxu0 0
      %519 = vmatprep.subr.bf16.mxu0 0
      %520 = vmatpush1.bf16.msra.mxu0 0
      %521 = vmatprep.subr.bf16.mxu0 0
      %522 = vmatpush1.bf16.msra.mxu0 0
      %523 = vmatprep.subr.bf16.mxu0 0
      %524 = vmatpush1.bf16.msra.mxu0 0
      %525 = vmatprep.subr.bf16.mxu0 0
      %526 = vmatpush1.bf16.msra.mxu0 0
      %527 = vmatprep.subr.bf16.mxu0 0
      %528 = vmatpush1.bf16.msra.mxu0 0
      %529 = vmatprep.subr.bf16.mxu0 0
      %530 = vmatpush1.bf16.msra.mxu0 0
      %531 = vmatprep.subr.bf16.mxu0 0
      %532 = vmatpush1.bf16.msra.mxu0 0
      %533 = vmatprep.subr.bf16.mxu0 0
      %534 = vmatpush1.bf16.msra.mxu0 0
      %535 = vmatprep.subr.bf16.mxu0 0
      %536 = vmatpush1.bf16.msra.mxu0 0
      %537 = vmatprep.subr.bf16.mxu0 0
      %538 = vmatpush1.bf16.msra.mxu0 0
      %539 = vmatprep.mubr.bf16.mxu0 0
      %540 = vmatmul.mubr.bf16.gmra.mrb[0].mxu0 %v499
      %v541 = vpop.f32.mrb[0].mxu0
      %v542 = vadd.f32 0.0, %v541
      %v543 = vpop.f32.mrb[0].mxu0
      %v544 = vpop.f32.mrb[0].mxu0
      %v545 = vadd.f32 0.0, %v544
      %v546 = vpop.f32.mrb[0].mxu0
      %547 = vmatprep.mubr.bf16.mxu0 0
      %548 = vmatmul.mubr.bf16.gmra.mrb[0].mxu0 %v502
      %v549 = vpop.f32.mrb[0].mxu0
      %v550 = vadd.f32 0.0, %v549
      %v551 = vpop.f32.mrb[0].mxu0
      %v552 = vpop.f32.mrb[0].mxu0
      %v553 = vadd.f32 0.0, %v552
      %v554 = vpop.f32.mrb[0].mxu0
      %555 = vmatprep.mubr.bf16.mxu0 0
      %556 = vmatmul.mubr.bf16.gmra.mrb[0].mxu0 %v505
      %v557 = vpop.f32.mrb[0].mxu0
      %v558 = vadd.f32 0.0, %v557
      %v559 = vpop.f32.mrb[0].mxu0
      %v560 = vpop.f32.mrb[0].mxu0
      %v561 = vadd.f32 0.0, %v560
      %v562 = vpop.f32.mrb[0].mxu0
      %563 = vdwg.mxu0
      %v564 = vadd.f32 %v231, %v542
      %v565 = vadd.f32 %v236, %v545
      %568 = vrot.lane.b32.xlu0 %v550, 127
      %v569 = vpop.permute.xlu0 %568
      %570 = vrot.lane.b32.xlu0 %v553, 127
      %v571 = vpop.permute.xlu0 %570
      %v574 = vadd.f32 %v564, %v569
      %v575 = vadd.f32 %v565, %v571
      %578 = vrot.lane.b32.xlu0 %v558, 126
      %v579 = vpop.permute.xlu0 %578
      %580 = vrot.lane.b32.xlu0 %v561, 126
      %v581 = vpop.permute.xlu0 %580
      %v584 = vadd.f32 %v574, %v579
      %v585 = vadd.f32 %v575, %v581
      %v586 = vxor.u32 %v584, 2147483648
      %v587 = vxor.u32 %v585, 2147483648
      %v588 = vmul.f32 %v586, 1.442695
      %v589 = vpow.pop %v588
      %v590 = vmul.f32 %v587, 1.442695
      %v591 = vpow.pop %v590
      %v592 = vadd.f32 %v589, 1.0
      %v593 = vadd.f32 %v591, 1.0
      %v594 = vrcp.pop %v592
      %v595 = vmul.f32 1.0, %v594
      %v596 = vrcp.pop %v593
      %v597 = vmul.f32 1.0, %v596
      %v598 = vpack.c.bf16 %v597, %v595
      %600 = vrot.lane.b32.xlu0 %v598, 2
      %v601 = vpop.permute.xlu0 %600
      %s603 = scalar_lea.vmem [#allocation2], 16
      %604 = vst.msk [vmem:[%s603] sm:$0xff] %vm450, %v601
      %s605 = scalar_lea.vmem %s219, 32
      %v606 = vld [vmem:[%s605] sm:$0xf]
      %v607 = vld [vmem:[%s605 + $0x4] sm:$0xf]
      %v608 = vld [vmem:[%s605 + $0x8] sm:$0xf]
      %v609 = vld [vmem:[%s605 + $0xc] sm:$0xf]
      %v610 = vld [vmem:[%s605 + $0x10] sm:$0xf]
      %v611 = vld [vmem:[%s605 + $0x14] sm:$0xf]
      %v612 = vld [vmem:[%s1] sm:$0xf]
      %v613 = vld [vmem:[%s1 + $0x4] sm:$0xf]
      %v614 = vld [vmem:[%s1 + $0x8] sm:$0xf]
      %v615 = vld [vmem:[%s1 + $0xc] sm:$0xf]
      %v616 = vld [vmem:[%s1 + $0x10] sm:$0xf]
      %v617 = vld [vmem:[%s1 + $0x14] sm:$0xf]
      %v624 = vunpack.c.l.b16 %v612
      %v625 = vunpack.c.l.b16 %v613
      %v626 = vunpack.c.l.b16 %v614
      %v627 = vunpack.c.l.b16 %v615
      %v628 = vunpack.c.l.b16 %v616
      %v629 = vunpack.c.l.b16 %v617
      %v630 = vpack.c.b16 %v625, %v624
      %v631 = vpack.c.b16 %v627, %v626
      %v632 = vpack.c.b16 %v629, %v628
      %v639 = vunpack.c.l.b16 %v606
      %v640 = vunpack.c.l.b16 %v607
      %v641 = vunpack.c.l.b16 %v608
      %v642 = vunpack.c.l.b16 %v609
      %v643 = vunpack.c.l.b16 %v610
      %v644 = vunpack.c.l.b16 %v611
      %v645 = vpack.c.b16 %v640, %v639
      %v646 = vpack.c.b16 %v642, %v641
      %v647 = vpack.c.b16 %v644, %v643
      %v652 = vsel %vm343, %v630, 0
      %v655 = vsel %vm343, %v631, 0
      %v658 = vsel %vm343, %v632, 0
      %660 = vmatprep.subr.bf16.mxu0 0
      %661 = vmatpush1.bf16.msra.mxu0 %v645
      %662 = vmatprep.subr.bf16.mxu0 0
      %663 = vmatpush1.bf16.msra.mxu0 %v646
      %664 = vmatprep.subr.bf16.mxu0 0
      %665 = vmatpush1.bf16.msra.mxu0 %v647
      %666 = vmatprep.subr.bf16.mxu0 0
      %667 = vmatpush1.bf16.msra.mxu0 0
      %668 = vmatprep.subr.bf16.mxu0 0
      %669 = vmatpush1.bf16.msra.mxu0 0
      %670 = vmatprep.subr.bf16.mxu0 0
      %671 = vmatpush1.bf16.msra.mxu0 0
      %672 = vmatprep.subr.bf16.mxu0 0
      %673 = vmatpush1.bf16.msra.mxu0 0
      %674 = vmatprep.subr.bf16.mxu0 0
      %675 = vmatpush1.bf16.msra.mxu0 0
      %676 = vmatprep.subr.bf16.mxu0 0
      %677 = vmatpush1.bf16.msra.mxu0 0
      %678 = vmatprep.subr.bf16.mxu0 0
      %679 = vmatpush1.bf16.msra.mxu0 0
      %680 = vmatprep.subr.bf16.mxu0 0
      %681 = vmatpush1.bf16.msra.mxu0 0
      %682 = vmatprep.subr.bf16.mxu0 0
      %683 = vmatpush1.bf16.msra.mxu0 0
      %684 = vmatprep.subr.bf16.mxu0 0
      %685 = vmatpush1.bf16.msra.mxu0 0
      %686 = vmatprep.subr.bf16.mxu0 0
      %687 = vmatpush1.bf16.msra.mxu0 0
      %688 = vmatprep.subr.bf16.mxu0 0
      %689 = vmatpush1.bf16.msra.mxu0 0
      %690 = vmatprep.subr.bf16.mxu0 0
      %691 = vmatpush1.bf16.msra.mxu0 0
      %692 = vmatprep.mubr.bf16.mxu0 0
      %693 = vmatmul.mubr.bf16.gmra.mrb[0].mxu0 %v652
      %v694 = vpop.f32.mrb[0].mxu0
      %v695 = vadd.f32 0.0, %v694
      %v696 = vpop.f32.mrb[0].mxu0
      %v697 = vpop.f32.mrb[0].mxu0
      %v698 = vadd.f32 0.0, %v697
      %v699 = vpop.f32.mrb[0].mxu0
      %700 = vmatprep.mubr.bf16.mxu0 0
      %701 = vmatmul.mubr.bf16.gmra.mrb[0].mxu0 %v655
      %v702 = vpop.f32.mrb[0].mxu0
      %v703 = vadd.f32 0.0, %v702
      %v704 = vpop.f32.mrb[0].mxu0
      %v705 = vpop.f32.mrb[0].mxu0
      %v706 = vadd.f32 0.0, %v705
      %v707 = vpop.f32.mrb[0].mxu0
      %708 = vmatprep.mubr.bf16.mxu0 0
      %709 = vmatmul.mubr.bf16.gmra.mrb[0].mxu0 %v658
      %v710 = vpop.f32.mrb[0].mxu0
      %v711 = vadd.f32 0.0, %v710
      %v712 = vpop.f32.mrb[0].mxu0
      %v713 = vpop.f32.mrb[0].mxu0
      %v714 = vadd.f32 0.0, %v713
      %v715 = vpop.f32.mrb[0].mxu0
      %716 = vdwg.mxu0
      %v717 = vadd.f32 %v231, %v695
      %v718 = vadd.f32 %v236, %v698
      %721 = vrot.lane.b32.xlu0 %v703, 127
      %v722 = vpop.permute.xlu0 %721
      %723 = vrot.lane.b32.xlu0 %v706, 127
      %v724 = vpop.permute.xlu0 %723
      %v727 = vadd.f32 %v717, %v722
      %v728 = vadd.f32 %v718, %v724
      %731 = vrot.lane.b32.xlu0 %v711, 126
      %v732 = vpop.permute.xlu0 %731
      %733 = vrot.lane.b32.xlu0 %v714, 126
      %v734 = vpop.permute.xlu0 %733
      %v737 = vadd.f32 %v727, %v732
      %v738 = vadd.f32 %v728, %v734
      %v739 = vxor.u32 %v737, 2147483648
      %v740 = vxor.u32 %v738, 2147483648
      %v741 = vmul.f32 %v739, 1.442695
      %v742 = vpow.pop %v741
      %v743 = vmul.f32 %v740, 1.442695
      %v744 = vpow.pop %v743
      %v745 = vadd.f32 %v742, 1.0
      %v746 = vadd.f32 %v744, 1.0
      %v747 = vrcp.pop %v745
      %v748 = vmul.f32 1.0, %v747
      %v749 = vrcp.pop %v746
      %v750 = vmul.f32 1.0, %v749
      %v751 = vpack.c.bf16 %v750, %v748
      %753 = vrot.lane.b32.xlu0 %v751, 2
      %v754 = vpop.permute.xlu0 %753
      %s756 = scalar_lea.vmem [#allocation2], 24
      %757 = vst.msk [vmem:[%s756] sm:$0xff] %vm450, %v754
      %s758 = scalar_lea.vmem %s219, 48
      %v759 = vld [vmem:[%s758] sm:$0xf]
      %v760 = vld [vmem:[%s758 + $0x4] sm:$0xf]
      %v761 = vld [vmem:[%s758 + $0x8] sm:$0xf]
      %v762 = vld [vmem:[%s758 + $0xc] sm:$0xf]
      %v763 = vld [vmem:[%s758 + $0x10] sm:$0xf]
      %v764 = vld [vmem:[%s758 + $0x14] sm:$0xf]
      %v765 = vld [vmem:[%s1] sm:$0xf]
      %v766 = vld [vmem:[%s1 + $0x4] sm:$0xf]
      %v767 = vld [vmem:[%s1 + $0x8] sm:$0xf]
      %v768 = vld [vmem:[%s1 + $0xc] sm:$0xf]
      %v769 = vld [vmem:[%s1 + $0x10] sm:$0xf]
      %v770 = vld [vmem:[%s1 + $0x14] sm:$0xf]
      %v777 = vunpack.c.l.b16 %v765
      %v778 = vunpack.c.l.b16 %v766
      %v779 = vunpack.c.l.b16 %v767
      %v780 = vunpack.c.l.b16 %v768
      %v781 = vunpack.c.l.b16 %v769
      %v782 = vunpack.c.l.b16 %v770
      %v783 = vpack.c.b16 %v778, %v777
      %v784 = vpack.c.b16 %v780, %v779
      %v785 = vpack.c.b16 %v782, %v781
      %v792 = vunpack.c.l.b16 %v759
      %v793 = vunpack.c.l.b16 %v760
      %v794 = vunpack.c.l.b16 %v761
      %v795 = vunpack.c.l.b16 %v762
      %v796 = vunpack.c.l.b16 %v763
      %v797 = vunpack.c.l.b16 %v764
      %v798 = vpack.c.b16 %v793, %v792
      %v799 = vpack.c.b16 %v795, %v794
      %v800 = vpack.c.b16 %v797, %v796
      %v805 = vsel %vm343, %v783, 0
      %v808 = vsel %vm343, %v784, 0
      %v811 = vsel %vm343, %v785, 0
      %813 = vmatprep.subr.bf16.mxu0 0
      %814 = vmatpush1.bf16.msra.mxu0 %v798
      %815 = vmatprep.subr.bf16.mxu0 0
      %816 = vmatpush1.bf16.msra.mxu0 %v799
      %817 = vmatprep.subr.bf16.mxu0 0
      %818 = vmatpush1.bf16.msra.mxu0 %v800
      %819 = vmatprep.subr.bf16.mxu0 0
      %820 = vmatpush1.bf16.msra.mxu0 0
      %821 = vmatprep.subr.bf16.mxu0 0
      %822 = vmatpush1.bf16.msra.mxu0 0
      %823 = vmatprep.subr.bf16.mxu0 0
      %824 = vmatpush1.bf16.msra.mxu0 0
      %825 = vmatprep.subr.bf16.mxu0 0
      %826 = vmatpush1.bf16.msra.mxu0 0
      %827 = vmatprep.subr.bf16.mxu0 0
      %828 = vmatpush1.bf16.msra.mxu0 0
      %829 = vmatprep.subr.bf16.mxu0 0
      %830 = vmatpush1.bf16.msra.mxu0 0
      %831 = vmatprep.subr.bf16.mxu0 0
      %832 = vmatpush1.bf16.msra.mxu0 0
      %833 = vmatprep.subr.bf16.mxu0 0
      %834 = vmatpush1.bf16.msra.mxu0 0
      %835 = vmatprep.subr.bf16.mxu0 0
      %836 = vmatpush1.bf16.msra.mxu0 0
      %837 = vmatprep.subr.bf16.mxu0 0
      %838 = vmatpush1.bf16.msra.mxu0 0
      %839 = vmatprep.subr.bf16.mxu0 0
      %840 = vmatpush1.bf16.msra.mxu0 0
      %841 = vmatprep.subr.bf16.mxu0 0
      %842 = vmatpush1.bf16.msra.mxu0 0
      %843 = vmatprep.subr.bf16.mxu0 0
      %844 = vmatpush1.bf16.msra.mxu0 0
      %845 = vmatprep.mubr.bf16.mxu0 0
      %846 = vmatmul.mubr.bf16.gmra.mrb[0].mxu0 %v805
      %v847 = vpop.f32.mrb[0].mxu0
      %v848 = vadd.f32 0.0, %v847
      %v849 = vpop.f32.mrb[0].mxu0
      %v850 = vpop.f32.mrb[0].mxu0
      %v851 = vadd.f32 0.0, %v850
      %v852 = vpop.f32.mrb[0].mxu0
      %853 = vmatprep.mubr.bf16.mxu0 0
      %854 = vmatmul.mubr.bf16.gmra.mrb[0].mxu0 %v808
      %v855 = vpop.f32.mrb[0].mxu0
      %v856 = vadd.f32 0.0, %v855
      %v857 = vpop.f32.mrb[0].mxu0
      %v858 = vpop.f32.mrb[0].mxu0
      %v859 = vadd.f32 0.0, %v858
      %v860 = vpop.f32.mrb[0].mxu0
      %861 = vmatprep.mubr.bf16.mxu0 0
      %862 = vmatmul.mubr.bf16.gmra.mrb[0].mxu0 %v811
      %v863 = vpop.f32.mrb[0].mxu0
      %v864 = vadd.f32 0.0, %v863
      %v865 = vpop.f32.mrb[0].mxu0
      %v866 = vpop.f32.mrb[0].mxu0
      %v867 = vadd.f32 0.0, %v866
      %v868 = vpop.f32.mrb[0].mxu0
      %869 = vdwg.mxu0
      %v870 = vadd.f32 %v231, %v848
      %v871 = vadd.f32 %v236, %v851
      %874 = vrot.lane.b32.xlu0 %v856, 127
      %v875 = vpop.permute.xlu0 %874
      %876 = vrot.lane.b32.xlu0 %v859, 127
      %v877 = vpop.permute.xlu0 %876
      %v880 = vadd.f32 %v870, %v875
      %v881 = vadd.f32 %v871, %v877
      %884 = vrot.lane.b32.xlu0 %v864, 126
      %v885 = vpop.permute.xlu0 %884
      %886 = vrot.lane.b32.xlu0 %v867, 126
      %v887 = vpop.permute.xlu0 %886
      %v890 = vadd.f32 %v880, %v885
      %v891 = vadd.f32 %v881, %v887
      %v892 = vxor.u32 %v890, 2147483648
      %v893 = vxor.u32 %v891, 2147483648
      %v894 = vmul.f32 %v892, 1.442695
      %v895 = vpow.pop %v894
      %v896 = vmul.f32 %v893, 1.442695
      %v897 = vpow.pop %v896
      %v898 = vadd.f32 %v895, 1.0
      %v899 = vadd.f32 %v897, 1.0
      %v900 = vrcp.pop %v898
      %v901 = vmul.f32 1.0, %v900
      %v902 = vrcp.pop %v899
      %v903 = vmul.f32 1.0, %v902
      %v904 = vpack.c.bf16 %v903, %v901
      %906 = vrot.lane.b32.xlu0 %v904, 2
      %v907 = vpop.permute.xlu0 %906
      %s909 = scalar_lea.vmem [#allocation2], 32
      %910 = vst.msk [vmem:[%s909] sm:$0xff] %vm450, %v907
      %s911 = scalar_lea.vmem %s219, 64
      %v912 = vld [vmem:[%s911] sm:$0xf]
      %v913 = vld [vmem:[%s911 + $0x4] sm:$0xf]
      %v914 = vld [vmem:[%s911 + $0x8] sm:$0xf]
      %v915 = vld [vmem:[%s911 + $0xc] sm:$0xf]
      %v916 = vld [vmem:[%s911 + $0x10] sm:$0xf]
      %v917 = vld [vmem:[%s911 + $0x14] sm:$0xf]
      %v918 = vld [vmem:[%s1] sm:$0xf]
      %v919 = vld [vmem:[%s1 + $0x4] sm:$0xf]
      %v920 = vld [vmem:[%s1 + $0x8] sm:$0xf]
      %v921 = vld [vmem:[%s1 + $0xc] sm:$0xf]
      %v922 = vld [vmem:[%s1 + $0x10] sm:$0xf]
      %v923 = vld [vmem:[%s1 + $0x14] sm:$0xf]
      %v930 = vunpack.c.l.b16 %v918
      %v931 = vunpack.c.l.b16 %v919
      %v932 = vunpack.c.l.b16 %v920
      %v933 = vunpack.c.l.b16 %v921
      %v934 = vunpack.c.l.b16 %v922
      %v935 = vunpack.c.l.b16 %v923
      %v936 = vpack.c.b16 %v931, %v930
      %v937 = vpack.c.b16 %v933, %v932
      %v938 = vpack.c.b16 %v935, %v934
      %v945 = vunpack.c.l.b16 %v912
      %v946 = vunpack.c.l.b16 %v913
      %v947 = vunpack.c.l.b16 %v914
      %v948 = vunpack.c.l.b16 %v915
      %v949 = vunpack.c.l.b16 %v916
      %v950 = vunpack.c.l.b16 %v917
      %v951 = vpack.c.b16 %v946, %v945
      %v952 = vpack.c.b16 %v948, %v947
      %v953 = vpack.c.b16 %v950, %v949
      %v958 = vsel %vm343, %v936, 0
      %v961 = vsel %vm343, %v937, 0
      %v964 = vsel %vm343, %v938, 0
      %966 = vmatprep.subr.bf16.mxu0 0
      %967 = vmatpush1.bf16.msra.mxu0 %v951
      %968 = vmatprep.subr.bf16.mxu0 0
      %969 = vmatpush1.bf16.msra.mxu0 %v952
      %970 = vmatprep.subr.bf16.mxu0 0
      %971 = vmatpush1.bf16.msra.mxu0 %v953
      %972 = vmatprep.subr.bf16.mxu0 0
      %973 = vmatpush1.bf16.msra.mxu0 0
      %974 = vmatprep.subr.bf16.mxu0 0
      %975 = vmatpush1.bf16.msra.mxu0 0
      %976 = vmatprep.subr.bf16.mxu0 0
      %977 = vmatpush1.bf16.msra.mxu0 0
      %978 = vmatprep.subr.bf16.mxu0 0
      %979 = vmatpush1.bf16.msra.mxu0 0
      %980 = vmatprep.subr.bf16.mxu0 0
      %981 = vmatpush1.bf16.msra.mxu0 0
      %982 = vmatprep.subr.bf16.mxu0 0
      %983 = vmatpush1.bf16.msra.mxu0 0
      %984 = vmatprep.subr.bf16.mxu0 0
      %985 = vmatpush1.bf16.msra.mxu0 0
      %986 = vmatprep.subr.bf16.mxu0 0
      %987 = vmatpush1.bf16.msra.mxu0 0
      %988 = vmatprep.subr.bf16.mxu0 0
      %989 = vmatpush1.bf16.msra.mxu0 0
      %990 = vmatprep.subr.bf16.mxu0 0
      %991 = vmatpush1.bf16.msra.mxu0 0
      %992 = vmatprep.subr.bf16.mxu0 0
      %993 = vmatpush1.bf16.msra.mxu0 0
      %994 = vmatprep.subr.bf16.mxu0 0
      %995 = vmatpush1.bf16.msra.mxu0 0
      %996 = vmatprep.subr.bf16.mxu0 0
      %997 = vmatpush1.bf16.msra.mxu0 0
      %998 = vmatprep.mubr.bf16.mxu0 0
      %999 = vmatmul.mubr.bf16.gmra.mrb[0].mxu0 %v958
      %v1000 = vpop.f32.mrb[0].mxu0
      %v1001 = vadd.f32 0.0, %v1000
      %v1002 = vpop.f32.mrb[0].mxu0
      %v1003 = vpop.f32.mrb[0].mxu0
      %v1004 = vadd.f32 0.0, %v1003
      %v1005 = vpop.f32.mrb[0].mxu0
      %1006 = vmatprep.mubr.bf16.mxu0 0
      %1007 = vmatmul.mubr.bf16.gmra.mrb[0].mxu0 %v961
      %v1008 = vpop.f32.mrb[0].mxu0
      %v1009 = vadd.f32 0.0, %v1008
      %v1010 = vpop.f32.mrb[0].mxu0
      %v1011 = vpop.f32.mrb[0].mxu0
      %v1012 = vadd.f32 0.0, %v1011
      %v1013 = vpop.f32.mrb[0].mxu0
      %1014 = vmatprep.mubr.bf16.mxu0 0
      %1015 = vmatmul.mubr.bf16.gmra.mrb[0].mxu0 %v964
      %v1016 = vpop.f32.mrb[0].mxu0
      %v1017 = vadd.f32 0.0, %v1016
      %v1018 = vpop.f32.mrb[0].mxu0
      %v1019 = vpop.f32.mrb[0].mxu0
      %v1020 = vadd.f32 0.0, %v1019
      %v1021 = vpop.f32.mrb[0].mxu0
      %1022 = vdwg.mxu0
      %v1023 = vadd.f32 %v231, %v1001
      %v1024 = vadd.f32 %v236, %v1004
      %1027 = vrot.lane.b32.xlu0 %v1009, 127
      %v1028 = vpop.permute.xlu0 %1027
      %1029 = vrot.lane.b32.xlu0 %v1012, 127
      %v1030 = vpop.permute.xlu0 %1029
      %v1033 = vadd.f32 %v1023, %v1028
      %v1034 = vadd.f32 %v1024, %v1030
      %1037 = vrot.lane.b32.xlu0 %v1017, 126
      %v1038 = vpop.permute.xlu0 %1037
      %1039 = vrot.lane.b32.xlu0 %v1020, 126
      %v1040 = vpop.permute.xlu0 %1039
      %v1043 = vadd.f32 %v1033, %v1038
      %v1044 = vadd.f32 %v1034, %v1040
      %v1045 = vxor.u32 %v1043, 2147483648
      %v1046 = vxor.u32 %v1044, 2147483648
      %v1047 = vmul.f32 %v1045, 1.442695
      %v1048 = vpow.pop %v1047
      %v1049 = vmul.f32 %v1046, 1.442695
      %v1050 = vpow.pop %v1049
      %v1051 = vadd.f32 %v1048, 1.0
      %v1052 = vadd.f32 %v1050, 1.0
      %v1053 = vrcp.pop %v1051
      %v1054 = vmul.f32 1.0, %v1053
      %v1055 = vrcp.pop %v1052
      %v1056 = vmul.f32 1.0, %v1055
      %v1057 = vpack.c.bf16 %v1056, %v1054
      %1059 = vrot.lane.b32.xlu0 %v1057, 2
      %v1060 = vpop.permute.xlu0 %1059
      %s1062 = scalar_lea.vmem [#allocation2], 40
      %1063 = vst.msk [vmem:[%s1062] sm:$0xff] %vm450, %v1060
      %s1064 = scalar_lea.vmem %s219, 80
      %v1065 = vld [vmem:[%s1064] sm:$0xf]
      %v1066 = vld [vmem:[%s1064 + $0x4] sm:$0xf]
      %v1067 = vld [vmem:[%s1064 + $0x8] sm:$0xf]
      %v1068 = vld [vmem:[%s1064 + $0xc] sm:$0xf]
      %v1069 = vld [vmem:[%s1064 + $0x10] sm:$0xf]
      %v1070 = vld [vmem:[%s1064 + $0x14] sm:$0xf]
      %v1071 = vld [vmem:[%s1] sm:$0xf]
      %v1072 = vld [vmem:[%s1 + $0x4] sm:$0xf]
      %v1073 = vld [vmem:[%s1 + $0x8] sm:$0xf]
      %v1074 = vld [vmem:[%s1 + $0xc] sm:$0xf]
      %v1075 = vld [vmem:[%s1 + $0x10] sm:$0xf]
      %v1076 = vld [vmem:[%s1 + $0x14] sm:$0xf]
      %v1083 = vunpack.c.l.b16 %v1071
      %v1084 = vunpack.c.l.b16 %v1072
      %v1085 = vunpack.c.l.b16 %v1073
      %v1086 = vunpack.c.l.b16 %v1074
      %v1087 = vunpack.c.l.b16 %v1075
      %v1088 = vunpack.c.l.b16 %v1076
      %v1089 = vpack.c.b16 %v1084, %v1083
      %v1090 = vpack.c.b16 %v1086, %v1085
      %v1091 = vpack.c.b16 %v1088, %v1087
      %v1098 = vunpack.c.l.b16 %v1065
      %v1099 = vunpack.c.l.b16 %v1066
      %v1100 = vunpack.c.l.b16 %v1067
      %v1101 = vunpack.c.l.b16 %v1068
      %v1102 = vunpack.c.l.b16 %v1069
      %v1103 = vunpack.c.l.b16 %v1070
      %v1104 = vpack.c.b16 %v1099, %v1098
      %v1105 = vpack.c.b16 %v1101, %v1100
      %v1106 = vpack.c.b16 %v1103, %v1102
      %v1111 = vsel %vm343, %v1089, 0
      %v1114 = vsel %vm343, %v1090, 0
      %v1117 = vsel %vm343, %v1091, 0
      %1119 = vmatprep.subr.bf16.mxu0 0
      %1120 = vmatpush1.bf16.msra.mxu0 %v1104
      %1121 = vmatprep.subr.bf16.mxu0 0
      %1122 = vmatpush1.bf16.msra.mxu0 %v1105
      %1123 = vmatprep.subr.bf16.mxu0 0
      %1124 = vmatpush1.bf16.msra.mxu0 %v1106
      %1125 = vmatprep.subr.bf16.mxu0 0
      %1126 = vmatpush1.bf16.msra.mxu0 0
      %1127 = vmatprep.subr.bf16.mxu0 0
      %1128 = vmatpush1.bf16.msra.mxu0 0
      %1129 = vmatprep.subr.bf16.mxu0 0
      %1130 = vmatpush1.bf16.msra.mxu0 0
      %1131 = vmatprep.subr.bf16.mxu0 0
      %1132 = vmatpush1.bf16.msra.mxu0 0
      %1133 = vmatprep.subr.bf16.mxu0 0
      %1134 = vmatpush1.bf16.msra.mxu0 0
      %1135 = vmatprep.subr.bf16.mxu0 0
      %1136 = vmatpush1.bf16.msra.mxu0 0
      %1137 = vmatprep.subr.bf16.mxu0 0
      %1138 = vmatpush1.bf16.msra.mxu0 0
      %1139 = vmatprep.subr.bf16.mxu0 0
      %1140 = vmatpush1.bf16.msra.mxu0 0
      %1141 = vmatprep.subr.bf16.mxu0 0
      %1142 = vmatpush1.bf16.msra.mxu0 0
      %1143 = vmatprep.subr.bf16.mxu0 0
      %1144 = vmatpush1.bf16.msra.mxu0 0
      %1145 = vmatprep.subr.bf16.mxu0 0
      %1146 = vmatpush1.bf16.msra.mxu0 0
      %1147 = vmatprep.subr.bf16.mxu0 0
      %1148 = vmatpush1.bf16.msra.mxu0 0
      %1149 = vmatprep.subr.bf16.mxu0 0
      %1150 = vmatpush1.bf16.msra.mxu0 0
      %1151 = vmatprep.mubr.bf16.mxu0 0
      %1152 = vmatmul.mubr.bf16.gmra.mrb[0].mxu0 %v1111
      %v1153 = vpop.f32.mrb[0].mxu0
      %v1154 = vadd.f32 0.0, %v1153
      %v1155 = vpop.f32.mrb[0].mxu0
      %v1156 = vpop.f32.mrb[0].mxu0
      %v1157 = vadd.f32 0.0, %v1156
      %v1158 = vpop.f32.mrb[0].mxu0
      %1159 = vmatprep.mubr.bf16.mxu0 0
      %1160 = vmatmul.mubr.bf16.gmra.mrb[0].mxu0 %v1114
      %v1161 = vpop.f32.mrb[0].mxu0
      %v1162 = vadd.f32 0.0, %v1161
      %v1163 = vpop.f32.mrb[0].mxu0
      %v1164 = vpop.f32.mrb[0].mxu0
      %v1165 = vadd.f32 0.0, %v1164
      %v1166 = vpop.f32.mrb[0].mxu0
      %1167 = vmatprep.mubr.bf16.mxu0 0
      %1168 = vmatmul.mubr.bf16.gmra.mrb[0].mxu0 %v1117
      %v1169 = vpop.f32.mrb[0].mxu0
      %v1170 = vadd.f32 0.0, %v1169
      %v1171 = vpop.f32.mrb[0].mxu0
      %v1172 = vpop.f32.mrb[0].mxu0
      %v1173 = vadd.f32 0.0, %v1172
      %v1174 = vpop.f32.mrb[0].mxu0
      %1175 = vdwg.mxu0
      %v1176 = vadd.f32 %v231, %v1154
      %v1177 = vadd.f32 %v236, %v1157
      %1180 = vrot.lane.b32.xlu0 %v1162, 127
      %v1181 = vpop.permute.xlu0 %1180
      %1182 = vrot.lane.b32.xlu0 %v1165, 127
      %v1183 = vpop.permute.xlu0 %1182
      %v1186 = vadd.f32 %v1176, %v1181
      %v1187 = vadd.f32 %v1177, %v1183
      %1190 = vrot.lane.b32.xlu0 %v1170, 126
      %v1191 = vpop.permute.xlu0 %1190
      %1192 = vrot.lane.b32.xlu0 %v1173, 126
      %v1193 = vpop.permute.xlu0 %1192
      %v1196 = vadd.f32 %v1186, %v1191
      %v1197 = vadd.f32 %v1187, %v1193
      %v1198 = vxor.u32 %v1196, 2147483648
      %v1199 = vxor.u32 %v1197, 2147483648
      %v1200 = vmul.f32 %v1198, 1.442695
      %v1201 = vpow.pop %v1200
      %v1202 = vmul.f32 %v1199, 1.442695
      %v1203 = vpow.pop %v1202
      %v1204 = vadd.f32 %v1201, 1.0
      %v1205 = vadd.f32 %v1203, 1.0
      %v1206 = vrcp.pop %v1204
      %v1207 = vmul.f32 1.0, %v1206
      %v1208 = vrcp.pop %v1205
      %v1209 = vmul.f32 1.0, %v1208
      %v1210 = vpack.c.bf16 %v1209, %v1207
      %1212 = vrot.lane.b32.xlu0 %v1210, 2
      %v1213 = vpop.permute.xlu0 %1212
      %s1215 = scalar_lea.vmem [#allocation2], 48
      %1216 = vst.msk [vmem:[%s1215] sm:$0xff] %vm450, %v1213
      %s1217 = scalar_lea.vmem %s219, 96
      %v1218 = vld [vmem:[%s1217] sm:$0xf]
      %v1219 = vld [vmem:[%s1217 + $0x4] sm:$0xf]
      %v1220 = vld [vmem:[%s1217 + $0x8] sm:$0xf]
      %v1221 = vld [vmem:[%s1217 + $0xc] sm:$0xf]
      %v1222 = vld [vmem:[%s1217 + $0x10] sm:$0xf]
      %v1223 = vld [vmem:[%s1217 + $0x14] sm:$0xf]
      %v1224 = vld [vmem:[%s1] sm:$0xf]
      %v1225 = vld [vmem:[%s1 + $0x4] sm:$0xf]
      %v1226 = vld [vmem:[%s1 + $0x8] sm:$0xf]
      %v1227 = vld [vmem:[%s1 + $0xc] sm:$0xf]
      %v1228 = vld [vmem:[%s1 + $0x10] sm:$0xf]
      %v1229 = vld [vmem:[%s1 + $0x14] sm:$0xf]
      %v1236 = vunpack.c.l.b16 %v1224
      %v1237 = vunpack.c.l.b16 %v1225
      %v1238 = vunpack.c.l.b16 %v1226
      %v1239 = vunpack.c.l.b16 %v1227
      %v1240 = vunpack.c.l.b16 %v1228
      %v1241 = vunpack.c.l.b16 %v1229
      %v1242 = vpack.c.b16 %v1237, %v1236
      %v1243 = vpack.c.b16 %v1239, %v1238
      %v1244 = vpack.c.b16 %v1241, %v1240
      %v1251 = vunpack.c.l.b16 %v1218
      %v1252 = vunpack.c.l.b16 %v1219
      %v1253 = vunpack.c.l.b16 %v1220
      %v1254 = vunpack.c.l.b16 %v1221
      %v1255 = vunpack.c.l.b16 %v1222
      %v1256 = vunpack.c.l.b16 %v1223
      %v1257 = vpack.c.b16 %v1252, %v1251
      %v1258 = vpack.c.b16 %v1254, %v1253
      %v1259 = vpack.c.b16 %v1256, %v1255
      %v1264 = vsel %vm343, %v1242, 0
      %v1267 = vsel %vm343, %v1243, 0
      %v1270 = vsel %vm343, %v1244, 0
      %1272 = vmatprep.subr.bf16.mxu0 0
      %1273 = vmatpush1.bf16.msra.mxu0 %v1257
      %1274 = vmatprep.subr.bf16.mxu0 0
      %1275 = vmatpush1.bf16.msra.mxu0 %v1258
      %1276 = vmatprep.subr.bf16.mxu0 0
      %1277 = vmatpush1.bf16.msra.mxu0 %v1259
      %1278 = vmatprep.subr.bf16.mxu0 0
      %1279 = vmatpush1.bf16.msra.mxu0 0
      %1280 = vmatprep.subr.bf16.mxu0 0
      %1281 = vmatpush1.bf16.msra.mxu0 0
      %1282 = vmatprep.subr.bf16.mxu0 0
      %1283 = vmatpush1.bf16.msra.mxu0 0
      %1284 = vmatprep.subr.bf16.mxu0 0
      %1285 = vmatpush1.bf16.msra.mxu0 0
      %1286 = vmatprep.subr.bf16.mxu0 0
      %1287 = vmatpush1.bf16.msra.mxu0 0
      %1288 = vmatprep.subr.bf16.mxu0 0
      %1289 = vmatpush1.bf16.msra.mxu0 0
      %1290 = vmatprep.subr.bf16.mxu0 0
      %1291 = vmatpush1.bf16.msra.mxu0 0
      %1292 = vmatprep.subr.bf16.mxu0 0
      %1293 = vmatpush1.bf16.msra.mxu0 0
      %1294 = vmatprep.subr.bf16.mxu0 0
      %1295 = vmatpush1.bf16.msra.mxu0 0
      %1296 = vmatprep.subr.bf16.mxu0 0
      %1297 = vmatpush1.bf16.msra.mxu0 0
      %1298 = vmatprep.subr.bf16.mxu0 0
      %1299 = vmatpush1.bf16.msra.mxu0 0
      %1300 = vmatprep.subr.bf16.mxu0 0
      %1301 = vmatpush1.bf16.msra.mxu0 0
      %1302 = vmatprep.subr.bf16.mxu0 0
      %1303 = vmatpush1.bf16.msra.mxu0 0
      %1304 = vmatprep.mubr.bf16.mxu0 0
      %1305 = vmatmul.mubr.bf16.gmra.mrb[0].mxu0 %v1264
      %v1306 = vpop.f32.mrb[0].mxu0
      %v1307 = vadd.f32 0.0, %v1306
      %v1308 = vpop.f32.mrb[0].mxu0
      %v1309 = vpop.f32.mrb[0].mxu0
      %v1310 = vadd.f32 0.0, %v1309
      %v1311 = vpop.f32.mrb[0].mxu0
      %1312 = vmatprep.mubr.bf16.mxu0 0
      %1313 = vmatmul.mubr.bf16.gmra.mrb[0].mxu0 %v1267
      %v1314 = vpop.f32.mrb[0].mxu0
      %v1315 = vadd.f32 0.0, %v1314
      %v1316 = vpop.f32.mrb[0].mxu0
      %v1317 = vpop.f32.mrb[0].mxu0
      %v1318 = vadd.f32 0.0, %v1317
      %v1319 = vpop.f32.mrb[0].mxu0
      %1320 = vmatprep.mubr.bf16.mxu0 0
      %1321 = vmatmul.mubr.bf16.gmra.mrb[0].mxu0 %v1270
      %v1322 = vpop.f32.mrb[0].mxu0
      %v1323 = vadd.f32 0.0, %v1322
      %v1324 = vpop.f32.mrb[0].mxu0
      %v1325 = vpop.f32.mrb[0].mxu0
      %v1326 = vadd.f32 0.0, %v1325
      %v1327 = vpop.f32.mrb[0].mxu0
      %1328 = vdwg.mxu0
      %v1329 = vadd.f32 %v231, %v1307
      %v1330 = vadd.f32 %v236, %v1310
      %1333 = vrot.lane.b32.xlu0 %v1315, 127
      %v1334 = vpop.permute.xlu0 %1333
      %1335 = vrot.lane.b32.xlu0 %v1318, 127
      %v1336 = vpop.permute.xlu0 %1335
      %v1339 = vadd.f32 %v1329, %v1334
      %v1340 = vadd.f32 %v1330, %v1336
      %1343 = vrot.lane.b32.xlu0 %v1323, 126
      %v1344 = vpop.permute.xlu0 %1343
      %1345 = vrot.lane.b32.xlu0 %v1326, 126
      %v1346 = vpop.permute.xlu0 %1345
      %v1349 = vadd.f32 %v1339, %v1344
      %v1350 = vadd.f32 %v1340, %v1346
      %v1351 = vxor.u32 %v1349, 2147483648
      %v1352 = vxor.u32 %v1350, 2147483648
      %v1353 = vmul.f32 %v1351, 1.442695
      %v1354 = vpow.pop %v1353
      %v1355 = vmul.f32 %v1352, 1.442695
      %v1356 = vpow.pop %v1355
      %v1357 = vadd.f32 %v1354, 1.0
      %v1358 = vadd.f32 %v1356, 1.0
      %v1359 = vrcp.pop %v1357
      %v1360 = vmul.f32 1.0, %v1359
      %v1361 = vrcp.pop %v1358
      %v1362 = vmul.f32 1.0, %v1361
      %v1363 = vpack.c.bf16 %v1362, %v1360
      %1365 = vrot.lane.b32.xlu0 %v1363, 2
      %v1366 = vpop.permute.xlu0 %1365
      %s1368 = scalar_lea.vmem [#allocation2], 56
      %1369 = vst.msk [vmem:[%s1368] sm:$0xff] %vm450, %v1366
      %s1370 = scalar_lea.vmem %s219, 112
      %v1371 = vld [vmem:[%s1370] sm:$0xf]
      %v1372 = vld [vmem:[%s1370 + $0x4] sm:$0xf]
      %v1373 = vld [vmem:[%s1370 + $0x8] sm:$0xf]
      %v1374 = vld [vmem:[%s1370 + $0xc] sm:$0xf]
      %v1375 = vld [vmem:[%s1370 + $0x10] sm:$0xf]
      %v1376 = vld [vmem:[%s1370 + $0x14] sm:$0xf]
      %v1377 = vld [vmem:[%s1] sm:$0xf]
      %v1378 = vld [vmem:[%s1 + $0x4] sm:$0xf]
      %v1379 = vld [vmem:[%s1 + $0x8] sm:$0xf]
      %v1380 = vld [vmem:[%s1 + $0xc] sm:$0xf]
      %v1381 = vld [vmem:[%s1 + $0x10] sm:$0xf]
      %v1382 = vld [vmem:[%s1 + $0x14] sm:$0xf]
      %v1389 = vunpack.c.l.b16 %v1377
      %v1390 = vunpack.c.l.b16 %v1378
      %v1391 = vunpack.c.l.b16 %v1379
      %v1392 = vunpack.c.l.b16 %v1380
      %v1393 = vunpack.c.l.b16 %v1381
      %v1394 = vunpack.c.l.b16 %v1382
      %v1395 = vpack.c.b16 %v1390, %v1389
      %v1396 = vpack.c.b16 %v1392, %v1391
      %v1397 = vpack.c.b16 %v1394, %v1393
      %v1404 = vunpack.c.l.b16 %v1371
      %v1405 = vunpack.c.l.b16 %v1372
      %v1406 = vunpack.c.l.b16 %v1373
      %v1407 = vunpack.c.l.b16 %v1374
      %v1408 = vunpack.c.l.b16 %v1375
      %v1409 = vunpack.c.l.b16 %v1376
      %v1410 = vpack.c.b16 %v1405, %v1404
      %v1411 = vpack.c.b16 %v1407, %v1406
      %v1412 = vpack.c.b16 %v1409, %v1408
      %v1417 = vsel %vm343, %v1395, 0
      %v1420 = vsel %vm343, %v1396, 0
      %v1423 = vsel %vm343, %v1397, 0
      %1425 = vmatprep.subr.bf16.mxu0 0
      %1426 = vmatpush1.bf16.msra.mxu0 %v1410
      %1427 = vmatprep.subr.bf16.mxu0 0
      %1428 = vmatpush1.bf16.msra.mxu0 %v1411
      %1429 = vmatprep.subr.bf16.mxu0 0
      %1430 = vmatpush1.bf16.msra.mxu0 %v1412
      %1431 = vmatprep.subr.bf16.mxu0 0
      %1432 = vmatpush1.bf16.msra.mxu0 0
      %1433 = vmatprep.subr.bf16.mxu0 0
      %1434 = vmatpush1.bf16.msra.mxu0 0
      %1435 = vmatprep.subr.bf16.mxu0 0
      %1436 = vmatpush1.bf16.msra.mxu0 0
      %1437 = vmatprep.subr.bf16.mxu0 0
      %1438 = vmatpush1.bf16.msra.mxu0 0
      %1439 = vmatprep.subr.bf16.mxu0 0
      %1440 = vmatpush1.bf16.msra.mxu0 0
      %1441 = vmatprep.subr.bf16.mxu0 0
      %1442 = vmatpush1.bf16.msra.mxu0 0
      %1443 = vmatprep.subr.bf16.mxu0 0
      %1444 = vmatpush1.bf16.msra.mxu0 0
      %1445 = vmatprep.subr.bf16.mxu0 0
      %1446 = vmatpush1.bf16.msra.mxu0 0
      %1447 = vmatprep.subr.bf16.mxu0 0
      %1448 = vmatpush1.bf16.msra.mxu0 0
      %1449 = vmatprep.subr.bf16.mxu0 0
      %1450 = vmatpush1.bf16.msra.mxu0 0
      %1451 = vmatprep.subr.bf16.mxu0 0
      %1452 = vmatpush1.bf16.msra.mxu0 0
      %1453 = vmatprep.subr.bf16.mxu0 0
      %1454 = vmatpush1.bf16.msra.mxu0 0
      %1455 = vmatprep.subr.bf16.mxu0 0
      %1456 = vmatpush1.bf16.msra.mxu0 0
      %1457 = vmatprep.mubr.bf16.mxu0 0
      %1458 = vmatmul.mubr.bf16.gmra.mrb[0].mxu0 %v1417
      %v1459 = vpop.f32.mrb[0].mxu0
      %v1460 = vadd.f32 0.0, %v1459
      %v1461 = vpop.f32.mrb[0].mxu0
      %v1462 = vpop.f32.mrb[0].mxu0
      %v1463 = vadd.f32 0.0, %v1462
      %v1464 = vpop.f32.mrb[0].mxu0
      %1465 = vmatprep.mubr.bf16.mxu0 0
      %1466 = vmatmul.mubr.bf16.gmra.mrb[0].mxu0 %v1420
      %v1467 = vpop.f32.mrb[0].mxu0
      %v1468 = vadd.f32 0.0, %v1467
      %v1469 = vpop.f32.mrb[0].mxu0
      %v1470 = vpop.f32.mrb[0].mxu0
      %v1471 = vadd.f32 0.0, %v1470
      %v1472 = vpop.f32.mrb[0].mxu0
      %1473 = vmatprep.mubr.bf16.mxu0 0
      %1474 = vmatmul.mubr.bf16.gmra.mrb[0].mxu0 %v1423
      %v1475 = vpop.f32.mrb[0].mxu0
      %v1476 = vadd.f32 0.0, %v1475
      %v1477 = vpop.f32.mrb[0].mxu0
      %v1478 = vpop.f32.mrb[0].mxu0
      %v1479 = vadd.f32 0.0, %v1478
      %v1480 = vpop.f32.mrb[0].mxu0
      %1481 = vdwg.mxu0
      %v1482 = vadd.f32 %v231, %v1460
      %v1483 = vadd.f32 %v236, %v1463
      %1486 = vrot.lane.b32.xlu0 %v1468, 127
      %v1487 = vpop.permute.xlu0 %1486
      %1488 = vrot.lane.b32.xlu0 %v1471, 127
      %v1489 = vpop.permute.xlu0 %1488
      %v1492 = vadd.f32 %v1482, %v1487
      %v1493 = vadd.f32 %v1483, %v1489
      %1496 = vrot.lane.b32.xlu0 %v1476, 126
      %v1497 = vpop.permute.xlu0 %1496
      %1498 = vrot.lane.b32.xlu0 %v1479, 126
      %v1499 = vpop.permute.xlu0 %1498
      %v1502 = vadd.f32 %v1492, %v1497
      %v1503 = vadd.f32 %v1493, %v1499
      %v1504 = vxor.u32 %v1502, 2147483648
      %v1505 = vxor.u32 %v1503, 2147483648
      %v1506 = vmul.f32 %v1504, 1.442695
      %v1507 = vpow.pop %v1506
      %v1508 = vmul.f32 %v1505, 1.442695
      %v1509 = vpow.pop %v1508
      %v1510 = vadd.f32 %v1507, 1.0
      %v1511 = vadd.f32 %v1509, 1.0
      %v1512 = vrcp.pop %v1510
      %v1513 = vmul.f32 1.0, %v1512
      %v1514 = vrcp.pop %v1511
      %v1515 = vmul.f32 1.0, %v1514
      %v1516 = vpack.c.bf16 %v1515, %v1513
      %1518 = vrot.lane.b32.xlu0 %v1516, 2
      %v1519 = vpop.permute.xlu0 %1518
      %s1521 = scalar_lea.vmem [#allocation2], 64
      %1522 = vst.msk [vmem:[%s1521] sm:$0xff] %vm450, %v1519
      %s1523 = scalar_lea.vmem %s219, 128
      %v1524 = vld [vmem:[%s1523] sm:$0xf]
      %v1525 = vld [vmem:[%s1523 + $0x4] sm:$0xf]
      %v1526 = vld [vmem:[%s1523 + $0x8] sm:$0xf]
      %v1527 = vld [vmem:[%s1523 + $0xc] sm:$0xf]
      %v1528 = vld [vmem:[%s1523 + $0x10] sm:$0xf]
      %v1529 = vld [vmem:[%s1523 + $0x14] sm:$0xf]
      %v1530 = vld [vmem:[%s1] sm:$0xf]
      %v1531 = vld [vmem:[%s1 + $0x4] sm:$0xf]
      %v1532 = vld [vmem:[%s1 + $0x8] sm:$0xf]
      %v1533 = vld [vmem:[%s1 + $0xc] sm:$0xf]
      %v1534 = vld [vmem:[%s1 + $0x10] sm:$0xf]
      %v1535 = vld [vmem:[%s1 + $0x14] sm:$0xf]
      %v1542 = vunpack.c.l.b16 %v1530
      %v1543 = vunpack.c.l.b16 %v1531
      %v1544 = vunpack.c.l.b16 %v1532
      %v1545 = vunpack.c.l.b16 %v1533
      %v1546 = vunpack.c.l.b16 %v1534
      %v1547 = vunpack.c.l.b16 %v1535
      %v1548 = vpack.c.b16 %v1543, %v1542
      %v1549 = vpack.c.b16 %v1545, %v1544
      %v1550 = vpack.c.b16 %v1547, %v1546
      %v1557 = vunpack.c.l.b16 %v1524
      %v1558 = vunpack.c.l.b16 %v1525
      %v1559 = vunpack.c.l.b16 %v1526
      %v1560 = vunpack.c.l.b16 %v1527
      %v1561 = vunpack.c.l.b16 %v1528
      %v1562 = vunpack.c.l.b16 %v1529
      %v1563 = vpack.c.b16 %v1558, %v1557
      %v1564 = vpack.c.b16 %v1560, %v1559
      %v1565 = vpack.c.b16 %v1562, %v1561
      %v1570 = vsel %vm343, %v1548, 0
      %v1573 = vsel %vm343, %v1549, 0
      %v1576 = vsel %vm343, %v1550, 0
      %1578 = vmatprep.subr.bf16.mxu0 0
      %1579 = vmatpush1.bf16.msra.mxu0 %v1563
      %1580 = vmatprep.subr.bf16.mxu0 0
      %1581 = vmatpush1.bf16.msra.mxu0 %v1564
      %1582 = vmatprep.subr.bf16.mxu0 0
      %1583 = vmatpush1.bf16.msra.mxu0 %v1565
      %1584 = vmatprep.subr.bf16.mxu0 0
      %1585 = vmatpush1.bf16.msra.mxu0 0
      %1586 = vmatprep.subr.bf16.mxu0 0
      %1587 = vmatpush1.bf16.msra.mxu0 0
      %1588 = vmatprep.subr.bf16.mxu0 0
      %1589 = vmatpush1.bf16.msra.mxu0 0
      %1590 = vmatprep.subr.bf16.mxu0 0
      %1591 = vmatpush1.bf16.msra.mxu0 0
      %1592 = vmatprep.subr.bf16.mxu0 0
      %1593 = vmatpush1.bf16.msra.mxu0 0
      %1594 = vmatprep.subr.bf16.mxu0 0
      %1595 = vmatpush1.bf16.msra.mxu0 0
      %1596 = vmatprep.subr.bf16.mxu0 0
      %1597 = vmatpush1.bf16.msra.mxu0 0
      %1598 = vmatprep.subr.bf16.mxu0 0
      %1599 = vmatpush1.bf16.msra.mxu0 0
      %1600 = vmatprep.subr.bf16.mxu0 0
      %1601 = vmatpush1.bf16.msra.mxu0 0
      %1602 = vmatprep.subr.bf16.mxu0 0
      %1603 = vmatpush1.bf16.msra.mxu0 0
      %1604 = vmatprep.subr.bf16.mxu0 0
      %1605 = vmatpush1.bf16.msra.mxu0 0
      %1606 = vmatprep.subr.bf16.mxu0 0
      %1607 = vmatpush1.bf16.msra.mxu0 0
      %1608 = vmatprep.subr.bf16.mxu0 0
      %1609 = vmatpush1.bf16.msra.mxu0 0
      %1610 = vmatprep.mubr.bf16.mxu0 0
      %1611 = vmatmul.mubr.bf16.gmra.mrb[0].mxu0 %v1570
      %v1612 = vpop.f32.mrb[0].mxu0
      %v1613 = vadd.f32 0.0, %v1612
      %v1614 = vpop.f32.mrb[0].mxu0
      %v1615 = vpop.f32.mrb[0].mxu0
      %v1616 = vadd.f32 0.0, %v1615
      %v1617 = vpop.f32.mrb[0].mxu0
      %1618 = vmatprep.mubr.bf16.mxu0 0
      %1619 = vmatmul.mubr.bf16.gmra.mrb[0].mxu0 %v1573
      %v1620 = vpop.f32.mrb[0].mxu0
      %v1621 = vadd.f32 0.0, %v1620
      %v1622 = vpop.f32.mrb[0].mxu0
      %v1623 = vpop.f32.mrb[0].mxu0
      %v1624 = vadd.f32 0.0, %v1623
      %v1625 = vpop.f32.mrb[0].mxu0
      %1626 = vmatprep.mubr.bf16.mxu0 0
      %1627 = vmatmul.mubr.bf16.gmra.mrb[0].mxu0 %v1576
      %v1628 = vpop.f32.mrb[0].mxu0
      %v1629 = vadd.f32 0.0, %v1628
      %v1630 = vpop.f32.mrb[0].mxu0
      %v1631 = vpop.f32.mrb[0].mxu0
      %v1632 = vadd.f32 0.0, %v1631
      %v1633 = vpop.f32.mrb[0].mxu0
      %1634 = vdwg.mxu0
      %v1635 = vadd.f32 %v231, %v1613
      %v1636 = vadd.f32 %v236, %v1616
      %1639 = vrot.lane.b32.xlu0 %v1621, 127
      %v1640 = vpop.permute.xlu0 %1639
      %1641 = vrot.lane.b32.xlu0 %v1624, 127
      %v1642 = vpop.permute.xlu0 %1641
      %v1645 = vadd.f32 %v1635, %v1640
      %v1646 = vadd.f32 %v1636, %v1642
      %1649 = vrot.lane.b32.xlu0 %v1629, 126
      %v1650 = vpop.permute.xlu0 %1649
      %1651 = vrot.lane.b32.xlu0 %v1632, 126
      %v1652 = vpop.permute.xlu0 %1651
      %v1655 = vadd.f32 %v1645, %v1650
      %v1656 = vadd.f32 %v1646, %v1652
      %v1657 = vxor.u32 %v1655, 2147483648
      %v1658 = vxor.u32 %v1656, 2147483648
      %v1659 = vmul.f32 %v1657, 1.442695
      %v1660 = vpow.pop %v1659
      %v1661 = vmul.f32 %v1658, 1.442695
      %v1662 = vpow.pop %v1661
      %v1663 = vadd.f32 %v1660, 1.0
      %v1664 = vadd.f32 %v1662, 1.0
      %v1665 = vrcp.pop %v1663
      %v1666 = vmul.f32 1.0, %v1665
      %v1667 = vrcp.pop %v1664
      %v1668 = vmul.f32 1.0, %v1667
      %v1669 = vpack.c.bf16 %v1668, %v1666
      %1671 = vrot.lane.b32.xlu0 %v1669, 2
      %v1672 = vpop.permute.xlu0 %1671
      %s1674 = scalar_lea.vmem [#allocation2], 72
      %1675 = vst.msk [vmem:[%s1674] sm:$0xff] %vm450, %v1672
      %s1676 = scalar_lea.vmem %s219, 144
      %v1677 = vld [vmem:[%s1676] sm:$0xf]
      %v1678 = vld [vmem:[%s1676 + $0x4] sm:$0xf]
      %v1679 = vld [vmem:[%s1676 + $0x8] sm:$0xf]
      %v1680 = vld [vmem:[%s1676 + $0xc] sm:$0xf]
      %v1681 = vld [vmem:[%s1676 + $0x10] sm:$0xf]
      %v1682 = vld [vmem:[%s1676 + $0x14] sm:$0xf]
      %v1683 = vld [vmem:[%s1] sm:$0xf]
      %v1684 = vld [vmem:[%s1 + $0x4] sm:$0xf]
      %v1685 = vld [vmem:[%s1 + $0x8] sm:$0xf]
      %v1686 = vld [vmem:[%s1 + $0xc] sm:$0xf]
      %v1687 = vld [vmem:[%s1 + $0x10] sm:$0xf]
      %v1688 = vld [vmem:[%s1 + $0x14] sm:$0xf]
      %v1695 = vunpack.c.l.b16 %v1683
      %v1696 = vunpack.c.l.b16 %v1684
      %v1697 = vunpack.c.l.b16 %v1685
      %v1698 = vunpack.c.l.b16 %v1686
      %v1699 = vunpack.c.l.b16 %v1687
      %v1700 = vunpack.c.l.b16 %v1688
      %v1701 = vpack.c.b16 %v1696, %v1695
      %v1702 = vpack.c.b16 %v1698, %v1697
      %v1703 = vpack.c.b16 %v1700, %v1699
      %v1710 = vunpack.c.l.b16 %v1677
      %v1711 = vunpack.c.l.b16 %v1678
      %v1712 = vunpack.c.l.b16 %v1679
      %v1713 = vunpack.c.l.b16 %v1680
      %v1714 = vunpack.c.l.b16 %v1681
      %v1715 = vunpack.c.l.b16 %v1682
      %v1716 = vpack.c.b16 %v1711, %v1710
      %v1717 = vpack.c.b16 %v1713, %v1712
      %v1718 = vpack.c.b16 %v1715, %v1714
      %v1723 = vsel %vm343, %v1701, 0
      %v1726 = vsel %vm343, %v1702, 0
      %v1729 = vsel %vm343, %v1703, 0
      %1731 = vmatprep.subr.bf16.mxu0 0
      %1732 = vmatpush1.bf16.msra.mxu0 %v1716
      %1733 = vmatprep.subr.bf16.mxu0 0
      %1734 = vmatpush1.bf16.msra.mxu0 %v1717
      %1735 = vmatprep.subr.bf16.mxu0 0
      %1736 = vmatpush1.bf16.msra.mxu0 %v1718
      %1737 = vmatprep.subr.bf16.mxu0 0
      %1738 = vmatpush1.bf16.msra.mxu0 0
      %1739 = vmatprep.subr.bf16.mxu0 0
      %1740 = vmatpush1.bf16.msra.mxu0 0
      %1741 = vmatprep.subr.bf16.mxu0 0
      %1742 = vmatpush1.bf16.msra.mxu0 0
      %1743 = vmatprep.subr.bf16.mxu0 0
      %1744 = vmatpush1.bf16.msra.mxu0 0
      %1745 = vmatprep.subr.bf16.mxu0 0
      %1746 = vmatpush1.bf16.msra.mxu0 0
      %1747 = vmatprep.subr.bf16.mxu0 0
      %1748 = vmatpush1.bf16.msra.mxu0 0
      %1749 = vmatprep.subr.bf16.mxu0 0
      %1750 = vmatpush1.bf16.msra.mxu0 0
      %1751 = vmatprep.subr.bf16.mxu0 0
      %1752 = vmatpush1.bf16.msra.mxu0 0
      %1753 = vmatprep.subr.bf16.mxu0 0
      %1754 = vmatpush1.bf16.msra.mxu0 0
      %1755 = vmatprep.subr.bf16.mxu0 0
      %1756 = vmatpush1.bf16.msra.mxu0 0
      %1757 = vmatprep.subr.bf16.mxu0 0
      %1758 = vmatpush1.bf16.msra.mxu0 0
      %1759 = vmatprep.subr.bf16.mxu0 0
      %1760 = vmatpush1.bf16.msra.mxu0 0
      %1761 = vmatprep.subr.bf16.mxu0 0
      %1762 = vmatpush1.bf16.msra.mxu0 0
      %1763 = vmatprep.mubr.bf16.mxu0 0
      %1764 = vmatmul.mubr.bf16.gmra.mrb[0].mxu0 %v1723
      %v1765 = vpop.f32.mrb[0].mxu0
      %v1766 = vadd.f32 0.0, %v1765
      %v1767 = vpop.f32.mrb[0].mxu0
      %v1768 = vpop.f32.mrb[0].mxu0
      %v1769 = vadd.f32 0.0, %v1768
      %v1770 = vpop.f32.mrb[0].mxu0
      %1771 = vmatprep.mubr.bf16.mxu0 0
      %1772 = vmatmul.mubr.bf16.gmra.mrb[0].mxu0 %v1726
      %v1773 = vpop.f32.mrb[0].mxu0
      %v1774 = vadd.f32 0.0, %v1773
      %v1775 = vpop.f32.mrb[0].mxu0
      %v1776 = vpop.f32.mrb[0].mxu0
      %v1777 = vadd.f32 0.0, %v1776
      %v1778 = vpop.f32.mrb[0].mxu0
      %1779 = vmatprep.mubr.bf16.mxu0 0
      %1780 = vmatmul.mubr.bf16.gmra.mrb[0].mxu0 %v1729
      %v1781 = vpop.f32.mrb[0].mxu0
      %v1782 = vadd.f32 0.0, %v1781
      %v1783 = vpop.f32.mrb[0].mxu0
      %v1784 = vpop.f32.mrb[0].mxu0
      %v1785 = vadd.f32 0.0, %v1784
      %v1786 = vpop.f32.mrb[0].mxu0
      %1787 = vdwg.mxu0
      %v1788 = vadd.f32 %v231, %v1766
      %v1789 = vadd.f32 %v236, %v1769
      %1792 = vrot.lane.b32.xlu0 %v1774, 127
      %v1793 = vpop.permute.xlu0 %1792
      %1794 = vrot.lane.b32.xlu0 %v1777, 127
      %v1795 = vpop.permute.xlu0 %1794
      %v1798 = vadd.f32 %v1788, %v1793
      %v1799 = vadd.f32 %v1789, %v1795
      %1802 = vrot.lane.b32.xlu0 %v1782, 126
      %v1803 = vpop.permute.xlu0 %1802
      %1804 = vrot.lane.b32.xlu0 %v1785, 126
      %v1805 = vpop.permute.xlu0 %1804
      %v1808 = vadd.f32 %v1798, %v1803
      %v1809 = vadd.f32 %v1799, %v1805
      %v1810 = vxor.u32 %v1808, 2147483648
      %v1811 = vxor.u32 %v1809, 2147483648
      %v1812 = vmul.f32 %v1810, 1.442695
      %v1813 = vpow.pop %v1812
      %v1814 = vmul.f32 %v1811, 1.442695
      %v1815 = vpow.pop %v1814
      %v1816 = vadd.f32 %v1813, 1.0
      %v1817 = vadd.f32 %v1815, 1.0
      %v1818 = vrcp.pop %v1816
      %v1819 = vmul.f32 1.0, %v1818
      %v1820 = vrcp.pop %v1817
      %v1821 = vmul.f32 1.0, %v1820
      %v1822 = vpack.c.bf16 %v1821, %v1819
      %1824 = vrot.lane.b32.xlu0 %v1822, 2
      %v1825 = vpop.permute.xlu0 %1824
      %s1827 = scalar_lea.vmem [#allocation2], 80
      %1828 = vst.msk [vmem:[%s1827] sm:$0xff] %vm450, %v1825
      %s1829 = scalar_lea.vmem %s219, 160
      %v1830 = vld [vmem:[%s1829] sm:$0xf]
      %v1831 = vld [vmem:[%s1829 + $0x4] sm:$0xf]
      %v1832 = vld [vmem:[%s1829 + $0x8] sm:$0xf]
      %v1833 = vld [vmem:[%s1829 + $0xc] sm:$0xf]
      %v1834 = vld [vmem:[%s1829 + $0x10] sm:$0xf]
      %v1835 = vld [vmem:[%s1829 + $0x14] sm:$0xf]
      %v1836 = vld [vmem:[%s1] sm:$0xf]
      %v1837 = vld [vmem:[%s1 + $0x4] sm:$0xf]
      %v1838 = vld [vmem:[%s1 + $0x8] sm:$0xf]
      %v1839 = vld [vmem:[%s1 + $0xc] sm:$0xf]
      %v1840 = vld [vmem:[%s1 + $0x10] sm:$0xf]
      %v1841 = vld [vmem:[%s1 + $0x14] sm:$0xf]
      %v1848 = vunpack.c.l.b16 %v1836
      %v1849 = vunpack.c.l.b16 %v1837
      %v1850 = vunpack.c.l.b16 %v1838
      %v1851 = vunpack.c.l.b16 %v1839
      %v1852 = vunpack.c.l.b16 %v1840
      %v1853 = vunpack.c.l.b16 %v1841
      %v1854 = vpack.c.b16 %v1849, %v1848
      %v1855 = vpack.c.b16 %v1851, %v1850
      %v1856 = vpack.c.b16 %v1853, %v1852
      %v1863 = vunpack.c.l.b16 %v1830
      %v1864 = vunpack.c.l.b16 %v1831
      %v1865 = vunpack.c.l.b16 %v1832
      %v1866 = vunpack.c.l.b16 %v1833
      %v1867 = vunpack.c.l.b16 %v1834
      %v1868 = vunpack.c.l.b16 %v1835
      %v1869 = vpack.c.b16 %v1864, %v1863
      %v1870 = vpack.c.b16 %v1866, %v1865
      %v1871 = vpack.c.b16 %v1868, %v1867
      %v1876 = vsel %vm343, %v1854, 0
      %v1879 = vsel %vm343, %v1855, 0
      %v1882 = vsel %vm343, %v1856, 0
      %1884 = vmatprep.subr.bf16.mxu0 0
      %1885 = vmatpush1.bf16.msra.mxu0 %v1869
      %1886 = vmatprep.subr.bf16.mxu0 0
      %1887 = vmatpush1.bf16.msra.mxu0 %v1870
      %1888 = vmatprep.subr.bf16.mxu0 0
      %1889 = vmatpush1.bf16.msra.mxu0 %v1871
      %1890 = vmatprep.subr.bf16.mxu0 0
      %1891 = vmatpush1.bf16.msra.mxu0 0
      %1892 = vmatprep.subr.bf16.mxu0 0
      %1893 = vmatpush1.bf16.msra.mxu0 0
      %1894 = vmatprep.subr.bf16.mxu0 0
      %1895 = vmatpush1.bf16.msra.mxu0 0
      %1896 = vmatprep.subr.bf16.mxu0 0
      %1897 = vmatpush1.bf16.msra.mxu0 0
      %1898 = vmatprep.subr.bf16.mxu0 0
      %1899 = vmatpush1.bf16.msra.mxu0 0
      %1900 = vmatprep.subr.bf16.mxu0 0
      %1901 = vmatpush1.bf16.msra.mxu0 0
      %1902 = vmatprep.subr.bf16.mxu0 0
      %1903 = vmatpush1.bf16.msra.mxu0 0
      %1904 = vmatprep.subr.bf16.mxu0 0
      %1905 = vmatpush1.bf16.msra.mxu0 0
      %1906 = vmatprep.subr.bf16.mxu0 0
      %1907 = vmatpush1.bf16.msra.mxu0 0
      %1908 = vmatprep.subr.bf16.mxu0 0
      %1909 = vmatpush1.bf16.msra.mxu0 0
      %1910 = vmatprep.subr.bf16.mxu0 0
      %1911 = vmatpush1.bf16.msra.mxu0 0
      %1912 = vmatprep.subr.bf16.mxu0 0
      %1913 = vmatpush1.bf16.msra.mxu0 0
      %1914 = vmatprep.subr.bf16.mxu0 0
      %1915 = vmatpush1.bf16.msra.mxu0 0
      %1916 = vmatprep.mubr.bf16.mxu0 0
      %1917 = vmatmul.mubr.bf16.gmra.mrb[0].mxu0 %v1876
      %v1918 = vpop.f32.mrb[0].mxu0
      %v1919 = vadd.f32 0.0, %v1918
      %v1920 = vpop.f32.mrb[0].mxu0
      %v1921 = vpop.f32.mrb[0].mxu0
      %v1922 = vadd.f32 0.0, %v1921
      %v1923 = vpop.f32.mrb[0].mxu0
      %1924 = vmatprep.mubr.bf16.mxu0 0
      %1925 = vmatmul.mubr.bf16.gmra.mrb[0].mxu0 %v1879
      %v1926 = vpop.f32.mrb[0].mxu0
      %v1927 = vadd.f32 0.0, %v1926
      %v1928 = vpop.f32.mrb[0].mxu0
      %v1929 = vpop.f32.mrb[0].mxu0
      %v1930 = vadd.f32 0.0, %v1929
      %v1931 = vpop.f32.mrb[0].mxu0
      %1932 = vmatprep.mubr.bf16.mxu0 0
      %1933 = vmatmul.mubr.bf16.gmra.mrb[0].mxu0 %v1882
      %v1934 = vpop.f32.mrb[0].mxu0
      %v1935 = vadd.f32 0.0, %v1934
      %v1936 = vpop.f32.mrb[0].mxu0
      %v1937 = vpop.f32.mrb[0].mxu0
      %v1938 = vadd.f32 0.0, %v1937
      %v1939 = vpop.f32.mrb[0].mxu0
      %1940 = vdwg.mxu0
      %v1941 = vadd.f32 %v231, %v1919
      %v1942 = vadd.f32 %v236, %v1922
      %1945 = vrot.lane.b32.xlu0 %v1927, 127
      %v1946 = vpop.permute.xlu0 %1945
      %1947 = vrot.lane.b32.xlu0 %v1930, 127
      %v1948 = vpop.permute.xlu0 %1947
      %v1951 = vadd.f32 %v1941, %v1946
      %v1952 = vadd.f32 %v1942, %v1948
      %1955 = vrot.lane.b32.xlu0 %v1935, 126
      %v1956 = vpop.permute.xlu0 %1955
      %1957 = vrot.lane.b32.xlu0 %v1938, 126
      %v1958 = vpop.permute.xlu0 %1957
      %v1961 = vadd.f32 %v1951, %v1956
      %v1962 = vadd.f32 %v1952, %v1958
      %v1963 = vxor.u32 %v1961, 2147483648
      %v1964 = vxor.u32 %v1962, 2147483648
      %v1965 = vmul.f32 %v1963, 1.442695
      %v1966 = vpow.pop %v1965
      %v1967 = vmul.f32 %v1964, 1.442695
      %v1968 = vpow.pop %v1967
      %v1969 = vadd.f32 %v1966, 1.0
      %v1970 = vadd.f32 %v1968, 1.0
      %v1971 = vrcp.pop %v1969
      %v1972 = vmul.f32 1.0, %v1971
      %v1973 = vrcp.pop %v1970
      %v1974 = vmul.f32 1.0, %v1973
      %v1975 = vpack.c.bf16 %v1974, %v1972
      %1977 = vrot.lane.b32.xlu0 %v1975, 2
      %v1978 = vpop.permute.xlu0 %1977
      %s1980 = scalar_lea.vmem [#allocation2], 88
      %1981 = vst.msk [vmem:[%s1980] sm:$0xff] %vm450, %v1978
      %s1982 = scalar_lea.vmem %s219, 176
      %v1983 = vld [vmem:[%s1982] sm:$0xf]
      %v1984 = vld [vmem:[%s1982 + $0x4] sm:$0xf]
      %v1985 = vld [vmem:[%s1982 + $0x8] sm:$0xf]
      %v1986 = vld [vmem:[%s1982 + $0xc] sm:$0xf]
      %v1987 = vld [vmem:[%s1982 + $0x10] sm:$0xf]
      %v1988 = vld [vmem:[%s1982 + $0x14] sm:$0xf]
      %v1989 = vld [vmem:[%s1] sm:$0xf]
      %v1990 = vld [vmem:[%s1 + $0x4] sm:$0xf]
      %v1991 = vld [vmem:[%s1 + $0x8] sm:$0xf]
      %v1992 = vld [vmem:[%s1 + $0xc] sm:$0xf]
      %v1993 = vld [vmem:[%s1 + $0x10] sm:$0xf]
      %v1994 = vld [vmem:[%s1 + $0x14] sm:$0xf]
      %v2001 = vunpack.c.l.b16 %v1989
      %v2002 = vunpack.c.l.b16 %v1990
      %v2003 = vunpack.c.l.b16 %v1991
      %v2004 = vunpack.c.l.b16 %v1992
      %v2005 = vunpack.c.l.b16 %v1993
      %v2006 = vunpack.c.l.b16 %v1994
      %v2007 = vpack.c.b16 %v2002, %v2001
      %v2008 = vpack.c.b16 %v2004, %v2003
      %v2009 = vpack.c.b16 %v2006, %v2005
      %v2016 = vunpack.c.l.b16 %v1983
      %v2017 = vunpack.c.l.b16 %v1984
      %v2018 = vunpack.c.l.b16 %v1985
      %v2019 = vunpack.c.l.b16 %v1986
      %v2020 = vunpack.c.l.b16 %v1987
      %v2021 = vunpack.c.l.b16 %v1988
      %v2022 = vpack.c.b16 %v2017, %v2016
      %v2023 = vpack.c.b16 %v2019, %v2018
      %v2024 = vpack.c.b16 %v2021, %v2020
      %v2029 = vsel %vm343, %v2007, 0
      %v2032 = vsel %vm343, %v2008, 0
      %v2035 = vsel %vm343, %v2009, 0
      %2037 = vmatprep.subr.bf16.mxu0 0
      %2038 = vmatpush1.bf16.msra.mxu0 %v2022
      %2039 = vmatprep.subr.bf16.mxu0 0
      %2040 = vmatpush1.bf16.msra.mxu0 %v2023
      %2041 = vmatprep.subr.bf16.mxu0 0
      %2042 = vmatpush1.bf16.msra.mxu0 %v2024
      %2043 = vmatprep.subr.bf16.mxu0 0
      %2044 = vmatpush1.bf16.msra.mxu0 0
      %2045 = vmatprep.subr.bf16.mxu0 0
      %2046 = vmatpush1.bf16.msra.mxu0 0
      %2047 = vmatprep.subr.bf16.mxu0 0
      %2048 = vmatpush1.bf16.msra.mxu0 0
      %2049 = vmatprep.subr.bf16.mxu0 0
      %2050 = vmatpush1.bf16.msra.mxu0 0
      %2051 = vmatprep.subr.bf16.mxu0 0
      %2052 = vmatpush1.bf16.msra.mxu0 0
      %2053 = vmatprep.subr.bf16.mxu0 0
      %2054 = vmatpush1.bf16.msra.mxu0 0
      %2055 = vmatprep.subr.bf16.mxu0 0
      %2056 = vmatpush1.bf16.msra.mxu0 0
      %2057 = vmatprep.subr.bf16.mxu0 0
      %2058 = vmatpush1.bf16.msra.mxu0 0
      %2059 = vmatprep.subr.bf16.mxu0 0
      %2060 = vmatpush1.bf16.msra.mxu0 0
      %2061 = vmatprep.subr.bf16.mxu0 0
      %2062 = vmatpush1.bf16.msra.mxu0 0
      %2063 = vmatprep.subr.bf16.mxu0 0
      %2064 = vmatpush1.bf16.msra.mxu0 0
      %2065 = vmatprep.subr.bf16.mxu0 0
      %2066 = vmatpush1.bf16.msra.mxu0 0
      %2067 = vmatprep.subr.bf16.mxu0 0
      %2068 = vmatpush1.bf16.msra.mxu0 0
      %2069 = vmatprep.mubr.bf16.mxu0 0
      %2070 = vmatmul.mubr.bf16.gmra.mrb[0].mxu0 %v2029
      %v2071 = vpop.f32.mrb[0].mxu0
      %v2072 = vadd.f32 0.0, %v2071
      %v2073 = vpop.f32.mrb[0].mxu0
      %v2074 = vpop.f32.mrb[0].mxu0
      %v2075 = vadd.f32 0.0, %v2074
      %v2076 = vpop.f32.mrb[0].mxu0
      %2077 = vmatprep.mubr.bf16.mxu0 0
      %2078 = vmatmul.mubr.bf16.gmra.mrb[0].mxu0 %v2032
      %v2079 = vpop.f32.mrb[0].mxu0
      %v2080 = vadd.f32 0.0, %v2079
      %v2081 = vpop.f32.mrb[0].mxu0
      %v2082 = vpop.f32.mrb[0].mxu0
      %v2083 = vadd.f32 0.0, %v2082
      %v2084 = vpop.f32.mrb[0].mxu0
      %2085 = vmatprep.mubr.bf16.mxu0 0
      %2086 = vmatmul.mubr.bf16.gmra.mrb[0].mxu0 %v2035
      %v2087 = vpop.f32.mrb[0].mxu0
      %v2088 = vadd.f32 0.0, %v2087
      %v2089 = vpop.f32.mrb[0].mxu0
      %v2090 = vpop.f32.mrb[0].mxu0
      %v2091 = vadd.f32 0.0, %v2090
      %v2092 = vpop.f32.mrb[0].mxu0
      %2093 = vdwg.mxu0
      %v2094 = vadd.f32 %v231, %v2072
      %v2095 = vadd.f32 %v236, %v2075
      %2098 = vrot.lane.b32.xlu0 %v2080, 127
      %v2099 = vpop.permute.xlu0 %2098
      %2100 = vrot.lane.b32.xlu0 %v2083, 127
      %v2101 = vpop.permute.xlu0 %2100
      %v2104 = vadd.f32 %v2094, %v2099
      %v2105 = vadd.f32 %v2095, %v2101
      %2108 = vrot.lane.b32.xlu0 %v2088, 126
      %v2109 = vpop.permute.xlu0 %2108
      %2110 = vrot.lane.b32.xlu0 %v2091, 126
      %v2111 = vpop.permute.xlu0 %2110
      %v2114 = vadd.f32 %v2104, %v2109
      %v2115 = vadd.f32 %v2105, %v2111
      %v2116 = vxor.u32 %v2114, 2147483648
      %v2117 = vxor.u32 %v2115, 2147483648
      %v2118 = vmul.f32 %v2116, 1.442695
      %v2119 = vpow.pop %v2118
      %v2120 = vmul.f32 %v2117, 1.442695
      %v2121 = vpow.pop %v2120
      %v2122 = vadd.f32 %v2119, 1.0
      %v2123 = vadd.f32 %v2121, 1.0
      %v2124 = vrcp.pop %v2122
      %v2125 = vmul.f32 1.0, %v2124
      %v2126 = vrcp.pop %v2123
      %v2127 = vmul.f32 1.0, %v2126
      %v2128 = vpack.c.bf16 %v2127, %v2125
      %2130 = vrot.lane.b32.xlu0 %v2128, 2
      %v2131 = vpop.permute.xlu0 %2130
      %s2133 = scalar_lea.vmem [#allocation2], 96
      %2134 = vst.msk [vmem:[%s2133] sm:$0xff] %vm450, %v2131
      %s2135 = scalar_lea.vmem %s219, 192
      %v2136 = vld [vmem:[%s2135] sm:$0xf]
      %v2137 = vld [vmem:[%s2135 + $0x4] sm:$0xf]
      %v2138 = vld [vmem:[%s2135 + $0x8] sm:$0xf]
      %v2139 = vld [vmem:[%s2135 + $0xc] sm:$0xf]
      %v2140 = vld [vmem:[%s2135 + $0x10] sm:$0xf]
      %v2141 = vld [vmem:[%s2135 + $0x14] sm:$0xf]
      %v2142 = vld [vmem:[%s1] sm:$0xf]
      %v2143 = vld [vmem:[%s1 + $0x4] sm:$0xf]
      %v2144 = vld [vmem:[%s1 + $0x8] sm:$0xf]
      %v2145 = vld [vmem:[%s1 + $0xc] sm:$0xf]
      %v2146 = vld [vmem:[%s1 + $0x10] sm:$0xf]
      %v2147 = vld [vmem:[%s1 + $0x14] sm:$0xf]
      %v2154 = vunpack.c.l.b16 %v2142
      %v2155 = vunpack.c.l.b16 %v2143
      %v2156 = vunpack.c.l.b16 %v2144
      %v2157 = vunpack.c.l.b16 %v2145
      %v2158 = vunpack.c.l.b16 %v2146
      %v2159 = vunpack.c.l.b16 %v2147
      %v2160 = vpack.c.b16 %v2155, %v2154
      %v2161 = vpack.c.b16 %v2157, %v2156
      %v2162 = vpack.c.b16 %v2159, %v2158
      %v2169 = vunpack.c.l.b16 %v2136
      %v2170 = vunpack.c.l.b16 %v2137
      %v2171 = vunpack.c.l.b16 %v2138
      %v2172 = vunpack.c.l.b16 %v2139
      %v2173 = vunpack.c.l.b16 %v2140
      %v2174 = vunpack.c.l.b16 %v2141
      %v2175 = vpack.c.b16 %v2170, %v2169
      %v2176 = vpack.c.b16 %v2172, %v2171
      %v2177 = vpack.c.b16 %v2174, %v2173
      %v2182 = vsel %vm343, %v2160, 0
      %v2185 = vsel %vm343, %v2161, 0
      %v2188 = vsel %vm343, %v2162, 0
      %2190 = vmatprep.subr.bf16.mxu0 0
      %2191 = vmatpush1.bf16.msra.mxu0 %v2175
      %2192 = vmatprep.subr.bf16.mxu0 0
      %2193 = vmatpush1.bf16.msra.mxu0 %v2176
      %2194 = vmatprep.subr.bf16.mxu0 0
      %2195 = vmatpush1.bf16.msra.mxu0 %v2177
      %2196 = vmatprep.subr.bf16.mxu0 0
      %2197 = vmatpush1.bf16.msra.mxu0 0
      %2198 = vmatprep.subr.bf16.mxu0 0
      %2199 = vmatpush1.bf16.msra.mxu0 0
      %2200 = vmatprep.subr.bf16.mxu0 0
      %2201 = vmatpush1.bf16.msra.mxu0 0
      %2202 = vmatprep.subr.bf16.mxu0 0
      %2203 = vmatpush1.bf16.msra.mxu0 0
      %2204 = vmatprep.subr.bf16.mxu0 0
      %2205 = vmatpush1.bf16.msra.mxu0 0
      %2206 = vmatprep.subr.bf16.mxu0 0
      %2207 = vmatpush1.bf16.msra.mxu0 0
      %2208 = vmatprep.subr.bf16.mxu0 0
      %2209 = vmatpush1.bf16.msra.mxu0 0
      %2210 = vmatprep.subr.bf16.mxu0 0
      %2211 = vmatpush1.bf16.msra.mxu0 0
      %2212 = vmatprep.subr.bf16.mxu0 0
      %2213 = vmatpush1.bf16.msra.mxu0 0
      %2214 = vmatprep.subr.bf16.mxu0 0
      %2215 = vmatpush1.bf16.msra.mxu0 0
      %2216 = vmatprep.subr.bf16.mxu0 0
      %2217 = vmatpush1.bf16.msra.mxu0 0
      %2218 = vmatprep.subr.bf16.mxu0 0
      %2219 = vmatpush1.bf16.msra.mxu0 0
      %2220 = vmatprep.subr.bf16.mxu0 0
      %2221 = vmatpush1.bf16.msra.mxu0 0
      %2222 = vmatprep.mubr.bf16.mxu0 0
      %2223 = vmatmul.mubr.bf16.gmra.mrb[0].mxu0 %v2182
      %v2224 = vpop.f32.mrb[0].mxu0
      %v2225 = vadd.f32 0.0, %v2224
      %v2226 = vpop.f32.mrb[0].mxu0
      %v2227 = vpop.f32.mrb[0].mxu0
      %v2228 = vadd.f32 0.0, %v2227
      %v2229 = vpop.f32.mrb[0].mxu0
      %2230 = vmatprep.mubr.bf16.mxu0 0
      %2231 = vmatmul.mubr.bf16.gmra.mrb[0].mxu0 %v2185
      %v2232 = vpop.f32.mrb[0].mxu0
      %v2233 = vadd.f32 0.0, %v2232
      %v2234 = vpop.f32.mrb[0].mxu0
      %v2235 = vpop.f32.mrb[0].mxu0
      %v2236 = vadd.f32 0.0, %v2235
      %v2237 = vpop.f32.mrb[0].mxu0
      %2238 = vmatprep.mubr.bf16.mxu0 0
      %2239 = vmatmul.mubr.bf16.gmra.mrb[0].mxu0 %v2188
      %v2240 = vpop.f32.mrb[0].mxu0
      %v2241 = vadd.f32 0.0, %v2240
      %v2242 = vpop.f32.mrb[0].mxu0
      %v2243 = vpop.f32.mrb[0].mxu0
      %v2244 = vadd.f32 0.0, %v2243
      %v2245 = vpop.f32.mrb[0].mxu0
      %2246 = vdwg.mxu0
      %v2247 = vadd.f32 %v231, %v2225
      %v2248 = vadd.f32 %v236, %v2228
      %2251 = vrot.lane.b32.xlu0 %v2233, 127
      %v2252 = vpop.permute.xlu0 %2251
      %2253 = vrot.lane.b32.xlu0 %v2236, 127
      %v2254 = vpop.permute.xlu0 %2253
      %v2257 = vadd.f32 %v2247, %v2252
      %v2258 = vadd.f32 %v2248, %v2254
      %2261 = vrot.lane.b32.xlu0 %v2241, 126
      %v2262 = vpop.permute.xlu0 %2261
      %2263 = vrot.lane.b32.xlu0 %v2244, 126
      %v2264 = vpop.permute.xlu0 %2263
      %v2267 = vadd.f32 %v2257, %v2262
      %v2268 = vadd.f32 %v2258, %v2264
      %v2269 = vxor.u32 %v2267, 2147483648
      %v2270 = vxor.u32 %v2268, 2147483648
      %v2271 = vmul.f32 %v2269, 1.442695
      %v2272 = vpow.pop %v2271
      %v2273 = vmul.f32 %v2270, 1.442695
      %v2274 = vpow.pop %v2273
      %v2275 = vadd.f32 %v2272, 1.0
      %v2276 = vadd.f32 %v2274, 1.0
      %v2277 = vrcp.pop %v2275
      %v2278 = vmul.f32 1.0, %v2277
      %v2279 = vrcp.pop %v2276
      %v2280 = vmul.f32 1.0, %v2279
      %v2281 = vpack.c.bf16 %v2280, %v2278
      %2283 = vrot.lane.b32.xlu0 %v2281, 2
      %v2284 = vpop.permute.xlu0 %2283
      %s2286 = scalar_lea.vmem [#allocation2], 104
      %2287 = vst.msk [vmem:[%s2286] sm:$0xff] %vm450, %v2284
      %s2288 = scalar_lea.vmem %s219, 208
      %v2289 = vld [vmem:[%s2288] sm:$0xf]
      %v2290 = vld [vmem:[%s2288 + $0x4] sm:$0xf]
      %v2291 = vld [vmem:[%s2288 + $0x8] sm:$0xf]
      %v2292 = vld [vmem:[%s2288 + $0xc] sm:$0xf]
      %v2293 = vld [vmem:[%s2288 + $0x10] sm:$0xf]
      %v2294 = vld [vmem:[%s2288 + $0x14] sm:$0xf]
      %v2295 = vld [vmem:[%s1] sm:$0xf]
      %v2296 = vld [vmem:[%s1 + $0x4] sm:$0xf]
      %v2297 = vld [vmem:[%s1 + $0x8] sm:$0xf]
      %v2298 = vld [vmem:[%s1 + $0xc] sm:$0xf]
      %v2299 = vld [vmem:[%s1 + $0x10] sm:$0xf]
      %v2300 = vld [vmem:[%s1 + $0x14] sm:$0xf]
      %v2307 = vunpack.c.l.b16 %v2295
      %v2308 = vunpack.c.l.b16 %v2296
      %v2309 = vunpack.c.l.b16 %v2297
      %v2310 = vunpack.c.l.b16 %v2298
      %v2311 = vunpack.c.l.b16 %v2299
      %v2312 = vunpack.c.l.b16 %v2300
      %v2313 = vpack.c.b16 %v2308, %v2307
      %v2314 = vpack.c.b16 %v2310, %v2309
      %v2315 = vpack.c.b16 %v2312, %v2311
      %v2322 = vunpack.c.l.b16 %v2289
      %v2323 = vunpack.c.l.b16 %v2290
      %v2324 = vunpack.c.l.b16 %v2291
      %v2325 = vunpack.c.l.b16 %v2292
      %v2326 = vunpack.c.l.b16 %v2293
      %v2327 = vunpack.c.l.b16 %v2294
      %v2328 = vpack.c.b16 %v2323, %v2322
      %v2329 = vpack.c.b16 %v2325, %v2324
      %v2330 = vpack.c.b16 %v2327, %v2326
      %v2335 = vsel %vm343, %v2313, 0
      %v2338 = vsel %vm343, %v2314, 0
      %v2341 = vsel %vm343, %v2315, 0
      %2343 = vmatprep.subr.bf16.mxu0 0
      %2344 = vmatpush1.bf16.msra.mxu0 %v2328
      %2345 = vmatprep.subr.bf16.mxu0 0
      %2346 = vmatpush1.bf16.msra.mxu0 %v2329
      %2347 = vmatprep.subr.bf16.mxu0 0
      %2348 = vmatpush1.bf16.msra.mxu0 %v2330
      %2349 = vmatprep.subr.bf16.mxu0 0
      %2350 = vmatpush1.bf16.msra.mxu0 0
      %2351 = vmatprep.subr.bf16.mxu0 0
      %2352 = vmatpush1.bf16.msra.mxu0 0
      %2353 = vmatprep.subr.bf16.mxu0 0
      %2354 = vmatpush1.bf16.msra.mxu0 0
      %2355 = vmatprep.subr.bf16.mxu0 0
      %2356 = vmatpush1.bf16.msra.mxu0 0
      %2357 = vmatprep.subr.bf16.mxu0 0
      %2358 = vmatpush1.bf16.msra.mxu0 0
      %2359 = vmatprep.subr.bf16.mxu0 0
      %2360 = vmatpush1.bf16.msra.mxu0 0
      %2361 = vmatprep.subr.bf16.mxu0 0
      %2362 = vmatpush1.bf16.msra.mxu0 0
      %2363 = vmatprep.subr.bf16.mxu0 0
      %2364 = vmatpush1.bf16.msra.mxu0 0
      %2365 = vmatprep.subr.bf16.mxu0 0
      %2366 = vmatpush1.bf16.msra.mxu0 0
      %2367 = vmatprep.subr.bf16.mxu0 0
      %2368 = vmatpush1.bf16.msra.mxu0 0
      %2369 = vmatprep.subr.bf16.mxu0 0
      %2370 = vmatpush1.bf16.msra.mxu0 0
      %2371 = vmatprep.subr.bf16.mxu0 0
      %2372 = vmatpush1.bf16.msra.mxu0 0
      %2373 = vmatprep.subr.bf16.mxu0 0
      %2374 = vmatpush1.bf16.msra.mxu0 0
      %2375 = vmatprep.mubr.bf16.mxu0 0
      %2376 = vmatmul.mubr.bf16.gmra.mrb[0].mxu0 %v2335
      %v2377 = vpop.f32.mrb[0].mxu0
      %v2378 = vadd.f32 0.0, %v2377
      %v2379 = vpop.f32.mrb[0].mxu0
      %v2380 = vpop.f32.mrb[0].mxu0
      %v2381 = vadd.f32 0.0, %v2380
      %v2382 = vpop.f32.mrb[0].mxu0
      %2383 = vmatprep.mubr.bf16.mxu0 0
      %2384 = vmatmul.mubr.bf16.gmra.mrb[0].mxu0 %v2338
      %v2385 = vpop.f32.mrb[0].mxu0
      %v2386 = vadd.f32 0.0, %v2385
      %v2387 = vpop.f32.mrb[0].mxu0
      %v2388 = vpop.f32.mrb[0].mxu0
      %v2389 = vadd.f32 0.0, %v2388
      %v2390 = vpop.f32.mrb[0].mxu0
      %2391 = vmatprep.mubr.bf16.mxu0 0
      %2392 = vmatmul.mubr.bf16.gmra.mrb[0].mxu0 %v2341
      %v2393 = vpop.f32.mrb[0].mxu0
      %v2394 = vadd.f32 0.0, %v2393
      %v2395 = vpop.f32.mrb[0].mxu0
      %v2396 = vpop.f32.mrb[0].mxu0
      %v2397 = vadd.f32 0.0, %v2396
      %v2398 = vpop.f32.mrb[0].mxu0
      %2399 = vdwg.mxu0
      %v2400 = vadd.f32 %v231, %v2378
      %v2401 = vadd.f32 %v236, %v2381
      %2404 = vrot.lane.b32.xlu0 %v2386, 127
      %v2405 = vpop.permute.xlu0 %2404
      %2406 = vrot.lane.b32.xlu0 %v2389, 127
      %v2407 = vpop.permute.xlu0 %2406
      %v2410 = vadd.f32 %v2400, %v2405
      %v2411 = vadd.f32 %v2401, %v2407
      %2414 = vrot.lane.b32.xlu0 %v2394, 126
      %v2415 = vpop.permute.xlu0 %2414
      %2416 = vrot.lane.b32.xlu0 %v2397, 126
      %v2417 = vpop.permute.xlu0 %2416
      %v2420 = vadd.f32 %v2410, %v2415
      %v2421 = vadd.f32 %v2411, %v2417
      %v2422 = vxor.u32 %v2420, 2147483648
      %v2423 = vxor.u32 %v2421, 2147483648
      %v2424 = vmul.f32 %v2422, 1.442695
      %v2425 = vpow.pop %v2424
      %v2426 = vmul.f32 %v2423, 1.442695
      %v2427 = vpow.pop %v2426
      %v2428 = vadd.f32 %v2425, 1.0
      %v2429 = vadd.f32 %v2427, 1.0
      %v2430 = vrcp.pop %v2428
      %v2431 = vmul.f32 1.0, %v2430
      %v2432 = vrcp.pop %v2429
      %v2433 = vmul.f32 1.0, %v2432
      %v2434 = vpack.c.bf16 %v2433, %v2431
      %2436 = vrot.lane.b32.xlu0 %v2434, 2
      %v2437 = vpop.permute.xlu0 %2436
      %s2439 = scalar_lea.vmem [#allocation2], 112
      %2440 = vst.msk [vmem:[%s2439] sm:$0xff] %vm450, %v2437
      %s2441 = scalar_lea.vmem %s219, 224
      %v2442 = vld [vmem:[%s2441] sm:$0xf]
      %v2443 = vld [vmem:[%s2441 + $0x4] sm:$0xf]
      %v2444 = vld [vmem:[%s2441 + $0x8] sm:$0xf]
      %v2445 = vld [vmem:[%s2441 + $0xc] sm:$0xf]
      %v2446 = vld [vmem:[%s2441 + $0x10] sm:$0xf]
      %v2447 = vld [vmem:[%s2441 + $0x14] sm:$0xf]
      %v2448 = vld [vmem:[%s1] sm:$0xf]
      %v2449 = vld [vmem:[%s1 + $0x4] sm:$0xf]
      %v2450 = vld [vmem:[%s1 + $0x8] sm:$0xf]
      %v2451 = vld [vmem:[%s1 + $0xc] sm:$0xf]
      %v2452 = vld [vmem:[%s1 + $0x10] sm:$0xf]
      %v2453 = vld [vmem:[%s1 + $0x14] sm:$0xf]
      %v2460 = vunpack.c.l.b16 %v2448
      %v2461 = vunpack.c.l.b16 %v2449
      %v2462 = vunpack.c.l.b16 %v2450
      %v2463 = vunpack.c.l.b16 %v2451
      %v2464 = vunpack.c.l.b16 %v2452
      %v2465 = vunpack.c.l.b16 %v2453
      %v2466 = vpack.c.b16 %v2461, %v2460
      %v2467 = vpack.c.b16 %v2463, %v2462
      %v2468 = vpack.c.b16 %v2465, %v2464
      %v2475 = vunpack.c.l.b16 %v2442
      %v2476 = vunpack.c.l.b16 %v2443
      %v2477 = vunpack.c.l.b16 %v2444
      %v2478 = vunpack.c.l.b16 %v2445
      %v2479 = vunpack.c.l.b16 %v2446
      %v2480 = vunpack.c.l.b16 %v2447
      %v2481 = vpack.c.b16 %v2476, %v2475
      %v2482 = vpack.c.b16 %v2478, %v2477
      %v2483 = vpack.c.b16 %v2480, %v2479
      %v2488 = vsel %vm343, %v2466, 0
      %v2491 = vsel %vm343, %v2467, 0
      %v2494 = vsel %vm343, %v2468, 0
      %2496 = vmatprep.subr.bf16.mxu0 0
      %2497 = vmatpush1.bf16.msra.mxu0 %v2481
      %2498 = vmatprep.subr.bf16.mxu0 0
      %2499 = vmatpush1.bf16.msra.mxu0 %v2482
      %2500 = vmatprep.subr.bf16.mxu0 0
      %2501 = vmatpush1.bf16.msra.mxu0 %v2483
      %2502 = vmatprep.subr.bf16.mxu0 0
      %2503 = vmatpush1.bf16.msra.mxu0 0
      %2504 = vmatprep.subr.bf16.mxu0 0
      %2505 = vmatpush1.bf16.msra.mxu0 0
      %2506 = vmatprep.subr.bf16.mxu0 0
      %2507 = vmatpush1.bf16.msra.mxu0 0
      %2508 = vmatprep.subr.bf16.mxu0 0
      %2509 = vmatpush1.bf16.msra.mxu0 0
      %2510 = vmatprep.subr.bf16.mxu0 0
      %2511 = vmatpush1.bf16.msra.mxu0 0
      %2512 = vmatprep.subr.bf16.mxu0 0
      %2513 = vmatpush1.bf16.msra.mxu0 0
      %2514 = vmatprep.subr.bf16.mxu0 0
      %2515 = vmatpush1.bf16.msra.mxu0 0
      %2516 = vmatprep.subr.bf16.mxu0 0
      %2517 = vmatpush1.bf16.msra.mxu0 0
      %2518 = vmatprep.subr.bf16.mxu0 0
      %2519 = vmatpush1.bf16.msra.mxu0 0
      %2520 = vmatprep.subr.bf16.mxu0 0
      %2521 = vmatpush1.bf16.msra.mxu0 0
      %2522 = vmatprep.subr.bf16.mxu0 0
      %2523 = vmatpush1.bf16.msra.mxu0 0
      %2524 = vmatprep.subr.bf16.mxu0 0
      %2525 = vmatpush1.bf16.msra.mxu0 0
      %2526 = vmatprep.subr.bf16.mxu0 0
      %2527 = vmatpush1.bf16.msra.mxu0 0
      %2528 = vmatprep.mubr.bf16.mxu0 0
      %2529 = vmatmul.mubr.bf16.gmra.mrb[0].mxu0 %v2488
      %v2530 = vpop.f32.mrb[0].mxu0
      %v2531 = vadd.f32 0.0, %v2530
      %v2532 = vpop.f32.mrb[0].mxu0
      %v2533 = vpop.f32.mrb[0].mxu0
      %v2534 = vadd.f32 0.0, %v2533
      %v2535 = vpop.f32.mrb[0].mxu0
      %2536 = vmatprep.mubr.bf16.mxu0 0
      %2537 = vmatmul.mubr.bf16.gmra.mrb[0].mxu0 %v2491
      %v2538 = vpop.f32.mrb[0].mxu0
      %v2539 = vadd.f32 0.0, %v2538
      %v2540 = vpop.f32.mrb[0].mxu0
      %v2541 = vpop.f32.mrb[0].mxu0
      %v2542 = vadd.f32 0.0, %v2541
      %v2543 = vpop.f32.mrb[0].mxu0
      %2544 = vmatprep.mubr.bf16.mxu0 0
      %2545 = vmatmul.mubr.bf16.gmra.mrb[0].mxu0 %v2494
      %v2546 = vpop.f32.mrb[0].mxu0
      %v2547 = vadd.f32 0.0, %v2546
      %v2548 = vpop.f32.mrb[0].mxu0
      %v2549 = vpop.f32.mrb[0].mxu0
      %v2550 = vadd.f32 0.0, %v2549
      %v2551 = vpop.f32.mrb[0].mxu0
      %2552 = vdwg.mxu0
      %v2553 = vadd.f32 %v231, %v2531
      %v2554 = vadd.f32 %v236, %v2534
      %2557 = vrot.lane.b32.xlu0 %v2539, 127
      %v2558 = vpop.permute.xlu0 %2557
      %2559 = vrot.lane.b32.xlu0 %v2542, 127
      %v2560 = vpop.permute.xlu0 %2559
      %v2563 = vadd.f32 %v2553, %v2558
      %v2564 = vadd.f32 %v2554, %v2560
      %2567 = vrot.lane.b32.xlu0 %v2547, 126
      %v2568 = vpop.permute.xlu0 %2567
      %2569 = vrot.lane.b32.xlu0 %v2550, 126
      %v2570 = vpop.permute.xlu0 %2569
      %v2573 = vadd.f32 %v2563, %v2568
      %v2574 = vadd.f32 %v2564, %v2570
      %v2575 = vxor.u32 %v2573, 2147483648
      %v2576 = vxor.u32 %v2574, 2147483648
      %v2577 = vmul.f32 %v2575, 1.442695
      %v2578 = vpow.pop %v2577
      %v2579 = vmul.f32 %v2576, 1.442695
      %v2580 = vpow.pop %v2579
      %v2581 = vadd.f32 %v2578, 1.0
      %v2582 = vadd.f32 %v2580, 1.0
      %v2583 = vrcp.pop %v2581
      %v2584 = vmul.f32 1.0, %v2583
      %v2585 = vrcp.pop %v2582
      %v2586 = vmul.f32 1.0, %v2585
      %v2587 = vpack.c.bf16 %v2586, %v2584
      %2589 = vrot.lane.b32.xlu0 %v2587, 2
      %v2590 = vpop.permute.xlu0 %2589
      %s2592 = scalar_lea.vmem [#allocation2], 120
      %2593 = vst.msk [vmem:[%s2592] sm:$0xff] %vm450, %v2590
      %s2594 = scalar_lea.vmem %s219, 240
      %v2595 = vld [vmem:[%s2594] sm:$0xf]
      %v2596 = vld [vmem:[%s2594 + $0x4] sm:$0xf]
      %v2597 = vld [vmem:[%s2594 + $0x8] sm:$0xf]
      %v2598 = vld [vmem:[%s2594 + $0xc] sm:$0xf]
      %v2599 = vld [vmem:[%s2594 + $0x10] sm:$0xf]
      %v2600 = vld [vmem:[%s2594 + $0x14] sm:$0xf]
      %v2601 = vld [vmem:[%s1] sm:$0xf]
      %v2602 = vld [vmem:[%s1 + $0x4] sm:$0xf]
      %v2603 = vld [vmem:[%s1 + $0x8] sm:$0xf]
      %v2604 = vld [vmem:[%s1 + $0xc] sm:$0xf]
      %v2605 = vld [vmem:[%s1 + $0x10] sm:$0xf]
      %v2606 = vld [vmem:[%s1 + $0x14] sm:$0xf]
      %v2613 = vunpack.c.l.b16 %v2601
      %v2614 = vunpack.c.l.b16 %v2602
      %v2615 = vunpack.c.l.b16 %v2603
      %v2616 = vunpack.c.l.b16 %v2604
      %v2617 = vunpack.c.l.b16 %v2605
      %v2618 = vunpack.c.l.b16 %v2606
      %v2619 = vpack.c.b16 %v2614, %v2613
      %v2620 = vpack.c.b16 %v2616, %v2615
      %v2621 = vpack.c.b16 %v2618, %v2617
      %v2628 = vunpack.c.l.b16 %v2595
      %v2629 = vunpack.c.l.b16 %v2596
      %v2630 = vunpack.c.l.b16 %v2597
      %v2631 = vunpack.c.l.b16 %v2598
      %v2632 = vunpack.c.l.b16 %v2599
      %v2633 = vunpack.c.l.b16 %v2600
      %v2634 = vpack.c.b16 %v2629, %v2628
      %v2635 = vpack.c.b16 %v2631, %v2630
      %v2636 = vpack.c.b16 %v2633, %v2632
      %v2641 = vsel %vm343, %v2619, 0
      %v2644 = vsel %vm343, %v2620, 0
      %v2647 = vsel %vm343, %v2621, 0
      %2649 = vmatprep.subr.bf16.mxu0 0
      %2650 = vmatpush1.bf16.msra.mxu0 %v2634
      %2651 = vmatprep.subr.bf16.mxu0 0
      %2652 = vmatpush1.bf16.msra.mxu0 %v2635
      %2653 = vmatprep.subr.bf16.mxu0 0
      %2654 = vmatpush1.bf16.msra.mxu0 %v2636
      %2655 = vmatprep.subr.bf16.mxu0 0
      %2656 = vmatpush1.bf16.msra.mxu0 0
      %2657 = vmatprep.subr.bf16.mxu0 0
      %2658 = vmatpush1.bf16.msra.mxu0 0
      %2659 = vmatprep.subr.bf16.mxu0 0
      %2660 = vmatpush1.bf16.msra.mxu0 0
      %2661 = vmatprep.subr.bf16.mxu0 0
      %2662 = vmatpush1.bf16.msra.mxu0 0
      %2663 = vmatprep.subr.bf16.mxu0 0
      %2664 = vmatpush1.bf16.msra.mxu0 0
      %2665 = vmatprep.subr.bf16.mxu0 0
      %2666 = vmatpush1.bf16.msra.mxu0 0
      %2667 = vmatprep.subr.bf16.mxu0 0
      %2668 = vmatpush1.bf16.msra.mxu0 0
      %2669 = vmatprep.subr.bf16.mxu0 0
      %2670 = vmatpush1.bf16.msra.mxu0 0
      %2671 = vmatprep.subr.bf16.mxu0 0
      %2672 = vmatpush1.bf16.msra.mxu0 0
      %2673 = vmatprep.subr.bf16.mxu0 0
      %2674 = vmatpush1.bf16.msra.mxu0 0
      %2675 = vmatprep.subr.bf16.mxu0 0
      %2676 = vmatpush1.bf16.msra.mxu0 0
      %2677 = vmatprep.subr.bf16.mxu0 0
      %2678 = vmatpush1.bf16.msra.mxu0 0
      %2679 = vmatprep.subr.bf16.mxu0 0
      %2680 = vmatpush1.bf16.msra.mxu0 0
      %2681 = vmatprep.mubr.bf16.mxu0 0
      %2682 = vmatmul.mubr.bf16.gmra.mrb[0].mxu0 %v2641
      %v2683 = vpop.f32.mrb[0].mxu0
      %v2684 = vadd.f32 0.0, %v2683
      %v2685 = vpop.f32.mrb[0].mxu0
      %v2686 = vpop.f32.mrb[0].mxu0
      %v2687 = vadd.f32 0.0, %v2686
      %v2688 = vpop.f32.mrb[0].mxu0
      %2689 = vmatprep.mubr.bf16.mxu0 0
      %2690 = vmatmul.mubr.bf16.gmra.mrb[0].mxu0 %v2644
      %v2691 = vpop.f32.mrb[0].mxu0
      %v2692 = vadd.f32 0.0, %v2691
      %v2693 = vpop.f32.mrb[0].mxu0
      %v2694 = vpop.f32.mrb[0].mxu0
      %v2695 = vadd.f32 0.0, %v2694
      %v2696 = vpop.f32.mrb[0].mxu0
      %2697 = vmatprep.mubr.bf16.mxu0 0
      %2698 = vmatmul.mubr.bf16.gmra.mrb[0].mxu0 %v2647
      %v2699 = vpop.f32.mrb[0].mxu0
      %v2700 = vadd.f32 0.0, %v2699
      %v2701 = vpop.f32.mrb[0].mxu0
      %v2702 = vpop.f32.mrb[0].mxu0
      %v2703 = vadd.f32 0.0, %v2702
      %v2704 = vpop.f32.mrb[0].mxu0
      %2705 = vdwg.mxu0
      %v2706 = vadd.f32 %v231, %v2684
      %v2707 = vadd.f32 %v236, %v2687
      %2710 = vrot.lane.b32.xlu0 %v2692, 127
      %v2711 = vpop.permute.xlu0 %2710
      %2712 = vrot.lane.b32.xlu0 %v2695, 127
      %v2713 = vpop.permute.xlu0 %2712
      %v2716 = vadd.f32 %v2706, %v2711
      %v2717 = vadd.f32 %v2707, %v2713
      %2720 = vrot.lane.b32.xlu0 %v2700, 126
      %v2721 = vpop.permute.xlu0 %2720
      %2722 = vrot.lane.b32.xlu0 %v2703, 126
      %v2723 = vpop.permute.xlu0 %2722
      %v2726 = vadd.f32 %v2716, %v2721
      %v2727 = vadd.f32 %v2717, %v2723
      %v2728 = vxor.u32 %v2726, 2147483648
      %v2729 = vxor.u32 %v2727, 2147483648
      %v2730 = vmul.f32 %v2728, 1.442695
      %v2731 = vpow.pop %v2730
      %v2732 = vmul.f32 %v2729, 1.442695
      %v2733 = vpow.pop %v2732
      %v2734 = vadd.f32 %v2731, 1.0
      %v2735 = vadd.f32 %v2733, 1.0
      %v2736 = vrcp.pop %v2734
      %v2737 = vmul.f32 1.0, %v2736
      %v2738 = vrcp.pop %v2735
      %v2739 = vmul.f32 1.0, %v2738
      %v2740 = vpack.c.bf16 %v2739, %v2737
      %2742 = vrot.lane.b32.xlu0 %v2740, 2
      %v2743 = vpop.permute.xlu0 %2742
      %s2745 = scalar_lea.vmem [#allocation2], 128
      %2746 = vst.msk [vmem:[%s2745] sm:$0xff] %vm450, %v2743
      %s2747 = scalar_lea.vmem %s219, 256
      %v2748 = vld [vmem:[%s2747] sm:$0xf]
      %v2749 = vld [vmem:[%s2747 + $0x4] sm:$0xf]
      %v2750 = vld [vmem:[%s2747 + $0x8] sm:$0xf]
      %v2751 = vld [vmem:[%s2747 + $0xc] sm:$0xf]
      %v2752 = vld [vmem:[%s2747 + $0x10] sm:$0xf]
      %v2753 = vld [vmem:[%s2747 + $0x14] sm:$0xf]
      %v2754 = vld [vmem:[%s1] sm:$0xf]
      %v2755 = vld [vmem:[%s1 + $0x4] sm:$0xf]
      %v2756 = vld [vmem:[%s1 + $0x8] sm:$0xf]
      %v2757 = vld [vmem:[%s1 + $0xc] sm:$0xf]
      %v2758 = vld [vmem:[%s1 + $0x10] sm:$0xf]
      %v2759 = vld [vmem:[%s1 + $0x14] sm:$0xf]
      %v2766 = vunpack.c.l.b16 %v2754
      %v2767 = vunpack.c.l.b16 %v2755
      %v2768 = vunpack.c.l.b16 %v2756
      %v2769 = vunpack.c.l.b16 %v2757
      %v2770 = vunpack.c.l.b16 %v2758
      %v2771 = vunpack.c.l.b16 %v2759
      %v2772 = vpack.c.b16 %v2767, %v2766
      %v2773 = vpack.c.b16 %v2769, %v2768
      %v2774 = vpack.c.b16 %v2771, %v2770
      %v2781 = vunpack.c.l.b16 %v2748
      %v2782 = vunpack.c.l.b16 %v2749
      %v2783 = vunpack.c.l.b16 %v2750
      %v2784 = vunpack.c.l.b16 %v2751
      %v2785 = vunpack.c.l.b16 %v2752
      %v2786 = vunpack.c.l.b16 %v2753
      %v2787 = vpack.c.b16 %v2782, %v2781
      %v2788 = vpack.c.b16 %v2784, %v2783
      %v2789 = vpack.c.b16 %v2786, %v2785
      %v2794 = vsel %vm343, %v2772, 0
      %v2797 = vsel %vm343, %v2773, 0
      %v2800 = vsel %vm343, %v2774, 0
      %2802 = vmatprep.subr.bf16.mxu0 0
      %2803 = vmatpush1.bf16.msra.mxu0 %v2787
      %2804 = vmatprep.subr.bf16.mxu0 0
      %2805 = vmatpush1.bf16.msra.mxu0 %v2788
      %2806 = vmatprep.subr.bf16.mxu0 0
      %2807 = vmatpush1.bf16.msra.mxu0 %v2789
      %2808 = vmatprep.subr.bf16.mxu0 0
      %2809 = vmatpush1.bf16.msra.mxu0 0
      %2810 = vmatprep.subr.bf16.mxu0 0
      %2811 = vmatpush1.bf16.msra.mxu0 0
      %2812 = vmatprep.subr.bf16.mxu0 0
      %2813 = vmatpush1.bf16.msra.mxu0 0
      %2814 = vmatprep.subr.bf16.mxu0 0
      %2815 = vmatpush1.bf16.msra.mxu0 0
      %2816 = vmatprep.subr.bf16.mxu0 0
      %2817 = vmatpush1.bf16.msra.mxu0 0
      %2818 = vmatprep.subr.bf16.mxu0 0
      %2819 = vmatpush1.bf16.msra.mxu0 0
      %2820 = vmatprep.subr.bf16.mxu0 0
      %2821 = vmatpush1.bf16.msra.mxu0 0
      %2822 = vmatprep.subr.bf16.mxu0 0
      %2823 = vmatpush1.bf16.msra.mxu0 0
      %2824 = vmatprep.subr.bf16.mxu0 0
      %2825 = vmatpush1.bf16.msra.mxu0 0
      %2826 = vmatprep.subr.bf16.mxu0 0
      %2827 = vmatpush1.bf16.msra.mxu0 0
      %2828 = vmatprep.subr.bf16.mxu0 0
      %2829 = vmatpush1.bf16.msra.mxu0 0
      %2830 = vmatprep.subr.bf16.mxu0 0
      %2831 = vmatpush1.bf16.msra.mxu0 0
      %2832 = vmatprep.subr.bf16.mxu0 0
      %2833 = vmatpush1.bf16.msra.mxu0 0
      %2834 = vmatprep.mubr.bf16.mxu0 0
      %2835 = vmatmul.mubr.bf16.gmra.mrb[0].mxu0 %v2794
      %v2836 = vpop.f32.mrb[0].mxu0
      %v2837 = vadd.f32 0.0, %v2836
      %v2838 = vpop.f32.mrb[0].mxu0
      %v2839 = vpop.f32.mrb[0].mxu0
      %v2840 = vadd.f32 0.0, %v2839
      %v2841 = vpop.f32.mrb[0].mxu0
      %2842 = vmatprep.mubr.bf16.mxu0 0
      %2843 = vmatmul.mubr.bf16.gmra.mrb[0].mxu0 %v2797
      %v2844 = vpop.f32.mrb[0].mxu0
      %v2845 = vadd.f32 0.0, %v2844
      %v2846 = vpop.f32.mrb[0].mxu0
      %v2847 = vpop.f32.mrb[0].mxu0
      %v2848 = vadd.f32 0.0, %v2847
      %v2849 = vpop.f32.mrb[0].mxu0
      %2850 = vmatprep.mubr.bf16.mxu0 0
      %2851 = vmatmul.mubr.bf16.gmra.mrb[0].mxu0 %v2800
      %v2852 = vpop.f32.mrb[0].mxu0
      %v2853 = vadd.f32 0.0, %v2852
      %v2854 = vpop.f32.mrb[0].mxu0
      %v2855 = vpop.f32.mrb[0].mxu0
      %v2856 = vadd.f32 0.0, %v2855
      %v2857 = vpop.f32.mrb[0].mxu0
      %2858 = vdwg.mxu0
      %v2859 = vadd.f32 %v231, %v2837
      %v2860 = vadd.f32 %v236, %v2840
      %2863 = vrot.lane.b32.xlu0 %v2845, 127
      %v2864 = vpop.permute.xlu0 %2863
      %2865 = vrot.lane.b32.xlu0 %v2848, 127
      %v2866 = vpop.permute.xlu0 %2865
      %v2869 = vadd.f32 %v2859, %v2864
      %v2870 = vadd.f32 %v2860, %v2866
      %2873 = vrot.lane.b32.xlu0 %v2853, 126
      %v2874 = vpop.permute.xlu0 %2873
      %2875 = vrot.lane.b32.xlu0 %v2856, 126
      %v2876 = vpop.permute.xlu0 %2875
      %v2879 = vadd.f32 %v2869, %v2874
      %v2880 = vadd.f32 %v2870, %v2876
      %v2881 = vxor.u32 %v2879, 2147483648
      %v2882 = vxor.u32 %v2880, 2147483648
      %v2883 = vmul.f32 %v2881, 1.442695
      %v2884 = vpow.pop %v2883
      %v2885 = vmul.f32 %v2882, 1.442695
      %v2886 = vpow.pop %v2885
      %v2887 = vadd.f32 %v2884, 1.0
      %v2888 = vadd.f32 %v2886, 1.0
      %v2889 = vrcp.pop %v2887
      %v2890 = vmul.f32 1.0, %v2889
      %v2891 = vrcp.pop %v2888
      %v2892 = vmul.f32 1.0, %v2891
      %v2893 = vpack.c.bf16 %v2892, %v2890
      %2895 = vrot.lane.b32.xlu0 %v2893, 2
      %v2896 = vpop.permute.xlu0 %2895
      %s2898 = scalar_lea.vmem [#allocation2], 136
      %2899 = vst.msk [vmem:[%s2898] sm:$0xff] %vm450, %v2896
      %v2900 = vld [vmem:[#allocation2] sm:$0xff]
      %v2901 = vld [vmem:[#allocation2 + $0x8] sm:$0xff]
      %v2902 = vld [vmem:[#allocation2 + $0x10] sm:$0xff]
      %v2903 = vld [vmem:[#allocation2 + $0x18] sm:$0xff]
      %v2904 = vld [vmem:[#allocation2 + $0x20] sm:$0xff]
      %v2905 = vld [vmem:[%s2] sm:$0xf]
      %v2906 = vld [vmem:[%s2 + $0x4] sm:$0xf]
      %v2907 = vld [vmem:[%s2 + $0x8] sm:$0xf]
      %v2908 = vld [vmem:[%s2 + $0xc] sm:$0xf]
      %v2909 = vld [vmem:[%s2 + $0x10] sm:$0xf]
      %v2910 = vld [vmem:[%s2 + $0x14] sm:$0xf]
      %v2911 = vld [vmem:[%s2 + $0x18] sm:$0xf]
      %v2912 = vld [vmem:[%s2 + $0x1c] sm:$0xf]
      %v2913 = vld [vmem:[%s2 + $0x20] sm:$0xf]
      %v2914 = vld [vmem:[%s2 + $0x24] sm:$0xf]
      %v2925 = vunpack.c.l.b16 %v2905
      %v2926 = vunpack.c.l.b16 %v2906
      %v2927 = vunpack.c.l.b16 %v2907
      %v2928 = vunpack.c.l.b16 %v2908
      %v2929 = vunpack.c.l.b16 %v2909
      %v2930 = vunpack.c.l.b16 %v2910
      %v2931 = vunpack.c.l.b16 %v2911
      %v2932 = vunpack.c.l.b16 %v2912
      %v2933 = vunpack.c.l.b16 %v2913
      %v2934 = vunpack.c.l.b16 %v2914
      %v2935 = vpack.c.b16 %v2926, %v2925
      %v2936 = vpack.c.b16 %v2928, %v2927
      %v2937 = vpack.c.b16 %v2930, %v2929
      %v2938 = vpack.c.b16 %v2932, %v2931
      %v2939 = vpack.c.b16 %v2934, %v2933
      %vm2940 = vcmask 654336
      %v2942 = vsel %vm2940, %v2935, 0
      %v2945 = vsel %vm2940, %v2936, 0
      %v2948 = vsel %vm2940, %v2937, 0
      %v2951 = vsel %vm2940, %v2938, 0
      %v2954 = vsel %vm2940, %v2939, 0
      %2956 = vmatprep.subr.bf16.mxu0 0
      %2957 = vmatpush1.bf16.msra.mxu0 %v2900
      %2958 = vmatprep.subr.bf16.mxu0 0
      %2959 = vmatpush1.bf16.msra.mxu0 %v2901
      %2960 = vmatprep.subr.bf16.mxu0 0
      %2961 = vmatpush1.bf16.msra.mxu0 %v2902
      %2962 = vmatprep.subr.bf16.mxu0 0
      %2963 = vmatpush1.bf16.msra.mxu0 %v2903
      %2964 = vmatprep.subr.bf16.mxu0 0
      %2965 = vmatpush1.bf16.msra.mxu0 %v2904
      %2966 = vmatprep.subr.bf16.mxu0 0
      %2967 = vmatpush1.bf16.msra.mxu0 0
      %2968 = vmatprep.subr.bf16.mxu0 0
      %2969 = vmatpush1.bf16.msra.mxu0 0
      %2970 = vmatprep.subr.bf16.mxu0 0
      %2971 = vmatpush1.bf16.msra.mxu0 0
      %2972 = vmatprep.subr.bf16.mxu0 0
      %2973 = vmatpush1.bf16.msra.mxu0 0
      %2974 = vmatprep.subr.bf16.mxu0 0
      %2975 = vmatpush1.bf16.msra.mxu0 0
      %2976 = vmatprep.subr.bf16.mxu0 0
      %2977 = vmatpush1.bf16.msra.mxu0 0
      %2978 = vmatprep.subr.bf16.mxu0 0
      %2979 = vmatpush1.bf16.msra.mxu0 0
      %2980 = vmatprep.subr.bf16.mxu0 0
      %2981 = vmatpush1.bf16.msra.mxu0 0
      %2982 = vmatprep.subr.bf16.mxu0 0
      %2983 = vmatpush1.bf16.msra.mxu0 0
      %2984 = vmatprep.subr.bf16.mxu0 0
      %2985 = vmatpush1.bf16.msra.mxu0 0
      %2986 = vmatprep.subr.bf16.mxu0 0
      %2987 = vmatpush1.bf16.msra.mxu0 0
      %2988 = vmatprep.mubr.bf16.mxu0 0
      %2989 = vmatmul.mubr.bf16.gmra.mrb[0].mxu0 %v2942
      %v2990 = vpop.f32.mrb[0].mxu0
      %v2991 = vadd.f32 0.0, %v2990
      %v2992 = vpop.f32.mrb[0].mxu0
      %v2993 = vpop.f32.mrb[0].mxu0
      %v2994 = vadd.f32 0.0, %v2993
      %v2995 = vpop.f32.mrb[0].mxu0
      %2996 = vmatprep.mubr.bf16.mxu0 0
      %2997 = vmatmul.mubr.bf16.gmra.mrb[0].mxu0 %v2945
      %v2998 = vpop.f32.mrb[0].mxu0
      %v2999 = vadd.f32 0.0, %v2998
      %v3000 = vpop.f32.mrb[0].mxu0
      %v3001 = vpop.f32.mrb[0].mxu0
      %v3002 = vadd.f32 0.0, %v3001
      %v3003 = vpop.f32.mrb[0].mxu0
      %3004 = vmatprep.mubr.bf16.mxu0 0
      %3005 = vmatmul.mubr.bf16.gmra.mrb[0].mxu0 %v2948
      %v3006 = vpop.f32.mrb[0].mxu0
      %v3007 = vadd.f32 0.0, %v3006
      %v3008 = vpop.f32.mrb[0].mxu0
      %v3009 = vpop.f32.mrb[0].mxu0
      %v3010 = vadd.f32 0.0, %v3009
      %v3011 = vpop.f32.mrb[0].mxu0
      %3012 = vmatprep.mubr.bf16.mxu0 0
      %3013 = vmatmul.mubr.bf16.gmra.mrb[0].mxu0 %v2951
      %v3014 = vpop.f32.mrb[0].mxu0
      %v3015 = vadd.f32 0.0, %v3014
      %v3016 = vpop.f32.mrb[0].mxu0
      %v3017 = vpop.f32.mrb[0].mxu0
      %v3018 = vadd.f32 0.0, %v3017
      %v3019 = vpop.f32.mrb[0].mxu0
      %3020 = vmatprep.mubr.bf16.mxu0 0
      %3021 = vmatmul.mubr.bf16.gmra.mrb[0].mxu0 %v2954
      %v3022 = vpop.f32.mrb[0].mxu0
      %v3023 = vadd.f32 0.0, %v3022
      %v3024 = vpop.f32.mrb[0].mxu0
      %v3025 = vpop.f32.mrb[0].mxu0
      %v3026 = vadd.f32 0.0, %v3025
      %v3027 = vpop.f32.mrb[0].mxu0
      %3028 = vdwg.mxu0
      %v3029 = vadd.f32 %v240, %v2991
      %v3030 = vadd.f32 %v244, %v2994
      %3033 = vrot.lane.b32.xlu0 %v2999, 127
      %v3034 = vpop.permute.xlu0 %3033
      %3035 = vrot.lane.b32.xlu0 %v3002, 127
      %v3036 = vpop.permute.xlu0 %3035
      %v3039 = vadd.f32 %v3029, %v3034
      %v3040 = vadd.f32 %v3030, %v3036
      %3043 = vrot.lane.b32.xlu0 %v3007, 126
      %v3044 = vpop.permute.xlu0 %3043
      %3045 = vrot.lane.b32.xlu0 %v3010, 126
      %v3046 = vpop.permute.xlu0 %3045
      %v3049 = vadd.f32 %v3039, %v3044
      %v3050 = vadd.f32 %v3040, %v3046
      %3053 = vrot.lane.b32.xlu0 %v3015, 125
      %v3054 = vpop.permute.xlu0 %3053
      %3055 = vrot.lane.b32.xlu0 %v3018, 125
      %v3056 = vpop.permute.xlu0 %3055
      %v3059 = vadd.f32 %v3049, %v3054
      %v3060 = vadd.f32 %v3050, %v3056
      %3063 = vrot.lane.b32.xlu0 %v3023, 124
      %v3064 = vpop.permute.xlu0 %3063
      %3065 = vrot.lane.b32.xlu0 %v3026, 124
      %v3066 = vpop.permute.xlu0 %3065
      %v3069 = vadd.f32 %v3059, %v3064
      %v3070 = vadd.f32 %v3060, %v3066
      %v3071 = vxor.u32 %v3069, 2147483648
      %v3072 = vxor.u32 %v3070, 2147483648
      %v3073 = vmul.f32 %v3071, 1.442695
      %v3074 = vpow.pop %v3073
      %v3075 = vmul.f32 %v3072, 1.442695
      %v3076 = vpow.pop %v3075
      %v3077 = vadd.f32 %v3074, 1.0
      %v3078 = vadd.f32 %v3076, 1.0
      %v3079 = vrcp.pop %v3077
      %v3080 = vmul.f32 1.0, %v3079
      %v3081 = vrcp.pop %v3078
      %v3082 = vmul.f32 1.0, %v3081
      %v3083 = vpack.c.bf16 %v3082, %v3080
      %vm3084 = vcmask 162816
      %3085 = vst.msk [vmem:[#allocation3] sm:$0xff] %vm3084, %v3083
      %v3086 = vld [vmem:[%s603] sm:$0xff]
      %v3087 = vld [vmem:[%s603 + $0x8] sm:$0xff]
      %v3088 = vld [vmem:[%s603 + $0x10] sm:$0xff]
      %v3089 = vld [vmem:[%s603 + $0x18] sm:$0xff]
      %v3090 = vld [vmem:[%s603 + $0x20] sm:$0xff]
      %v3091 = vld [vmem:[%s2] sm:$0xf]
      %v3092 = vld [vmem:[%s2 + $0x4] sm:$0xf]
      %v3093 = vld [vmem:[%s2 + $0x8] sm:$0xf]
      %v3094 = vld [vmem:[%s2 + $0xc] sm:$0xf]
      %v3095 = vld [vmem:[%s2 + $0x10] sm:$0xf]
      %v3096 = vld [vmem:[%s2 + $0x14] sm:$0xf]
      %v3097 = vld [vmem:[%s2 + $0x18] sm:$0xf]
      %v3098 = vld [vmem:[%s2 + $0x1c] sm:$0xf]
      %v3099 = vld [vmem:[%s2 + $0x20] sm:$0xf]
      %v3100 = vld [vmem:[%s2 + $0x24] sm:$0xf]
      %v3111 = vunpack.c.l.b16 %v3091
      %v3112 = vunpack.c.l.b16 %v3092
      %v3113 = vunpack.c.l.b16 %v3093
      %v3114 = vunpack.c.l.b16 %v3094
      %v3115 = vunpack.c.l.b16 %v3095
      %v3116 = vunpack.c.l.b16 %v3096
      %v3117 = vunpack.c.l.b16 %v3097
      %v3118 = vunpack.c.l.b16 %v3098
      %v3119 = vunpack.c.l.b16 %v3099
      %v3120 = vunpack.c.l.b16 %v3100
      %v3121 = vpack.c.b16 %v3112, %v3111
      %v3122 = vpack.c.b16 %v3114, %v3113
      %v3123 = vpack.c.b16 %v3116, %v3115
      %v3124 = vpack.c.b16 %v3118, %v3117
      %v3125 = vpack.c.b16 %v3120, %v3119
      %v3127 = vsel %vm2940, %v3121, 0
      %v3130 = vsel %vm2940, %v3122, 0
      %v3133 = vsel %vm2940, %v3123, 0
      %v3136 = vsel %vm2940, %v3124, 0
      %v3139 = vsel %vm2940, %v3125, 0
      %3141 = vmatprep.subr.bf16.mxu0 0
      %3142 = vmatpush1.bf16.msra.mxu0 %v3086
      %3143 = vmatprep.subr.bf16.mxu0 0
      %3144 = vmatpush1.bf16.msra.mxu0 %v3087
      %3145 = vmatprep.subr.bf16.mxu0 0
      %3146 = vmatpush1.bf16.msra.mxu0 %v3088
      %3147 = vmatprep.subr.bf16.mxu0 0
      %3148 = vmatpush1.bf16.msra.mxu0 %v3089
      %3149 = vmatprep.subr.bf16.mxu0 0
      %3150 = vmatpush1.bf16.msra.mxu0 %v3090
      %3151 = vmatprep.subr.bf16.mxu0 0
      %3152 = vmatpush1.bf16.msra.mxu0 0
      %3153 = vmatprep.subr.bf16.mxu0 0
      %3154 = vmatpush1.bf16.msra.mxu0 0
      %3155 = vmatprep.subr.bf16.mxu0 0
      %3156 = vmatpush1.bf16.msra.mxu0 0
      %3157 = vmatprep.subr.bf16.mxu0 0
      %3158 = vmatpush1.bf16.msra.mxu0 0
      %3159 = vmatprep.subr.bf16.mxu0 0
      %3160 = vmatpush1.bf16.msra.mxu0 0
      %3161 = vmatprep.subr.bf16.mxu0 0
      %3162 = vmatpush1.bf16.msra.mxu0 0
      %3163 = vmatprep.subr.bf16.mxu0 0
      %3164 = vmatpush1.bf16.msra.mxu0 0
      %3165 = vmatprep.subr.bf16.mxu0 0
      %3166 = vmatpush1.bf16.msra.mxu0 0
      %3167 = vmatprep.subr.bf16.mxu0 0
      %3168 = vmatpush1.bf16.msra.mxu0 0
      %3169 = vmatprep.subr.bf16.mxu0 0
      %3170 = vmatpush1.bf16.msra.mxu0 0
      %3171 = vmatprep.subr.bf16.mxu0 0
      %3172 = vmatpush1.bf16.msra.mxu0 0
      %3173 = vmatprep.mubr.bf16.mxu0 0
      %3174 = vmatmul.mubr.bf16.gmra.mrb[0].mxu0 %v3127
      %v3175 = vpop.f32.mrb[0].mxu0
      %v3176 = vadd.f32 0.0, %v3175
      %v3177 = vpop.f32.mrb[0].mxu0
      %v3178 = vpop.f32.mrb[0].mxu0
      %v3179 = vadd.f32 0.0, %v3178
      %v3180 = vpop.f32.mrb[0].mxu0
      %3181 = vmatprep.mubr.bf16.mxu0 0
      %3182 = vmatmul.mubr.bf16.gmra.mrb[0].mxu0 %v3130
      %v3183 = vpop.f32.mrb[0].mxu0
      %v3184 = vadd.f32 0.0, %v3183
      %v3185 = vpop.f32.mrb[0].mxu0
      %v3186 = vpop.f32.mrb[0].mxu0
      %v3187 = vadd.f32 0.0, %v3186
      %v3188 = vpop.f32.mrb[0].mxu0
      %3189 = vmatprep.mubr.bf16.mxu0 0
      %3190 = vmatmul.mubr.bf16.gmra.mrb[0].mxu0 %v3133
      %v3191 = vpop.f32.mrb[0].mxu0
      %v3192 = vadd.f32 0.0, %v3191
      %v3193 = vpop.f32.mrb[0].mxu0
      %v3194 = vpop.f32.mrb[0].mxu0
      %v3195 = vadd.f32 0.0, %v3194
      %v3196 = vpop.f32.mrb[0].mxu0
      %3197 = vmatprep.mubr.bf16.mxu0 0
      %3198 = vmatmul.mubr.bf16.gmra.mrb[0].mxu0 %v3136
      %v3199 = vpop.f32.mrb[0].mxu0
      %v3200 = vadd.f32 0.0, %v3199
      %v3201 = vpop.f32.mrb[0].mxu0
      %v3202 = vpop.f32.mrb[0].mxu0
      %v3203 = vadd.f32 0.0, %v3202
      %v3204 = vpop.f32.mrb[0].mxu0
      %3205 = vmatprep.mubr.bf16.mxu0 0
      %3206 = vmatmul.mubr.bf16.gmra.mrb[0].mxu0 %v3139
      %v3207 = vpop.f32.mrb[0].mxu0
      %v3208 = vadd.f32 0.0, %v3207
      %v3209 = vpop.f32.mrb[0].mxu0
      %v3210 = vpop.f32.mrb[0].mxu0
      %v3211 = vadd.f32 0.0, %v3210
      %v3212 = vpop.f32.mrb[0].mxu0
      %3213 = vdwg.mxu0
      %v3214 = vadd.f32 %v240, %v3176
      %v3215 = vadd.f32 %v244, %v3179
      %3218 = vrot.lane.b32.xlu0 %v3184, 127
      %v3219 = vpop.permute.xlu0 %3218
      %3220 = vrot.lane.b32.xlu0 %v3187, 127
      %v3221 = vpop.permute.xlu0 %3220
      %v3224 = vadd.f32 %v3214, %v3219
      %v3225 = vadd.f32 %v3215, %v3221
      %3228 = vrot.lane.b32.xlu0 %v3192, 126
      %v3229 = vpop.permute.xlu0 %3228
      %3230 = vrot.lane.b32.xlu0 %v3195, 126
      %v3231 = vpop.permute.xlu0 %3230
      %v3234 = vadd.f32 %v3224, %v3229
      %v3235 = vadd.f32 %v3225, %v3231
      %3238 = vrot.lane.b32.xlu0 %v3200, 125
      %v3239 = vpop.permute.xlu0 %3238
      %3240 = vrot.lane.b32.xlu0 %v3203, 125
      %v3241 = vpop.permute.xlu0 %3240
      %v3244 = vadd.f32 %v3234, %v3239
      %v3245 = vadd.f32 %v3235, %v3241
      %3248 = vrot.lane.b32.xlu0 %v3208, 124
      %v3249 = vpop.permute.xlu0 %3248
      %3250 = vrot.lane.b32.xlu0 %v3211, 124
      %v3251 = vpop.permute.xlu0 %3250
      %v3254 = vadd.f32 %v3244, %v3249
      %v3255 = vadd.f32 %v3245, %v3251
      %v3256 = vxor.u32 %v3254, 2147483648
      %v3257 = vxor.u32 %v3255, 2147483648
      %v3258 = vmul.f32 %v3256, 1.442695
      %v3259 = vpow.pop %v3258
      %v3260 = vmul.f32 %v3257, 1.442695
      %v3261 = vpow.pop %v3260
      %v3262 = vadd.f32 %v3259, 1.0
      %v3263 = vadd.f32 %v3261, 1.0
      %v3264 = vrcp.pop %v3262
      %v3265 = vmul.f32 1.0, %v3264
      %v3266 = vrcp.pop %v3263
      %v3267 = vmul.f32 1.0, %v3266
      %v3268 = vpack.c.bf16 %v3267, %v3265
      %s3269 = scalar_lea.vmem [#allocation3], 8
      %3270 = vst.msk [vmem:[%s3269] sm:$0xff] %vm3084, %v3268
      %v3271 = vld [vmem:[%s909] sm:$0xff]
      %v3272 = vld [vmem:[%s909 + $0x8] sm:$0xff]
      %v3273 = vld [vmem:[%s909 + $0x10] sm:$0xff]
      %v3274 = vld [vmem:[%s909 + $0x18] sm:$0xff]
      %v3275 = vld [vmem:[%s909 + $0x20] sm:$0xff]
      %v3276 = vld [vmem:[%s2] sm:$0xf]
      %v3277 = vld [vmem:[%s2 + $0x4] sm:$0xf]
      %v3278 = vld [vmem:[%s2 + $0x8] sm:$0xf]
      %v3279 = vld [vmem:[%s2 + $0xc] sm:$0xf]
      %v3280 = vld [vmem:[%s2 + $0x10] sm:$0xf]
      %v3281 = vld [vmem:[%s2 + $0x14] sm:$0xf]
      %v3282 = vld [vmem:[%s2 + $0x18] sm:$0xf]
      %v3283 = vld [vmem:[%s2 + $0x1c] sm:$0xf]
      %v3284 = vld [vmem:[%s2 + $0x20] sm:$0xf]
      %v3285 = vld [vmem:[%s2 + $0x24] sm:$0xf]
      %v3296 = vunpack.c.l.b16 %v3276
      %v3297 = vunpack.c.l.b16 %v3277
      %v3298 = vunpack.c.l.b16 %v3278
      %v3299 = vunpack.c.l.b16 %v3279
      %v3300 = vunpack.c.l.b16 %v3280
      %v3301 = vunpack.c.l.b16 %v3281
      %v3302 = vunpack.c.l.b16 %v3282
      %v3303 = vunpack.c.l.b16 %v3283
      %v3304 = vunpack.c.l.b16 %v3284
      %v3305 = vunpack.c.l.b16 %v3285
      %v3306 = vpack.c.b16 %v3297, %v3296
      %v3307 = vpack.c.b16 %v3299, %v3298
      %v3308 = vpack.c.b16 %v3301, %v3300
      %v3309 = vpack.c.b16 %v3303, %v3302
      %v3310 = vpack.c.b16 %v3305, %v3304
      %v3312 = vsel %vm2940, %v3306, 0
      %v3315 = vsel %vm2940, %v3307, 0
      %v3318 = vsel %vm2940, %v3308, 0
      %v3321 = vsel %vm2940, %v3309, 0
      %v3324 = vsel %vm2940, %v3310, 0
      %3326 = vmatprep.subr.bf16.mxu0 0
      %3327 = vmatpush1.bf16.msra.mxu0 %v3271
      %3328 = vmatprep.subr.bf16.mxu0 0
      %3329 = vmatpush1.bf16.msra.mxu0 %v3272
      %3330 = vmatprep.subr.bf16.mxu0 0
      %3331 = vmatpush1.bf16.msra.mxu0 %v3273
      %3332 = vmatprep.subr.bf16.mxu0 0
      %3333 = vmatpush1.bf16.msra.mxu0 %v3274
      %3334 = vmatprep.subr.bf16.mxu0 0
      %3335 = vmatpush1.bf16.msra.mxu0 %v3275
      %3336 = vmatprep.subr.bf16.mxu0 0
      %3337 = vmatpush1.bf16.msra.mxu0 0
      %3338 = vmatprep.subr.bf16.mxu0 0
      %3339 = vmatpush1.bf16.msra.mxu0 0
      %3340 = vmatprep.subr.bf16.mxu0 0
      %3341 = vmatpush1.bf16.msra.mxu0 0
      %3342 = vmatprep.subr.bf16.mxu0 0
      %3343 = vmatpush1.bf16.msra.mxu0 0
      %3344 = vmatprep.subr.bf16.mxu0 0
      %3345 = vmatpush1.bf16.msra.mxu0 0
      %3346 = vmatprep.subr.bf16.mxu0 0
      %3347 = vmatpush1.bf16.msra.mxu0 0
      %3348 = vmatprep.subr.bf16.mxu0 0
      %3349 = vmatpush1.bf16.msra.mxu0 0
      %3350 = vmatprep.subr.bf16.mxu0 0
      %3351 = vmatpush1.bf16.msra.mxu0 0
      %3352 = vmatprep.subr.bf16.mxu0 0
      %3353 = vmatpush1.bf16.msra.mxu0 0
      %3354 = vmatprep.subr.bf16.mxu0 0
      %3355 = vmatpush1.bf16.msra.mxu0 0
      %3356 = vmatprep.subr.bf16.mxu0 0
      %3357 = vmatpush1.bf16.msra.mxu0 0
      %3358 = vmatprep.mubr.bf16.mxu0 0
      %3359 = vmatmul.mubr.bf16.gmra.mrb[0].mxu0 %v3312
      %v3360 = vpop.f32.mrb[0].mxu0
      %v3361 = vadd.f32 0.0, %v3360
      %v3362 = vpop.f32.mrb[0].mxu0
      %v3363 = vpop.f32.mrb[0].mxu0
      %v3364 = vadd.f32 0.0, %v3363
      %v3365 = vpop.f32.mrb[0].mxu0
      %3366 = vmatprep.mubr.bf16.mxu0 0
      %3367 = vmatmul.mubr.bf16.gmra.mrb[0].mxu0 %v3315
      %v3368 = vpop.f32.mrb[0].mxu0
      %v3369 = vadd.f32 0.0, %v3368
      %v3370 = vpop.f32.mrb[0].mxu0
      %v3371 = vpop.f32.mrb[0].mxu0
      %v3372 = vadd.f32 0.0, %v3371
      %v3373 = vpop.f32.mrb[0].mxu0
      %3374 = vmatprep.mubr.bf16.mxu0 0
      %3375 = vmatmul.mubr.bf16.gmra.mrb[0].mxu0 %v3318
      %v3376 = vpop.f32.mrb[0].mxu0
      %v3377 = vadd.f32 0.0, %v3376
      %v3378 = vpop.f32.mrb[0].mxu0
      %v3379 = vpop.f32.mrb[0].mxu0
      %v3380 = vadd.f32 0.0, %v3379
      %v3381 = vpop.f32.mrb[0].mxu0
      %3382 = vmatprep.mubr.bf16.mxu0 0
      %3383 = vmatmul.mubr.bf16.gmra.mrb[0].mxu0 %v3321
      %v3384 = vpop.f32.mrb[0].mxu0
      %v3385 = vadd.f32 0.0, %v3384
      %v3386 = vpop.f32.mrb[0].mxu0
      %v3387 = vpop.f32.mrb[0].mxu0
      %v3388 = vadd.f32 0.0, %v3387
      %v3389 = vpop.f32.mrb[0].mxu0
      %3390 = vmatprep.mubr.bf16.mxu0 0
      %3391 = vmatmul.mubr.bf16.gmra.mrb[0].mxu0 %v3324
      %v3392 = vpop.f32.mrb[0].mxu0
      %v3393 = vadd.f32 0.0, %v3392
      %v3394 = vpop.f32.mrb[0].mxu0
      %v3395 = vpop.f32.mrb[0].mxu0
      %v3396 = vadd.f32 0.0, %v3395
      %v3397 = vpop.f32.mrb[0].mxu0
      %3398 = vdwg.mxu0
      %v3399 = vadd.f32 %v240, %v3361
      %v3400 = vadd.f32 %v244, %v3364
      %3403 = vrot.lane.b32.xlu0 %v3369, 127
      %v3404 = vpop.permute.xlu0 %3403
      %3405 = vrot.lane.b32.xlu0 %v3372, 127
      %v3406 = vpop.permute.xlu0 %3405
      %v3409 = vadd.f32 %v3399, %v3404
      %v3410 = vadd.f32 %v3400, %v3406
      %3413 = vrot.lane.b32.xlu0 %v3377, 126
      %v3414 = vpop.permute.xlu0 %3413
      %3415 = vrot.lane.b32.xlu0 %v3380, 126
      %v3416 = vpop.permute.xlu0 %3415
      %v3419 = vadd.f32 %v3409, %v3414
      %v3420 = vadd.f32 %v3410, %v3416
      %3423 = vrot.lane.b32.xlu0 %v3385, 125
      %v3424 = vpop.permute.xlu0 %3423
      %3425 = vrot.lane.b32.xlu0 %v3388, 125
      %v3426 = vpop.permute.xlu0 %3425
      %v3429 = vadd.f32 %v3419, %v3424
      %v3430 = vadd.f32 %v3420, %v3426
      %3433 = vrot.lane.b32.xlu0 %v3393, 124
      %v3434 = vpop.permute.xlu0 %3433
      %3435 = vrot.lane.b32.xlu0 %v3396, 124
      %v3436 = vpop.permute.xlu0 %3435
      %v3439 = vadd.f32 %v3429, %v3434
      %v3440 = vadd.f32 %v3430, %v3436
      %v3441 = vxor.u32 %v3439, 2147483648
      %v3442 = vxor.u32 %v3440, 2147483648
      %v3443 = vmul.f32 %v3441, 1.442695
      %v3444 = vpow.pop %v3443
      %v3445 = vmul.f32 %v3442, 1.442695
      %v3446 = vpow.pop %v3445
      %v3447 = vadd.f32 %v3444, 1.0
      %v3448 = vadd.f32 %v3446, 1.0
      %v3449 = vrcp.pop %v3447
      %v3450 = vmul.f32 1.0, %v3449
      %v3451 = vrcp.pop %v3448
      %v3452 = vmul.f32 1.0, %v3451
      %v3453 = vpack.c.bf16 %v3452, %v3450
      %s3454 = scalar_lea.vmem [#allocation3], 16
      %3455 = vst.msk [vmem:[%s3454] sm:$0xff] %vm3084, %v3453
      %v3456 = vld [vmem:[%s1215] sm:$0xff]
      %v3457 = vld [vmem:[%s1215 + $0x8] sm:$0xff]
      %v3458 = vld [vmem:[%s1215 + $0x10] sm:$0xff]
      %v3459 = vld [vmem:[%s1215 + $0x18] sm:$0xff]
      %v3460 = vld [vmem:[%s1215 + $0x20] sm:$0xff]
      %v3461 = vld [vmem:[%s2] sm:$0xf]
      %v3462 = vld [vmem:[%s2 + $0x4] sm:$0xf]
      %v3463 = vld [vmem:[%s2 + $0x8] sm:$0xf]
      %v3464 = vld [vmem:[%s2 + $0xc] sm:$0xf]
      %v3465 = vld [vmem:[%s2 + $0x10] sm:$0xf]
      %v3466 = vld [vmem:[%s2 + $0x14] sm:$0xf]
      %v3467 = vld [vmem:[%s2 + $0x18] sm:$0xf]
      %v3468 = vld [vmem:[%s2 + $0x1c] sm:$0xf]
      %v3469 = vld [vmem:[%s2 + $0x20] sm:$0xf]
      %v3470 = vld [vmem:[%s2 + $0x24] sm:$0xf]
      %v3481 = vunpack.c.l.b16 %v3461
      %v3482 = vunpack.c.l.b16 %v3462
      %v3483 = vunpack.c.l.b16 %v3463
      %v3484 = vunpack.c.l.b16 %v3464
      %v3485 = vunpack.c.l.b16 %v3465
      %v3486 = vunpack.c.l.b16 %v3466
      %v3487 = vunpack.c.l.b16 %v3467
      %v3488 = vunpack.c.l.b16 %v3468
      %v3489 = vunpack.c.l.b16 %v3469
      %v3490 = vunpack.c.l.b16 %v3470
      %v3491 = vpack.c.b16 %v3482, %v3481
      %v3492 = vpack.c.b16 %v3484, %v3483
      %v3493 = vpack.c.b16 %v3486, %v3485
      %v3494 = vpack.c.b16 %v3488, %v3487
      %v3495 = vpack.c.b16 %v3490, %v3489
      %v3497 = vsel %vm2940, %v3491, 0
      %v3500 = vsel %vm2940, %v3492, 0
      %v3503 = vsel %vm2940, %v3493, 0
      %v3506 = vsel %vm2940, %v3494, 0
      %v3509 = vsel %vm2940, %v3495, 0
      %3511 = vmatprep.subr.bf16.mxu0 0
      %3512 = vmatpush1.bf16.msra.mxu0 %v3456
      %3513 = vmatprep.subr.bf16.mxu0 0
      %3514 = vmatpush1.bf16.msra.mxu0 %v3457
      %3515 = vmatprep.subr.bf16.mxu0 0
      %3516 = vmatpush1.bf16.msra.mxu0 %v3458
      %3517 = vmatprep.subr.bf16.mxu0 0
      %3518 = vmatpush1.bf16.msra.mxu0 %v3459
      %3519 = vmatprep.subr.bf16.mxu0 0
      %3520 = vmatpush1.bf16.msra.mxu0 %v3460
      %3521 = vmatprep.subr.bf16.mxu0 0
      %3522 = vmatpush1.bf16.msra.mxu0 0
      %3523 = vmatprep.subr.bf16.mxu0 0
      %3524 = vmatpush1.bf16.msra.mxu0 0
      %3525 = vmatprep.subr.bf16.mxu0 0
      %3526 = vmatpush1.bf16.msra.mxu0 0
      %3527 = vmatprep.subr.bf16.mxu0 0
      %3528 = vmatpush1.bf16.msra.mxu0 0
      %3529 = vmatprep.subr.bf16.mxu0 0
      %3530 = vmatpush1.bf16.msra.mxu0 0
      %3531 = vmatprep.subr.bf16.mxu0 0
      %3532 = vmatpush1.bf16.msra.mxu0 0
      %3533 = vmatprep.subr.bf16.mxu0 0
      %3534 = vmatpush1.bf16.msra.mxu0 0
      %3535 = vmatprep.subr.bf16.mxu0 0
      %3536 = vmatpush1.bf16.msra.mxu0 0
      %3537 = vmatprep.subr.bf16.mxu0 0
      %3538 = vmatpush1.bf16.msra.mxu0 0
      %3539 = vmatprep.subr.bf16.mxu0 0
      %3540 = vmatpush1.bf16.msra.mxu0 0
      %3541 = vmatprep.subr.bf16.mxu0 0
      %3542 = vmatpush1.bf16.msra.mxu0 0
      %3543 = vmatprep.mubr.bf16.mxu0 0
      %3544 = vmatmul.mubr.bf16.gmra.mrb[0].mxu0 %v3497
      %v3545 = vpop.f32.mrb[0].mxu0
      %v3546 = vadd.f32 0.0, %v3545
      %v3547 = vpop.f32.mrb[0].mxu0
      %v3548 = vpop.f32.mrb[0].mxu0
      %v3549 = vadd.f32 0.0, %v3548
      %v3550 = vpop.f32.mrb[0].mxu0
      %3551 = vmatprep.mubr.bf16.mxu0 0
      %3552 = vmatmul.mubr.bf16.gmra.mrb[0].mxu0 %v3500
      %v3553 = vpop.f32.mrb[0].mxu0
      %v3554 = vadd.f32 0.0, %v3553
      %v3555 = vpop.f32.mrb[0].mxu0
      %v3556 = vpop.f32.mrb[0].mxu0
      %v3557 = vadd.f32 0.0, %v3556
      %v3558 = vpop.f32.mrb[0].mxu0
      %3559 = vmatprep.mubr.bf16.mxu0 0
      %3560 = vmatmul.mubr.bf16.gmra.mrb[0].mxu0 %v3503
      %v3561 = vpop.f32.mrb[0].mxu0
      %v3562 = vadd.f32 0.0, %v3561
      %v3563 = vpop.f32.mrb[0].mxu0
      %v3564 = vpop.f32.mrb[0].mxu0
      %v3565 = vadd.f32 0.0, %v3564
      %v3566 = vpop.f32.mrb[0].mxu0
      %3567 = vmatprep.mubr.bf16.mxu0 0
      %3568 = vmatmul.mubr.bf16.gmra.mrb[0].mxu0 %v3506
      %v3569 = vpop.f32.mrb[0].mxu0
      %v3570 = vadd.f32 0.0, %v3569
      %v3571 = vpop.f32.mrb[0].mxu0
      %v3572 = vpop.f32.mrb[0].mxu0
      %v3573 = vadd.f32 0.0, %v3572
      %v3574 = vpop.f32.mrb[0].mxu0
      %3575 = vmatprep.mubr.bf16.mxu0 0
      %3576 = vmatmul.mubr.bf16.gmra.mrb[0].mxu0 %v3509
      %v3577 = vpop.f32.mrb[0].mxu0
      %v3578 = vadd.f32 0.0, %v3577
      %v3579 = vpop.f32.mrb[0].mxu0
      %v3580 = vpop.f32.mrb[0].mxu0
      %v3581 = vadd.f32 0.0, %v3580
      %v3582 = vpop.f32.mrb[0].mxu0
      %3583 = vdwg.mxu0
      %v3584 = vadd.f32 %v240, %v3546
      %v3585 = vadd.f32 %v244, %v3549
      %3588 = vrot.lane.b32.xlu0 %v3554, 127
      %v3589 = vpop.permute.xlu0 %3588
      %3590 = vrot.lane.b32.xlu0 %v3557, 127
      %v3591 = vpop.permute.xlu0 %3590
      %v3594 = vadd.f32 %v3584, %v3589
      %v3595 = vadd.f32 %v3585, %v3591
      %3598 = vrot.lane.b32.xlu0 %v3562, 126
      %v3599 = vpop.permute.xlu0 %3598
      %3600 = vrot.lane.b32.xlu0 %v3565, 126
      %v3601 = vpop.permute.xlu0 %3600
      %v3604 = vadd.f32 %v3594, %v3599
      %v3605 = vadd.f32 %v3595, %v3601
      %3608 = vrot.lane.b32.xlu0 %v3570, 125
      %v3609 = vpop.permute.xlu0 %3608
      %3610 = vrot.lane.b32.xlu0 %v3573, 125
      %v3611 = vpop.permute.xlu0 %3610
      %v3614 = vadd.f32 %v3604, %v3609
      %v3615 = vadd.f32 %v3605, %v3611
      %3618 = vrot.lane.b32.xlu0 %v3578, 124
      %v3619 = vpop.permute.xlu0 %3618
      %3620 = vrot.lane.b32.xlu0 %v3581, 124
      %v3621 = vpop.permute.xlu0 %3620
      %v3624 = vadd.f32 %v3614, %v3619
      %v3625 = vadd.f32 %v3615, %v3621
      %v3626 = vxor.u32 %v3624, 2147483648
      %v3627 = vxor.u32 %v3625, 2147483648
      %v3628 = vmul.f32 %v3626, 1.442695
      %v3629 = vpow.pop %v3628
      %v3630 = vmul.f32 %v3627, 1.442695
      %v3631 = vpow.pop %v3630
      %v3632 = vadd.f32 %v3629, 1.0
      %v3633 = vadd.f32 %v3631, 1.0
      %v3634 = vrcp.pop %v3632
      %v3635 = vmul.f32 1.0, %v3634
      %v3636 = vrcp.pop %v3633
      %v3637 = vmul.f32 1.0, %v3636
      %v3638 = vpack.c.bf16 %v3637, %v3635
      %s3639 = scalar_lea.vmem [#allocation3], 24
      %3640 = vst.msk [vmem:[%s3639] sm:$0xff] %vm3084, %v3638
      %v3641 = vld [vmem:[%s1521] sm:$0xff]
      %v3642 = vld [vmem:[%s1521 + $0x8] sm:$0xff]
      %v3643 = vld [vmem:[%s1521 + $0x10] sm:$0xff]
      %v3644 = vld [vmem:[%s1521 + $0x18] sm:$0xff]
      %v3645 = vld [vmem:[%s1521 + $0x20] sm:$0xff]
      %v3646 = vld [vmem:[%s2] sm:$0xf]
      %v3647 = vld [vmem:[%s2 + $0x4] sm:$0xf]
      %v3648 = vld [vmem:[%s2 + $0x8] sm:$0xf]
      %v3649 = vld [vmem:[%s2 + $0xc] sm:$0xf]
      %v3650 = vld [vmem:[%s2 + $0x10] sm:$0xf]
      %v3651 = vld [vmem:[%s2 + $0x14] sm:$0xf]
      %v3652 = vld [vmem:[%s2 + $0x18] sm:$0xf]
      %v3653 = vld [vmem:[%s2 + $0x1c] sm:$0xf]
      %v3654 = vld [vmem:[%s2 + $0x20] sm:$0xf]
      %v3655 = vld [vmem:[%s2 + $0x24] sm:$0xf]
      %v3666 = vunpack.c.l.b16 %v3646
      %v3667 = vunpack.c.l.b16 %v3647
      %v3668 = vunpack.c.l.b16 %v3648
      %v3669 = vunpack.c.l.b16 %v3649
      %v3670 = vunpack.c.l.b16 %v3650
      %v3671 = vunpack.c.l.b16 %v3651
      %v3672 = vunpack.c.l.b16 %v3652
      %v3673 = vunpack.c.l.b16 %v3653
      %v3674 = vunpack.c.l.b16 %v3654
      %v3675 = vunpack.c.l.b16 %v3655
      %v3676 = vpack.c.b16 %v3667, %v3666
      %v3677 = vpack.c.b16 %v3669, %v3668
      %v3678 = vpack.c.b16 %v3671, %v3670
      %v3679 = vpack.c.b16 %v3673, %v3672
      %v3680 = vpack.c.b16 %v3675, %v3674
      %v3682 = vsel %vm2940, %v3676, 0
      %v3685 = vsel %vm2940, %v3677, 0
      %v3688 = vsel %vm2940, %v3678, 0
      %v3691 = vsel %vm2940, %v3679, 0
      %v3694 = vsel %vm2940, %v3680, 0
      %3696 = vmatprep.subr.bf16.mxu0 0
      %3697 = vmatpush1.bf16.msra.mxu0 %v3641
      %3698 = vmatprep.subr.bf16.mxu0 0
      %3699 = vmatpush1.bf16.msra.mxu0 %v3642
      %3700 = vmatprep.subr.bf16.mxu0 0
      %3701 = vmatpush1.bf16.msra.mxu0 %v3643
      %3702 = vmatprep.subr.bf16.mxu0 0
      %3703 = vmatpush1.bf16.msra.mxu0 %v3644
      %3704 = vmatprep.subr.bf16.mxu0 0
      %3705 = vmatpush1.bf16.msra.mxu0 %v3645
      %3706 = vmatprep.subr.bf16.mxu0 0
      %3707 = vmatpush1.bf16.msra.mxu0 0
      %3708 = vmatprep.subr.bf16.mxu0 0
      %3709 = vmatpush1.bf16.msra.mxu0 0
      %3710 = vmatprep.subr.bf16.mxu0 0
      %3711 = vmatpush1.bf16.msra.mxu0 0
      %3712 = vmatprep.subr.bf16.mxu0 0
      %3713 = vmatpush1.bf16.msra.mxu0 0
      %3714 = vmatprep.subr.bf16.mxu0 0
      %3715 = vmatpush1.bf16.msra.mxu0 0
      %3716 = vmatprep.subr.bf16.mxu0 0
      %3717 = vmatpush1.bf16.msra.mxu0 0
      %3718 = vmatprep.subr.bf16.mxu0 0
      %3719 = vmatpush1.bf16.msra.mxu0 0
      %3720 = vmatprep.subr.bf16.mxu0 0
      %3721 = vmatpush1.bf16.msra.mxu0 0
      %3722 = vmatprep.subr.bf16.mxu0 0
      %3723 = vmatpush1.bf16.msra.mxu0 0
      %3724 = vmatprep.subr.bf16.mxu0 0
      %3725 = vmatpush1.bf16.msra.mxu0 0
      %3726 = vmatprep.subr.bf16.mxu0 0
      %3727 = vmatpush1.bf16.msra.mxu0 0
      %3728 = vmatprep.mubr.bf16.mxu0 0
      %3729 = vmatmul.mubr.bf16.gmra.mrb[0].mxu0 %v3682
      %v3730 = vpop.f32.mrb[0].mxu0
      %v3731 = vadd.f32 0.0, %v3730
      %v3732 = vpop.f32.mrb[0].mxu0
      %v3733 = vpop.f32.mrb[0].mxu0
      %v3734 = vadd.f32 0.0, %v3733
      %v3735 = vpop.f32.mrb[0].mxu0
      %3736 = vmatprep.mubr.bf16.mxu0 0
      %3737 = vmatmul.mubr.bf16.gmra.mrb[0].mxu0 %v3685
      %v3738 = vpop.f32.mrb[0].mxu0
      %v3739 = vadd.f32 0.0, %v3738
      %v3740 = vpop.f32.mrb[0].mxu0
      %v3741 = vpop.f32.mrb[0].mxu0
      %v3742 = vadd.f32 0.0, %v3741
      %v3743 = vpop.f32.mrb[0].mxu0
      %3744 = vmatprep.mubr.bf16.mxu0 0
      %3745 = vmatmul.mubr.bf16.gmra.mrb[0].mxu0 %v3688
      %v3746 = vpop.f32.mrb[0].mxu0
      %v3747 = vadd.f32 0.0, %v3746
      %v3748 = vpop.f32.mrb[0].mxu0
      %v3749 = vpop.f32.mrb[0].mxu0
      %v3750 = vadd.f32 0.0, %v3749
      %v3751 = vpop.f32.mrb[0].mxu0
      %3752 = vmatprep.mubr.bf16.mxu0 0
      %3753 = vmatmul.mubr.bf16.gmra.mrb[0].mxu0 %v3691
      %v3754 = vpop.f32.mrb[0].mxu0
      %v3755 = vadd.f32 0.0, %v3754
      %v3756 = vpop.f32.mrb[0].mxu0
      %v3757 = vpop.f32.mrb[0].mxu0
      %v3758 = vadd.f32 0.0, %v3757
      %v3759 = vpop.f32.mrb[0].mxu0
      %3760 = vmatprep.mubr.bf16.mxu0 0
      %3761 = vmatmul.mubr.bf16.gmra.mrb[0].mxu0 %v3694
      %v3762 = vpop.f32.mrb[0].mxu0
      %v3763 = vadd.f32 0.0, %v3762
      %v3764 = vpop.f32.mrb[0].mxu0
      %v3765 = vpop.f32.mrb[0].mxu0
      %v3766 = vadd.f32 0.0, %v3765
      %v3767 = vpop.f32.mrb[0].mxu0
      %3768 = vdwg.mxu0
      %v3769 = vadd.f32 %v240, %v3731
      %v3770 = vadd.f32 %v244, %v3734
      %3773 = vrot.lane.b32.xlu0 %v3739, 127
      %v3774 = vpop.permute.xlu0 %3773
      %3775 = vrot.lane.b32.xlu0 %v3742, 127
      %v3776 = vpop.permute.xlu0 %3775
      %v3779 = vadd.f32 %v3769, %v3774
      %v3780 = vadd.f32 %v3770, %v3776
      %3783 = vrot.lane.b32.xlu0 %v3747, 126
      %v3784 = vpop.permute.xlu0 %3783
      %3785 = vrot.lane.b32.xlu0 %v3750, 126
      %v3786 = vpop.permute.xlu0 %3785
      %v3789 = vadd.f32 %v3779, %v3784
      %v3790 = vadd.f32 %v3780, %v3786
      %3793 = vrot.lane.b32.xlu0 %v3755, 125
      %v3794 = vpop.permute.xlu0 %3793
      %3795 = vrot.lane.b32.xlu0 %v3758, 125
      %v3796 = vpop.permute.xlu0 %3795
      %v3799 = vadd.f32 %v3789, %v3794
      %v3800 = vadd.f32 %v3790, %v3796
      %3803 = vrot.lane.b32.xlu0 %v3763, 124
      %v3804 = vpop.permute.xlu0 %3803
      %3805 = vrot.lane.b32.xlu0 %v3766, 124
      %v3806 = vpop.permute.xlu0 %3805
      %v3809 = vadd.f32 %v3799, %v3804
      %v3810 = vadd.f32 %v3800, %v3806
      %v3811 = vxor.u32 %v3809, 2147483648
      %v3812 = vxor.u32 %v3810, 2147483648
      %v3813 = vmul.f32 %v3811, 1.442695
      %v3814 = vpow.pop %v3813
      %v3815 = vmul.f32 %v3812, 1.442695
      %v3816 = vpow.pop %v3815
      %v3817 = vadd.f32 %v3814, 1.0
      %v3818 = vadd.f32 %v3816, 1.0
      %v3819 = vrcp.pop %v3817
      %v3820 = vmul.f32 1.0, %v3819
      %v3821 = vrcp.pop %v3818
      %v3822 = vmul.f32 1.0, %v3821
      %v3823 = vpack.c.bf16 %v3822, %v3820
      %s3824 = scalar_lea.vmem [#allocation3], 32
      %3825 = vst.msk [vmem:[%s3824] sm:$0xff] %vm3084, %v3823
      %v3826 = vld [vmem:[%s1827] sm:$0xff]
      %v3827 = vld [vmem:[%s1827 + $0x8] sm:$0xff]
      %v3828 = vld [vmem:[%s1827 + $0x10] sm:$0xff]
      %v3829 = vld [vmem:[%s1827 + $0x18] sm:$0xff]
      %v3830 = vld [vmem:[%s1827 + $0x20] sm:$0xff]
      %v3831 = vld [vmem:[%s2] sm:$0xf]
      %v3832 = vld [vmem:[%s2 + $0x4] sm:$0xf]
      %v3833 = vld [vmem:[%s2 + $0x8] sm:$0xf]
      %v3834 = vld [vmem:[%s2 + $0xc] sm:$0xf]
      %v3835 = vld [vmem:[%s2 + $0x10] sm:$0xf]
      %v3836 = vld [vmem:[%s2 + $0x14] sm:$0xf]
      %v3837 = vld [vmem:[%s2 + $0x18] sm:$0xf]
      %v3838 = vld [vmem:[%s2 + $0x1c] sm:$0xf]
      %v3839 = vld [vmem:[%s2 + $0x20] sm:$0xf]
      %v3840 = vld [vmem:[%s2 + $0x24] sm:$0xf]
      %v3851 = vunpack.c.l.b16 %v3831
      %v3852 = vunpack.c.l.b16 %v3832
      %v3853 = vunpack.c.l.b16 %v3833
      %v3854 = vunpack.c.l.b16 %v3834
      %v3855 = vunpack.c.l.b16 %v3835
      %v3856 = vunpack.c.l.b16 %v3836
      %v3857 = vunpack.c.l.b16 %v3837
      %v3858 = vunpack.c.l.b16 %v3838
      %v3859 = vunpack.c.l.b16 %v3839
      %v3860 = vunpack.c.l.b16 %v3840
      %v3861 = vpack.c.b16 %v3852, %v3851
      %v3862 = vpack.c.b16 %v3854, %v3853
      %v3863 = vpack.c.b16 %v3856, %v3855
      %v3864 = vpack.c.b16 %v3858, %v3857
      %v3865 = vpack.c.b16 %v3860, %v3859
      %v3867 = vsel %vm2940, %v3861, 0
      %v3870 = vsel %vm2940, %v3862, 0
      %v3873 = vsel %vm2940, %v3863, 0
      %v3876 = vsel %vm2940, %v3864, 0
      %v3879 = vsel %vm2940, %v3865, 0
      %3881 = vmatprep.subr.bf16.mxu0 0
      %3882 = vmatpush1.bf16.msra.mxu0 %v3826
      %3883 = vmatprep.subr.bf16.mxu0 0
      %3884 = vmatpush1.bf16.msra.mxu0 %v3827
      %3885 = vmatprep.subr.bf16.mxu0 0
      %3886 = vmatpush1.bf16.msra.mxu0 %v3828
      %3887 = vmatprep.subr.bf16.mxu0 0
      %3888 = vmatpush1.bf16.msra.mxu0 %v3829
      %3889 = vmatprep.subr.bf16.mxu0 0
      %3890 = vmatpush1.bf16.msra.mxu0 %v3830
      %3891 = vmatprep.subr.bf16.mxu0 0
      %3892 = vmatpush1.bf16.msra.mxu0 0
      %3893 = vmatprep.subr.bf16.mxu0 0
      %3894 = vmatpush1.bf16.msra.mxu0 0
      %3895 = vmatprep.subr.bf16.mxu0 0
      %3896 = vmatpush1.bf16.msra.mxu0 0
      %3897 = vmatprep.subr.bf16.mxu0 0
      %3898 = vmatpush1.bf16.msra.mxu0 0
      %3899 = vmatprep.subr.bf16.mxu0 0
      %3900 = vmatpush1.bf16.msra.mxu0 0
      %3901 = vmatprep.subr.bf16.mxu0 0
      %3902 = vmatpush1.bf16.msra.mxu0 0
      %3903 = vmatprep.subr.bf16.mxu0 0
      %3904 = vmatpush1.bf16.msra.mxu0 0
      %3905 = vmatprep.subr.bf16.mxu0 0
      %3906 = vmatpush1.bf16.msra.mxu0 0
      %3907 = vmatprep.subr.bf16.mxu0 0
      %3908 = vmatpush1.bf16.msra.mxu0 0
      %3909 = vmatprep.subr.bf16.mxu0 0
      %3910 = vmatpush1.bf16.msra.mxu0 0
      %3911 = vmatprep.subr.bf16.mxu0 0
      %3912 = vmatpush1.bf16.msra.mxu0 0
      %3913 = vmatprep.mubr.bf16.mxu0 0
      %3914 = vmatmul.mubr.bf16.gmra.mrb[0].mxu0 %v3867
      %v3915 = vpop.f32.mrb[0].mxu0
      %v3916 = vadd.f32 0.0, %v3915
      %v3917 = vpop.f32.mrb[0].mxu0
      %v3918 = vpop.f32.mrb[0].mxu0
      %v3919 = vadd.f32 0.0, %v3918
      %v3920 = vpop.f32.mrb[0].mxu0
      %3921 = vmatprep.mubr.bf16.mxu0 0
      %3922 = vmatmul.mubr.bf16.gmra.mrb[0].mxu0 %v3870
      %v3923 = vpop.f32.mrb[0].mxu0
      %v3924 = vadd.f32 0.0, %v3923
      %v3925 = vpop.f32.mrb[0].mxu0
      %v3926 = vpop.f32.mrb[0].mxu0
      %v3927 = vadd.f32 0.0, %v3926
      %v3928 = vpop.f32.mrb[0].mxu0
      %3929 = vmatprep.mubr.bf16.mxu0 0
      %3930 = vmatmul.mubr.bf16.gmra.mrb[0].mxu0 %v3873
      %v3931 = vpop.f32.mrb[0].mxu0
      %v3932 = vadd.f32 0.0, %v3931
      %v3933 = vpop.f32.mrb[0].mxu0
      %v3934 = vpop.f32.mrb[0].mxu0
      %v3935 = vadd.f32 0.0, %v3934
      %v3936 = vpop.f32.mrb[0].mxu0
      %3937 = vmatprep.mubr.bf16.mxu0 0
      %3938 = vmatmul.mubr.bf16.gmra.mrb[0].mxu0 %v3876
      %v3939 = vpop.f32.mrb[0].mxu0
      %v3940 = vadd.f32 0.0, %v3939
      %v3941 = vpop.f32.mrb[0].mxu0
      %v3942 = vpop.f32.mrb[0].mxu0
      %v3943 = vadd.f32 0.0, %v3942
      %v3944 = vpop.f32.mrb[0].mxu0
      %3945 = vmatprep.mubr.bf16.mxu0 0
      %3946 = vmatmul.mubr.bf16.gmra.mrb[0].mxu0 %v3879
      %v3947 = vpop.f32.mrb[0].mxu0
      %v3948 = vadd.f32 0.0, %v3947
      %v3949 = vpop.f32.mrb[0].mxu0
      %v3950 = vpop.f32.mrb[0].mxu0
      %v3951 = vadd.f32 0.0, %v3950
      %v3952 = vpop.f32.mrb[0].mxu0
      %3953 = vdwg.mxu0
      %v3954 = vadd.f32 %v240, %v3916
      %v3955 = vadd.f32 %v244, %v3919
      %3958 = vrot.lane.b32.xlu0 %v3924, 127
      %v3959 = vpop.permute.xlu0 %3958
      %3960 = vrot.lane.b32.xlu0 %v3927, 127
      %v3961 = vpop.permute.xlu0 %3960
      %v3964 = vadd.f32 %v3954, %v3959
      %v3965 = vadd.f32 %v3955, %v3961
      %3968 = vrot.lane.b32.xlu0 %v3932, 126
      %v3969 = vpop.permute.xlu0 %3968
      %3970 = vrot.lane.b32.xlu0 %v3935, 126
      %v3971 = vpop.permute.xlu0 %3970
      %v3974 = vadd.f32 %v3964, %v3969
      %v3975 = vadd.f32 %v3965, %v3971
      %3978 = vrot.lane.b32.xlu0 %v3940, 125
      %v3979 = vpop.permute.xlu0 %3978
      %3980 = vrot.lane.b32.xlu0 %v3943, 125
      %v3981 = vpop.permute.xlu0 %3980
      %v3984 = vadd.f32 %v3974, %v3979
      %v3985 = vadd.f32 %v3975, %v3981
      %3988 = vrot.lane.b32.xlu0 %v3948, 124
      %v3989 = vpop.permute.xlu0 %3988
      %3990 = vrot.lane.b32.xlu0 %v3951, 124
      %v3991 = vpop.permute.xlu0 %3990
      %v3994 = vadd.f32 %v3984, %v3989
      %v3995 = vadd.f32 %v3985, %v3991
      %v3996 = vxor.u32 %v3994, 2147483648
      %v3997 = vxor.u32 %v3995, 2147483648
      %v3998 = vmul.f32 %v3996, 1.442695
      %v3999 = vpow.pop %v3998
      %v4000 = vmul.f32 %v3997, 1.442695
      %v4001 = vpow.pop %v4000
      %v4002 = vadd.f32 %v3999, 1.0
      %v4003 = vadd.f32 %v4001, 1.0
      %v4004 = vrcp.pop %v4002
      %v4005 = vmul.f32 1.0, %v4004
      %v4006 = vrcp.pop %v4003
      %v4007 = vmul.f32 1.0, %v4006
      %v4008 = vpack.c.bf16 %v4007, %v4005
      %s4009 = scalar_lea.vmem [#allocation3], 40
      %4010 = vst.msk [vmem:[%s4009] sm:$0xff] %vm3084, %v4008
      %v4011 = vld [vmem:[%s2133] sm:$0xff]
      %v4012 = vld [vmem:[%s2133 + $0x8] sm:$0xff]
      %v4013 = vld [vmem:[%s2133 + $0x10] sm:$0xff]
      %v4014 = vld [vmem:[%s2133 + $0x18] sm:$0xff]
      %v4015 = vld [vmem:[%s2133 + $0x20] sm:$0xff]
      %v4016 = vld [vmem:[%s2] sm:$0xf]
      %v4017 = vld [vmem:[%s2 + $0x4] sm:$0xf]
      %v4018 = vld [vmem:[%s2 + $0x8] sm:$0xf]
      %v4019 = vld [vmem:[%s2 + $0xc] sm:$0xf]
      %v4020 = vld [vmem:[%s2 + $0x10] sm:$0xf]
      %v4021 = vld [vmem:[%s2 + $0x14] sm:$0xf]
      %v4022 = vld [vmem:[%s2 + $0x18] sm:$0xf]
      %v4023 = vld [vmem:[%s2 + $0x1c] sm:$0xf]
      %v4024 = vld [vmem:[%s2 + $0x20] sm:$0xf]
      %v4025 = vld [vmem:[%s2 + $0x24] sm:$0xf]
      %v4036 = vunpack.c.l.b16 %v4016
      %v4037 = vunpack.c.l.b16 %v4017
      %v4038 = vunpack.c.l.b16 %v4018
      %v4039 = vunpack.c.l.b16 %v4019
      %v4040 = vunpack.c.l.b16 %v4020
      %v4041 = vunpack.c.l.b16 %v4021
      %v4042 = vunpack.c.l.b16 %v4022
      %v4043 = vunpack.c.l.b16 %v4023
      %v4044 = vunpack.c.l.b16 %v4024
      %v4045 = vunpack.c.l.b16 %v4025
      %v4046 = vpack.c.b16 %v4037, %v4036
      %v4047 = vpack.c.b16 %v4039, %v4038
      %v4048 = vpack.c.b16 %v4041, %v4040
      %v4049 = vpack.c.b16 %v4043, %v4042
      %v4050 = vpack.c.b16 %v4045, %v4044
      %v4052 = vsel %vm2940, %v4046, 0
      %v4055 = vsel %vm2940, %v4047, 0
      %v4058 = vsel %vm2940, %v4048, 0
      %v4061 = vsel %vm2940, %v4049, 0
      %v4064 = vsel %vm2940, %v4050, 0
      %4066 = vmatprep.subr.bf16.mxu0 0
      %4067 = vmatpush1.bf16.msra.mxu0 %v4011
      %4068 = vmatprep.subr.bf16.mxu0 0
      %4069 = vmatpush1.bf16.msra.mxu0 %v4012
      %4070 = vmatprep.subr.bf16.mxu0 0
      %4071 = vmatpush1.bf16.msra.mxu0 %v4013
      %4072 = vmatprep.subr.bf16.mxu0 0
      %4073 = vmatpush1.bf16.msra.mxu0 %v4014
      %4074 = vmatprep.subr.bf16.mxu0 0
      %4075 = vmatpush1.bf16.msra.mxu0 %v4015
      %4076 = vmatprep.subr.bf16.mxu0 0
      %4077 = vmatpush1.bf16.msra.mxu0 0
      %4078 = vmatprep.subr.bf16.mxu0 0
      %4079 = vmatpush1.bf16.msra.mxu0 0
      %4080 = vmatprep.subr.bf16.mxu0 0
      %4081 = vmatpush1.bf16.msra.mxu0 0
      %4082 = vmatprep.subr.bf16.mxu0 0
      %4083 = vmatpush1.bf16.msra.mxu0 0
      %4084 = vmatprep.subr.bf16.mxu0 0
      %4085 = vmatpush1.bf16.msra.mxu0 0
      %4086 = vmatprep.subr.bf16.mxu0 0
      %4087 = vmatpush1.bf16.msra.mxu0 0
      %4088 = vmatprep.subr.bf16.mxu0 0
      %4089 = vmatpush1.bf16.msra.mxu0 0
      %4090 = vmatprep.subr.bf16.mxu0 0
      %4091 = vmatpush1.bf16.msra.mxu0 0
      %4092 = vmatprep.subr.bf16.mxu0 0
      %4093 = vmatpush1.bf16.msra.mxu0 0
      %4094 = vmatprep.subr.bf16.mxu0 0
      %4095 = vmatpush1.bf16.msra.mxu0 0
      %4096 = vmatprep.subr.bf16.mxu0 0
      %4097 = vmatpush1.bf16.msra.mxu0 0
      %4098 = vmatprep.mubr.bf16.mxu0 0
      %4099 = vmatmul.mubr.bf16.gmra.mrb[0].mxu0 %v4052
      %v4100 = vpop.f32.mrb[0].mxu0
      %v4101 = vadd.f32 0.0, %v4100
      %v4102 = vpop.f32.mrb[0].mxu0
      %v4103 = vpop.f32.mrb[0].mxu0
      %v4104 = vadd.f32 0.0, %v4103
      %v4105 = vpop.f32.mrb[0].mxu0
      %4106 = vmatprep.mubr.bf16.mxu0 0
      %4107 = vmatmul.mubr.bf16.gmra.mrb[0].mxu0 %v4055
      %v4108 = vpop.f32.mrb[0].mxu0
      %v4109 = vadd.f32 0.0, %v4108
      %v4110 = vpop.f32.mrb[0].mxu0
      %v4111 = vpop.f32.mrb[0].mxu0
      %v4112 = vadd.f32 0.0, %v4111
      %v4113 = vpop.f32.mrb[0].mxu0
      %4114 = vmatprep.mubr.bf16.mxu0 0
      %4115 = vmatmul.mubr.bf16.gmra.mrb[0].mxu0 %v4058
      %v4116 = vpop.f32.mrb[0].mxu0
      %v4117 = vadd.f32 0.0, %v4116
      %v4118 = vpop.f32.mrb[0].mxu0
      %v4119 = vpop.f32.mrb[0].mxu0
      %v4120 = vadd.f32 0.0, %v4119
      %v4121 = vpop.f32.mrb[0].mxu0
      %4122 = vmatprep.mubr.bf16.mxu0 0
      %4123 = vmatmul.mubr.bf16.gmra.mrb[0].mxu0 %v4061
      %v4124 = vpop.f32.mrb[0].mxu0
      %v4125 = vadd.f32 0.0, %v4124
      %v4126 = vpop.f32.mrb[0].mxu0
      %v4127 = vpop.f32.mrb[0].mxu0
      %v4128 = vadd.f32 0.0, %v4127
      %v4129 = vpop.f32.mrb[0].mxu0
      %4130 = vmatprep.mubr.bf16.mxu0 0
      %4131 = vmatmul.mubr.bf16.gmra.mrb[0].mxu0 %v4064
      %v4132 = vpop.f32.mrb[0].mxu0
      %v4133 = vadd.f32 0.0, %v4132
      %v4134 = vpop.f32.mrb[0].mxu0
      %v4135 = vpop.f32.mrb[0].mxu0
      %v4136 = vadd.f32 0.0, %v4135
      %v4137 = vpop.f32.mrb[0].mxu0
      %4138 = vdwg.mxu0
      %v4139 = vadd.f32 %v240, %v4101
      %v4140 = vadd.f32 %v244, %v4104
      %4143 = vrot.lane.b32.xlu0 %v4109, 127
      %v4144 = vpop.permute.xlu0 %4143
      %4145 = vrot.lane.b32.xlu0 %v4112, 127
      %v4146 = vpop.permute.xlu0 %4145
      %v4149 = vadd.f32 %v4139, %v4144
      %v4150 = vadd.f32 %v4140, %v4146
      %4153 = vrot.lane.b32.xlu0 %v4117, 126
      %v4154 = vpop.permute.xlu0 %4153
      %4155 = vrot.lane.b32.xlu0 %v4120, 126
      %v4156 = vpop.permute.xlu0 %4155
      %v4159 = vadd.f32 %v4149, %v4154
      %v4160 = vadd.f32 %v4150, %v4156
      %4163 = vrot.lane.b32.xlu0 %v4125, 125
      %v4164 = vpop.permute.xlu0 %4163
      %4165 = vrot.lane.b32.xlu0 %v4128, 125
      %v4166 = vpop.permute.xlu0 %4165
      %v4169 = vadd.f32 %v4159, %v4164
      %v4170 = vadd.f32 %v4160, %v4166
      %4173 = vrot.lane.b32.xlu0 %v4133, 124
      %v4174 = vpop.permute.xlu0 %4173
      %4175 = vrot.lane.b32.xlu0 %v4136, 124
      %v4176 = vpop.permute.xlu0 %4175
      %v4179 = vadd.f32 %v4169, %v4174
      %v4180 = vadd.f32 %v4170, %v4176
      %v4181 = vxor.u32 %v4179, 2147483648
      %v4182 = vxor.u32 %v4180, 2147483648
      %v4183 = vmul.f32 %v4181, 1.442695
      %v4184 = vpow.pop %v4183
      %v4185 = vmul.f32 %v4182, 1.442695
      %v4186 = vpow.pop %v4185
      %v4187 = vadd.f32 %v4184, 1.0
      %v4188 = vadd.f32 %v4186, 1.0
      %v4189 = vrcp.pop %v4187
      %v4190 = vmul.f32 1.0, %v4189
      %v4191 = vrcp.pop %v4188
      %v4192 = vmul.f32 1.0, %v4191
      %v4193 = vpack.c.bf16 %v4192, %v4190
      %s4194 = scalar_lea.vmem [#allocation3], 48
      %4195 = vst.msk [vmem:[%s4194] sm:$0xff] %vm3084, %v4193
      %v4196 = vld [vmem:[%s2439] sm:$0xff]
      %v4197 = vld [vmem:[%s2439 + $0x8] sm:$0xff]
      %v4198 = vld [vmem:[%s2439 + $0x10] sm:$0xff]
      %v4199 = vld [vmem:[%s2439 + $0x18] sm:$0xff]
      %v4200 = vld [vmem:[%s2439 + $0x20] sm:$0xff]
      %v4201 = vld [vmem:[%s2] sm:$0xf]
      %v4202 = vld [vmem:[%s2 + $0x4] sm:$0xf]
      %v4203 = vld [vmem:[%s2 + $0x8] sm:$0xf]
      %v4204 = vld [vmem:[%s2 + $0xc] sm:$0xf]
      %v4205 = vld [vmem:[%s2 + $0x10] sm:$0xf]
      %v4206 = vld [vmem:[%s2 + $0x14] sm:$0xf]
      %v4207 = vld [vmem:[%s2 + $0x18] sm:$0xf]
      %v4208 = vld [vmem:[%s2 + $0x1c] sm:$0xf]
      %v4209 = vld [vmem:[%s2 + $0x20] sm:$0xf]
      %v4210 = vld [vmem:[%s2 + $0x24] sm:$0xf]
      %v4221 = vunpack.c.l.b16 %v4201
      %v4222 = vunpack.c.l.b16 %v4202
      %v4223 = vunpack.c.l.b16 %v4203
      %v4224 = vunpack.c.l.b16 %v4204
      %v4225 = vunpack.c.l.b16 %v4205
      %v4226 = vunpack.c.l.b16 %v4206
      %v4227 = vunpack.c.l.b16 %v4207
      %v4228 = vunpack.c.l.b16 %v4208
      %v4229 = vunpack.c.l.b16 %v4209
      %v4230 = vunpack.c.l.b16 %v4210
      %v4231 = vpack.c.b16 %v4222, %v4221
      %v4232 = vpack.c.b16 %v4224, %v4223
      %v4233 = vpack.c.b16 %v4226, %v4225
      %v4234 = vpack.c.b16 %v4228, %v4227
      %v4235 = vpack.c.b16 %v4230, %v4229
      %v4237 = vsel %vm2940, %v4231, 0
      %v4240 = vsel %vm2940, %v4232, 0
      %v4243 = vsel %vm2940, %v4233, 0
      %v4246 = vsel %vm2940, %v4234, 0
      %v4249 = vsel %vm2940, %v4235, 0
      %4251 = vmatprep.subr.bf16.mxu0 0
      %4252 = vmatpush1.bf16.msra.mxu0 %v4196
      %4253 = vmatprep.subr.bf16.mxu0 0
      %4254 = vmatpush1.bf16.msra.mxu0 %v4197
      %4255 = vmatprep.subr.bf16.mxu0 0
      %4256 = vmatpush1.bf16.msra.mxu0 %v4198
      %4257 = vmatprep.subr.bf16.mxu0 0
      %4258 = vmatpush1.bf16.msra.mxu0 %v4199
      %4259 = vmatprep.subr.bf16.mxu0 0
      %4260 = vmatpush1.bf16.msra.mxu0 %v4200
      %4261 = vmatprep.subr.bf16.mxu0 0
      %4262 = vmatpush1.bf16.msra.mxu0 0
      %4263 = vmatprep.subr.bf16.mxu0 0
      %4264 = vmatpush1.bf16.msra.mxu0 0
      %4265 = vmatprep.subr.bf16.mxu0 0
      %4266 = vmatpush1.bf16.msra.mxu0 0
      %4267 = vmatprep.subr.bf16.mxu0 0
      %4268 = vmatpush1.bf16.msra.mxu0 0
      %4269 = vmatprep.subr.bf16.mxu0 0
      %4270 = vmatpush1.bf16.msra.mxu0 0
      %4271 = vmatprep.subr.bf16.mxu0 0
      %4272 = vmatpush1.bf16.msra.mxu0 0
      %4273 = vmatprep.subr.bf16.mxu0 0
      %4274 = vmatpush1.bf16.msra.mxu0 0
      %4275 = vmatprep.subr.bf16.mxu0 0
      %4276 = vmatpush1.bf16.msra.mxu0 0
      %4277 = vmatprep.subr.bf16.mxu0 0
      %4278 = vmatpush1.bf16.msra.mxu0 0
      %4279 = vmatprep.subr.bf16.mxu0 0
      %4280 = vmatpush1.bf16.msra.mxu0 0
      %4281 = vmatprep.subr.bf16.mxu0 0
      %4282 = vmatpush1.bf16.msra.mxu0 0
      %4283 = vmatprep.mubr.bf16.mxu0 0
      %4284 = vmatmul.mubr.bf16.gmra.mrb[0].mxu0 %v4237
      %v4285 = vpop.f32.mrb[0].mxu0
      %v4286 = vadd.f32 0.0, %v4285
      %v4287 = vpop.f32.mrb[0].mxu0
      %v4288 = vpop.f32.mrb[0].mxu0
      %v4289 = vadd.f32 0.0, %v4288
      %v4290 = vpop.f32.mrb[0].mxu0
      %4291 = vmatprep.mubr.bf16.mxu0 0
      %4292 = vmatmul.mubr.bf16.gmra.mrb[0].mxu0 %v4240
      %v4293 = vpop.f32.mrb[0].mxu0
      %v4294 = vadd.f32 0.0, %v4293
      %v4295 = vpop.f32.mrb[0].mxu0
      %v4296 = vpop.f32.mrb[0].mxu0
      %v4297 = vadd.f32 0.0, %v4296
      %v4298 = vpop.f32.mrb[0].mxu0
      %4299 = vmatprep.mubr.bf16.mxu0 0
      %4300 = vmatmul.mubr.bf16.gmra.mrb[0].mxu0 %v4243
      %v4301 = vpop.f32.mrb[0].mxu0
      %v4302 = vadd.f32 0.0, %v4301
      %v4303 = vpop.f32.mrb[0].mxu0
      %v4304 = vpop.f32.mrb[0].mxu0
      %v4305 = vadd.f32 0.0, %v4304
      %v4306 = vpop.f32.mrb[0].mxu0
      %4307 = vmatprep.mubr.bf16.mxu0 0
      %4308 = vmatmul.mubr.bf16.gmra.mrb[0].mxu0 %v4246
      %v4309 = vpop.f32.mrb[0].mxu0
      %v4310 = vadd.f32 0.0, %v4309
      %v4311 = vpop.f32.mrb[0].mxu0
      %v4312 = vpop.f32.mrb[0].mxu0
      %v4313 = vadd.f32 0.0, %v4312
      %v4314 = vpop.f32.mrb[0].mxu0
      %4315 = vmatprep.mubr.bf16.mxu0 0
      %4316 = vmatmul.mubr.bf16.gmra.mrb[0].mxu0 %v4249
      %v4317 = vpop.f32.mrb[0].mxu0
      %v4318 = vadd.f32 0.0, %v4317
      %v4319 = vpop.f32.mrb[0].mxu0
      %v4320 = vpop.f32.mrb[0].mxu0
      %v4321 = vadd.f32 0.0, %v4320
      %v4322 = vpop.f32.mrb[0].mxu0
      %4323 = vdwg.mxu0
      %v4324 = vadd.f32 %v240, %v4286
      %v4325 = vadd.f32 %v244, %v4289
      %4328 = vrot.lane.b32.xlu0 %v4294, 127
      %v4329 = vpop.permute.xlu0 %4328
      %4330 = vrot.lane.b32.xlu0 %v4297, 127
      %v4331 = vpop.permute.xlu0 %4330
      %v4334 = vadd.f32 %v4324, %v4329
      %v4335 = vadd.f32 %v4325, %v4331
      %4338 = vrot.lane.b32.xlu0 %v4302, 126
      %v4339 = vpop.permute.xlu0 %4338
      %4340 = vrot.lane.b32.xlu0 %v4305, 126
      %v4341 = vpop.permute.xlu0 %4340
      %v4344 = vadd.f32 %v4334, %v4339
      %v4345 = vadd.f32 %v4335, %v4341
      %4348 = vrot.lane.b32.xlu0 %v4310, 125
      %v4349 = vpop.permute.xlu0 %4348
      %4350 = vrot.lane.b32.xlu0 %v4313, 125
      %v4351 = vpop.permute.xlu0 %4350
      %v4354 = vadd.f32 %v4344, %v4349
      %v4355 = vadd.f32 %v4345, %v4351
      %4358 = vrot.lane.b32.xlu0 %v4318, 124
      %v4359 = vpop.permute.xlu0 %4358
      %4360 = vrot.lane.b32.xlu0 %v4321, 124
      %v4361 = vpop.permute.xlu0 %4360
      %v4364 = vadd.f32 %v4354, %v4359
      %v4365 = vadd.f32 %v4355, %v4361
      %v4366 = vxor.u32 %v4364, 2147483648
      %v4367 = vxor.u32 %v4365, 2147483648
      %v4368 = vmul.f32 %v4366, 1.442695
      %v4369 = vpow.pop %v4368
      %v4370 = vmul.f32 %v4367, 1.442695
      %v4371 = vpow.pop %v4370
      %v4372 = vadd.f32 %v4369, 1.0
      %v4373 = vadd.f32 %v4371, 1.0
      %v4374 = vrcp.pop %v4372
      %v4375 = vmul.f32 1.0, %v4374
      %v4376 = vrcp.pop %v4373
      %v4377 = vmul.f32 1.0, %v4376
      %v4378 = vpack.c.bf16 %v4377, %v4375
      %s4379 = scalar_lea.vmem [#allocation3], 56
      %4380 = vst.msk [vmem:[%s4379] sm:$0xff] %vm3084, %v4378
      %v4381 = vld [vmem:[#allocation3] sm:$0xff]
      %v4382 = vld [vmem:[#allocation3 + $0x8] sm:$0xff]
      %v4383 = vld [vmem:[#allocation3 + $0x10] sm:$0xff]
      %v4384 = vld [vmem:[#allocation3 + $0x18] sm:$0xff]
      %v4385 = vld [vmem:[#allocation3 + $0x20] sm:$0xff]
      %v4386 = vld [vmem:[#allocation3 + $0x28] sm:$0xff]
      %v4387 = vld [vmem:[#allocation3 + $0x30] sm:$0xff]
      %v4388 = vld [vmem:[%s3] sm:$0xf]
      %v4389 = vld [vmem:[%s3 + $0x4] sm:$0xf]
      %v4390 = vld [vmem:[%s3 + $0x8] sm:$0xf]
      %v4391 = vld [vmem:[%s3 + $0xc] sm:$0xf]
      %v4392 = vld [vmem:[%s3 + $0x10] sm:$0xf]
      %v4393 = vld [vmem:[%s3 + $0x14] sm:$0xf]
      %v4394 = vld [vmem:[%s3 + $0x18] sm:$0xf]
      %v4395 = vld [vmem:[%s3 + $0x1c] sm:$0xf]
      %v4396 = vld [vmem:[%s3 + $0x20] sm:$0xf]
      %v4397 = vld [vmem:[%s3 + $0x24] sm:$0xf]
      %v4398 = vld [vmem:[%s3 + $0x28] sm:$0xf]
      %v4399 = vld [vmem:[%s3 + $0x2c] sm:$0xf]
      %v4400 = vld [vmem:[%s3 + $0x30] sm:$0xf]
      %v4401 = vld [vmem:[%s3 + $0x34] sm:$0xf]
      %v4416 = vunpack.c.l.b16 %v4388
      %v4417 = vunpack.c.l.b16 %v4389
      %v4418 = vunpack.c.l.b16 %v4390
      %v4419 = vunpack.c.l.b16 %v4391
      %v4420 = vunpack.c.l.b16 %v4392
      %v4421 = vunpack.c.l.b16 %v4393
      %v4422 = vunpack.c.l.b16 %v4394
      %v4423 = vunpack.c.l.b16 %v4395
      %v4424 = vunpack.c.l.b16 %v4396
      %v4425 = vunpack.c.l.b16 %v4397
      %v4426 = vunpack.c.l.b16 %v4398
      %v4427 = vunpack.c.l.b16 %v4399
      %v4428 = vunpack.c.l.b16 %v4400
      %v4429 = vunpack.c.l.b16 %v4401
      %v4430 = vpack.c.b16 %v4417, %v4416
      %v4431 = vpack.c.b16 %v4419, %v4418
      %v4432 = vpack.c.b16 %v4421, %v4420
      %v4433 = vpack.c.b16 %v4423, %v4422
      %v4434 = vpack.c.b16 %v4425, %v4424
      %v4435 = vpack.c.b16 %v4427, %v4426
      %v4436 = vpack.c.b16 %v4429, %v4428
      %vm4437 = vcmask 916480
      %v4439 = vsel %vm4437, %v4430, 0
      %v4442 = vsel %vm4437, %v4431, 0
      %v4445 = vsel %vm4437, %v4432, 0
      %v4448 = vsel %vm4437, %v4433, 0
      %v4451 = vsel %vm4437, %v4434, 0
      %v4454 = vsel %vm4437, %v4435, 0
      %v4457 = vsel %vm4437, %v4436, 0
      %4459 = vmatprep.subr.bf16.mxu0 0
      %4460 = vmatpush1.bf16.msra.mxu0 %v4381
      %4461 = vmatprep.subr.bf16.mxu0 0
      %4462 = vmatpush1.bf16.msra.mxu0 %v4382
      %4463 = vmatprep.subr.bf16.mxu0 0
      %4464 = vmatpush1.bf16.msra.mxu0 %v4383
      %4465 = vmatprep.subr.bf16.mxu0 0
      %4466 = vmatpush1.bf16.msra.mxu0 %v4384
      %4467 = vmatprep.subr.bf16.mxu0 0
      %4468 = vmatpush1.bf16.msra.mxu0 %v4385
      %4469 = vmatprep.subr.bf16.mxu0 0
      %4470 = vmatpush1.bf16.msra.mxu0 %v4386
      %4471 = vmatprep.subr.bf16.mxu0 0
      %4472 = vmatpush1.bf16.msra.mxu0 %v4387
      %4473 = vmatprep.subr.bf16.mxu0 0
      %4474 = vmatpush1.bf16.msra.mxu0 0
      %4475 = vmatprep.subr.bf16.mxu0 0
      %4476 = vmatpush1.bf16.msra.mxu0 0
      %4477 = vmatprep.subr.bf16.mxu0 0
      %4478 = vmatpush1.bf16.msra.mxu0 0
      %4479 = vmatprep.subr.bf16.mxu0 0
      %4480 = vmatpush1.bf16.msra.mxu0 0
      %4481 = vmatprep.subr.bf16.mxu0 0
      %4482 = vmatpush1.bf16.msra.mxu0 0
      %4483 = vmatprep.subr.bf16.mxu0 0
      %4484 = vmatpush1.bf16.msra.mxu0 0
      %4485 = vmatprep.subr.bf16.mxu0 0
      %4486 = vmatpush1.bf16.msra.mxu0 0
      %4487 = vmatprep.subr.bf16.mxu0 0
      %4488 = vmatpush1.bf16.msra.mxu0 0
      %4489 = vmatprep.subr.bf16.mxu0 0
      %4490 = vmatpush1.bf16.msra.mxu0 0
      %4491 = vmatprep.mubr.bf16.mxu0 0
      %4492 = vmatmul.mubr.bf16.gmra.mrb[0].mxu0 %v4439
      %v4493 = vpop.f32.mrb[0].mxu0
      %v4494 = vadd.f32 0.0, %v4493
      %v4495 = vpop.f32.mrb[0].mxu0
      %v4496 = vpop.f32.mrb[0].mxu0
      %v4497 = vadd.f32 0.0, %v4496
      %v4498 = vpop.f32.mrb[0].mxu0
      %4499 = vmatprep.mubr.bf16.mxu0 0
      %4500 = vmatmul.mubr.bf16.gmra.mrb[0].mxu0 %v4442
      %v4501 = vpop.f32.mrb[0].mxu0
      %v4502 = vadd.f32 0.0, %v4501
      %v4503 = vpop.f32.mrb[0].mxu0
      %v4504 = vpop.f32.mrb[0].mxu0
      %v4505 = vadd.f32 0.0, %v4504
      %v4506 = vpop.f32.mrb[0].mxu0
      %4507 = vmatprep.mubr.bf16.mxu0 0
      %4508 = vmatmul.mubr.bf16.gmra.mrb[0].mxu0 %v4445
      %v4509 = vpop.f32.mrb[0].mxu0
      %v4510 = vadd.f32 0.0, %v4509
      %v4511 = vpop.f32.mrb[0].mxu0
      %v4512 = vpop.f32.mrb[0].mxu0
      %v4513 = vadd.f32 0.0, %v4512
      %v4514 = vpop.f32.mrb[0].mxu0
      %4515 = vmatprep.mubr.bf16.mxu0 0
      %4516 = vmatmul.mubr.bf16.gmra.mrb[0].mxu0 %v4448
      %v4517 = vpop.f32.mrb[0].mxu0
      %v4518 = vadd.f32 0.0, %v4517
      %v4519 = vpop.f32.mrb[0].mxu0
      %v4520 = vpop.f32.mrb[0].mxu0
      %v4521 = vadd.f32 0.0, %v4520
      %v4522 = vpop.f32.mrb[0].mxu0
      %4523 = vmatprep.mubr.bf16.mxu0 0
      %4524 = vmatmul.mubr.bf16.gmra.mrb[0].mxu0 %v4451
      %v4525 = vpop.f32.mrb[0].mxu0
      %v4526 = vadd.f32 0.0, %v4525
      %v4527 = vpop.f32.mrb[0].mxu0
      %v4528 = vpop.f32.mrb[0].mxu0
      %v4529 = vadd.f32 0.0, %v4528
      %v4530 = vpop.f32.mrb[0].mxu0
      %4531 = vmatprep.mubr.bf16.mxu0 0
      %4532 = vmatmul.mubr.bf16.gmra.mrb[0].mxu0 %v4454
      %v4533 = vpop.f32.mrb[0].mxu0
      %v4534 = vadd.f32 0.0, %v4533
      %v4535 = vpop.f32.mrb[0].mxu0
      %v4536 = vpop.f32.mrb[0].mxu0
      %v4537 = vadd.f32 0.0, %v4536
      %v4538 = vpop.f32.mrb[0].mxu0
      %4539 = vmatprep.mubr.bf16.mxu0 0
      %4540 = vmatmul.mubr.bf16.gmra.mrb[0].mxu0 %v4457
      %v4541 = vpop.f32.mrb[0].mxu0
      %v4542 = vadd.f32 0.0, %v4541
      %v4543 = vpop.f32.mrb[0].mxu0
      %v4544 = vpop.f32.mrb[0].mxu0
      %v4545 = vadd.f32 0.0, %v4544
      %v4546 = vpop.f32.mrb[0].mxu0
      %4547 = vdwg.mxu0
      %v4548 = vadd.f32 %v248, %v4494
      %v4549 = vadd.f32 %v252, %v4497
      %4552 = vrot.lane.b32.xlu0 %v4502, 127
      %v4553 = vpop.permute.xlu0 %4552
      %4554 = vrot.lane.b32.xlu0 %v4505, 127
      %v4555 = vpop.permute.xlu0 %4554
      %v4558 = vadd.f32 %v4548, %v4553
      %v4559 = vadd.f32 %v4549, %v4555
      %4562 = vrot.lane.b32.xlu0 %v4510, 126
      %v4563 = vpop.permute.xlu0 %4562
      %4564 = vrot.lane.b32.xlu0 %v4513, 126
      %v4565 = vpop.permute.xlu0 %4564
      %v4568 = vadd.f32 %v4558, %v4563
      %v4569 = vadd.f32 %v4559, %v4565
      %4572 = vrot.lane.b32.xlu0 %v4518, 125
      %v4573 = vpop.permute.xlu0 %4572
      %4574 = vrot.lane.b32.xlu0 %v4521, 125
      %v4575 = vpop.permute.xlu0 %4574
      %v4578 = vadd.f32 %v4568, %v4573
      %v4579 = vadd.f32 %v4569, %v4575
      %4582 = vrot.lane.b32.xlu0 %v4526, 124
      %v4583 = vpop.permute.xlu0 %4582
      %4584 = vrot.lane.b32.xlu0 %v4529, 124
      %v4585 = vpop.permute.xlu0 %4584
      %v4588 = vadd.f32 %v4578, %v4583
      %v4589 = vadd.f32 %v4579, %v4585
      %4592 = vrot.lane.b32.xlu0 %v4534, 123
      %v4593 = vpop.permute.xlu0 %4592
      %4594 = vrot.lane.b32.xlu0 %v4537, 123
      %v4595 = vpop.permute.xlu0 %4594
      %v4598 = vadd.f32 %v4588, %v4593
      %v4599 = vadd.f32 %v4589, %v4595
      %4602 = vrot.lane.b32.xlu0 %v4542, 122
      %v4603 = vpop.permute.xlu0 %4602
      %4604 = vrot.lane.b32.xlu0 %v4545, 122
      %v4605 = vpop.permute.xlu0 %4604
      %v4608 = vadd.f32 %v4598, %v4603
      %v4609 = vadd.f32 %v4599, %v4605
      %vm4610 = vcmask 113664
      %4611 = vst.msk [vmem:[%s224] sm:$0xff] %vm4610, %v4608
      %4612 = vst.msk [vmem:[%s224 + $0x8] sm:$0xff] %vm4610, %v4609
      %v4613 = vld [vmem:[%s3269] sm:$0xff]
      %v4614 = vld [vmem:[%s3269 + $0x8] sm:$0xff]
      %v4615 = vld [vmem:[%s3269 + $0x10] sm:$0xff]
      %v4616 = vld [vmem:[%s3269 + $0x18] sm:$0xff]
      %v4617 = vld [vmem:[%s3269 + $0x20] sm:$0xff]
      %v4618 = vld [vmem:[%s3269 + $0x28] sm:$0xff]
      %v4619 = vld [vmem:[%s3269 + $0x30] sm:$0xff]
      %v4620 = vld [vmem:[%s3] sm:$0xf]
      %v4621 = vld [vmem:[%s3 + $0x4] sm:$0xf]
      %v4622 = vld [vmem:[%s3 + $0x8] sm:$0xf]
      %v4623 = vld [vmem:[%s3 + $0xc] sm:$0xf]
      %v4624 = vld [vmem:[%s3 + $0x10] sm:$0xf]
      %v4625 = vld [vmem:[%s3 + $0x14] sm:$0xf]
      %v4626 = vld [vmem:[%s3 + $0x18] sm:$0xf]
      %v4627 = vld [vmem:[%s3 + $0x1c] sm:$0xf]
      %v4628 = vld [vmem:[%s3 + $0x20] sm:$0xf]
      %v4629 = vld [vmem:[%s3 + $0x24] sm:$0xf]
      %v4630 = vld [vmem:[%s3 + $0x28] sm:$0xf]
      %v4631 = vld [vmem:[%s3 + $0x2c] sm:$0xf]
      %v4632 = vld [vmem:[%s3 + $0x30] sm:$0xf]
      %v4633 = vld [vmem:[%s3 + $0x34] sm:$0xf]
      %v4648 = vunpack.c.l.b16 %v4620
      %v4649 = vunpack.c.l.b16 %v4621
      %v4650 = vunpack.c.l.b16 %v4622
      %v4651 = vunpack.c.l.b16 %v4623
      %v4652 = vunpack.c.l.b16 %v4624
      %v4653 = vunpack.c.l.b16 %v4625
      %v4654 = vunpack.c.l.b16 %v4626
      %v4655 = vunpack.c.l.b16 %v4627
      %v4656 = vunpack.c.l.b16 %v4628
      %v4657 = vunpack.c.l.b16 %v4629
      %v4658 = vunpack.c.l.b16 %v4630
      %v4659 = vunpack.c.l.b16 %v4631
      %v4660 = vunpack.c.l.b16 %v4632
      %v4661 = vunpack.c.l.b16 %v4633
      %v4662 = vpack.c.b16 %v4649, %v4648
      %v4663 = vpack.c.b16 %v4651, %v4650
      %v4664 = vpack.c.b16 %v4653, %v4652
      %v4665 = vpack.c.b16 %v4655, %v4654
      %v4666 = vpack.c.b16 %v4657, %v4656
      %v4667 = vpack.c.b16 %v4659, %v4658
      %v4668 = vpack.c.b16 %v4661, %v4660
      %v4670 = vsel %vm4437, %v4662, 0
      %v4673 = vsel %vm4437, %v4663, 0
      %v4676 = vsel %vm4437, %v4664, 0
      %v4679 = vsel %vm4437, %v4665, 0
      %v4682 = vsel %vm4437, %v4666, 0
      %v4685 = vsel %vm4437, %v4667, 0
      %v4688 = vsel %vm4437, %v4668, 0
      %4690 = vmatprep.subr.bf16.mxu0 0
      %4691 = vmatpush1.bf16.msra.mxu0 %v4613
      %4692 = vmatprep.subr.bf16.mxu0 0
      %4693 = vmatpush1.bf16.msra.mxu0 %v4614
      %4694 = vmatprep.subr.bf16.mxu0 0
      %4695 = vmatpush1.bf16.msra.mxu0 %v4615
      %4696 = vmatprep.subr.bf16.mxu0 0
      %4697 = vmatpush1.bf16.msra.mxu0 %v4616
      %4698 = vmatprep.subr.bf16.mxu0 0
      %4699 = vmatpush1.bf16.msra.mxu0 %v4617
      %4700 = vmatprep.subr.bf16.mxu0 0
      %4701 = vmatpush1.bf16.msra.mxu0 %v4618
      %4702 = vmatprep.subr.bf16.mxu0 0
      %4703 = vmatpush1.bf16.msra.mxu0 %v4619
      %4704 = vmatprep.subr.bf16.mxu0 0
      %4705 = vmatpush1.bf16.msra.mxu0 0
      %4706 = vmatprep.subr.bf16.mxu0 0
      %4707 = vmatpush1.bf16.msra.mxu0 0
      %4708 = vmatprep.subr.bf16.mxu0 0
      %4709 = vmatpush1.bf16.msra.mxu0 0
      %4710 = vmatprep.subr.bf16.mxu0 0
      %4711 = vmatpush1.bf16.msra.mxu0 0
      %4712 = vmatprep.subr.bf16.mxu0 0
      %4713 = vmatpush1.bf16.msra.mxu0 0
      %4714 = vmatprep.subr.bf16.mxu0 0
      %4715 = vmatpush1.bf16.msra.mxu0 0
      %4716 = vmatprep.subr.bf16.mxu0 0
      %4717 = vmatpush1.bf16.msra.mxu0 0
      %4718 = vmatprep.subr.bf16.mxu0 0
      %4719 = vmatpush1.bf16.msra.mxu0 0
      %4720 = vmatprep.subr.bf16.mxu0 0
      %4721 = vmatpush1.bf16.msra.mxu0 0
      %4722 = vmatprep.mubr.bf16.mxu0 0
      %4723 = vmatmul.mubr.bf16.gmra.mrb[0].mxu0 %v4670
      %v4724 = vpop.f32.mrb[0].mxu0
      %v4725 = vadd.f32 0.0, %v4724
      %v4726 = vpop.f32.mrb[0].mxu0
      %v4727 = vpop.f32.mrb[0].mxu0
      %v4728 = vadd.f32 0.0, %v4727
      %v4729 = vpop.f32.mrb[0].mxu0
      %4730 = vmatprep.mubr.bf16.mxu0 0
      %4731 = vmatmul.mubr.bf16.gmra.mrb[0].mxu0 %v4673
      %v4732 = vpop.f32.mrb[0].mxu0
      %v4733 = vadd.f32 0.0, %v4732
      %v4734 = vpop.f32.mrb[0].mxu0
      %v4735 = vpop.f32.mrb[0].mxu0
      %v4736 = vadd.f32 0.0, %v4735
      %v4737 = vpop.f32.mrb[0].mxu0
      %4738 = vmatprep.mubr.bf16.mxu0 0
      %4739 = vmatmul.mubr.bf16.gmra.mrb[0].mxu0 %v4676
      %v4740 = vpop.f32.mrb[0].mxu0
      %v4741 = vadd.f32 0.0, %v4740
      %v4742 = vpop.f32.mrb[0].mxu0
      %v4743 = vpop.f32.mrb[0].mxu0
      %v4744 = vadd.f32 0.0, %v4743
      %v4745 = vpop.f32.mrb[0].mxu0
      %4746 = vmatprep.mubr.bf16.mxu0 0
      %4747 = vmatmul.mubr.bf16.gmra.mrb[0].mxu0 %v4679
      %v4748 = vpop.f32.mrb[0].mxu0
      %v4749 = vadd.f32 0.0, %v4748
      %v4750 = vpop.f32.mrb[0].mxu0
      %v4751 = vpop.f32.mrb[0].mxu0
      %v4752 = vadd.f32 0.0, %v4751
      %v4753 = vpop.f32.mrb[0].mxu0
      %4754 = vmatprep.mubr.bf16.mxu0 0
      %4755 = vmatmul.mubr.bf16.gmra.mrb[0].mxu0 %v4682
      %v4756 = vpop.f32.mrb[0].mxu0
      %v4757 = vadd.f32 0.0, %v4756
      %v4758 = vpop.f32.mrb[0].mxu0
      %v4759 = vpop.f32.mrb[0].mxu0
      %v4760 = vadd.f32 0.0, %v4759
      %v4761 = vpop.f32.mrb[0].mxu0
      %4762 = vmatprep.mubr.bf16.mxu0 0
      %4763 = vmatmul.mubr.bf16.gmra.mrb[0].mxu0 %v4685
      %v4764 = vpop.f32.mrb[0].mxu0
      %v4765 = vadd.f32 0.0, %v4764
      %v4766 = vpop.f32.mrb[0].mxu0
      %v4767 = vpop.f32.mrb[0].mxu0
      %v4768 = vadd.f32 0.0, %v4767
      %v4769 = vpop.f32.mrb[0].mxu0
      %4770 = vmatprep.mubr.bf16.mxu0 0
      %4771 = vmatmul.mubr.bf16.gmra.mrb[0].mxu0 %v4688
      %v4772 = vpop.f32.mrb[0].mxu0
      %v4773 = vadd.f32 0.0, %v4772
      %v4774 = vpop.f32.mrb[0].mxu0
      %v4775 = vpop.f32.mrb[0].mxu0
      %v4776 = vadd.f32 0.0, %v4775
      %v4777 = vpop.f32.mrb[0].mxu0
      %4778 = vdwg.mxu0
      %v4779 = vadd.f32 %v248, %v4725
      %v4780 = vadd.f32 %v252, %v4728
      %4783 = vrot.lane.b32.xlu0 %v4733, 127
      %v4784 = vpop.permute.xlu0 %4783
      %4785 = vrot.lane.b32.xlu0 %v4736, 127
      %v4786 = vpop.permute.xlu0 %4785
      %v4789 = vadd.f32 %v4779, %v4784
      %v4790 = vadd.f32 %v4780, %v4786
      %4793 = vrot.lane.b32.xlu0 %v4741, 126
      %v4794 = vpop.permute.xlu0 %4793
      %4795 = vrot.lane.b32.xlu0 %v4744, 126
      %v4796 = vpop.permute.xlu0 %4795
      %v4799 = vadd.f32 %v4789, %v4794
      %v4800 = vadd.f32 %v4790, %v4796
      %4803 = vrot.lane.b32.xlu0 %v4749, 125
      %v4804 = vpop.permute.xlu0 %4803
      %4805 = vrot.lane.b32.xlu0 %v4752, 125
      %v4806 = vpop.permute.xlu0 %4805
      %v4809 = vadd.f32 %v4799, %v4804
      %v4810 = vadd.f32 %v4800, %v4806
      %4813 = vrot.lane.b32.xlu0 %v4757, 124
      %v4814 = vpop.permute.xlu0 %4813
      %4815 = vrot.lane.b32.xlu0 %v4760, 124
      %v4816 = vpop.permute.xlu0 %4815
      %v4819 = vadd.f32 %v4809, %v4814
      %v4820 = vadd.f32 %v4810, %v4816
      %4823 = vrot.lane.b32.xlu0 %v4765, 123
      %v4824 = vpop.permute.xlu0 %4823
      %4825 = vrot.lane.b32.xlu0 %v4768, 123
      %v4826 = vpop.permute.xlu0 %4825
      %v4829 = vadd.f32 %v4819, %v4824
      %v4830 = vadd.f32 %v4820, %v4826
      %4833 = vrot.lane.b32.xlu0 %v4773, 122
      %v4834 = vpop.permute.xlu0 %4833
      %4835 = vrot.lane.b32.xlu0 %v4776, 122
      %v4836 = vpop.permute.xlu0 %4835
      %v4839 = vadd.f32 %v4829, %v4834
      %v4840 = vadd.f32 %v4830, %v4836
      %4843 = vrot.lane.b32.xlu0 %v4839, 14
      %v4844 = vpop.permute.xlu0 %4843
      %4845 = vrot.lane.b32.xlu0 %v4840, 14
      %v4846 = vpop.permute.xlu0 %4845
      %vm4849 = vcmask 228464
      %4850 = vst.msk [vmem:[%s224] sm:$0xff] %vm4849, %v4844
      %4851 = vst.msk [vmem:[%s224 + $0x8] sm:$0xff] %vm4849, %v4846
      %p4852 = scmp.lt.s32.totalorder %s16, 1
      %s4853 = scalar_select %p4852, %s16, 1
      %s4854 = smul.addr %s4853, 2
      %s4855 = smul.addr %s4854, 8
      %s4856 = scalar_lea.vmem %s5, %s4855
      // Predicated region
      $region41: #{_fused_forward.1} parent=39 // pred_check
        %p4857 = pneg %p144
      $region42: #{_fused_forward.1} parent=39 // pred_check_branch
        %4859 = sbr.rel (%p4857) target = $region44
      $region43: #{_fused_forward.1} parent=39 // pred_region
        _
      $region44: #{_fused_forward.1} parent=39 // pred_fallthru
        _
    $region40: #{_fused_forward.1} parent=5 // pred_fallthru
      _
    %p4860 = scmp.le.s32.totalorder 2, %s11
    // Predicated region
    $region45: #{_fused_forward.1} parent=5 // pred_check
      %p4861 = pneg %p4860
    $region46: #{_fused_forward.1} parent=5 // pred_check_branch
      %4863 = sbr.rel (%p4861) target = $region48
    $region47: #{_fused_forward.1} parent=5 // pred_region
      %s4864 = ssub.s32 %s11, 2
      // Predicated region
      $region49: #{_fused_forward.1} parent=47 // pred_check
        %p4865 = pneg %p150
      $region50: #{_fused_forward.1} parent=47 // pred_check_branch
        %4867 = sbr.rel (%p4865) target = $region52
      $region51: #{_fused_forward.1} parent=47 // pred_region
        %p4868 = scmp.lt.s32.totalorder %s17, 1
        %s4869 = scalar_select %p4868, %s17, 1
        %s4870 = smul.addr %s4869, 2
        %s4871 = smul.addr %s4870, 8
        %s4872 = scalar_lea.vmem %s5, %s4871
      $region52: #{_fused_forward.1} parent=47 // pred_fallthru
        _
    $region48: #{_fused_forward.1} parent=5 // pred_fallthru
      _
  $region6: #{_fused_forward.1} parent=0 // loop_footer
    %s15 = sadd.s32 1, %s11
  $region7: #{_fused_forward.1} parent=0 // loop_footer_branch
    %10 = sbr.rel target = $region3
  $region8: #{_fused_forward.1} parent=0 // loop_exit
    _

</llo_original>
